<compile_context>
chip_gen: v6e
topology: v6e:2x2x1
jax: 0.10.0
libtpu: 0.0.40
codegen_flags: <defaults>
</compile_context>

<pallas_src>
import math
import functools

import jax
import jax.numpy as jnp
from jax.experimental import pallas as pl
from jax.experimental.pallas import tpu as pltpu

BN_EPS = 1e-5
TR = 128  # lane-dense tile size over the relation axis


# ---------------------------------------------------------------------------
# Fused kernel: prep + Conv1d + fc (+ folded BN, ReLU) + x @ emb_rel^T tile.
# ---------------------------------------------------------------------------
def fused_kernel(e1_ref, e2_ref, t1_ref, t2_ref, his_ref, w1_ref, br_ref,
                 w2_ref, sh_ref, cw_ref, cb_ref, fcw_ref, fcb_ref, rel_ref,
                 out_ref, x_ref, *, half, C, K):
    rb = pl.program_id(0)

    # ---- compute the fc activation once; carried in VMEM across R tiles ----
    @pl.when(rb == 0)
    def _features():
        B, E = e1_ref.shape

        # semantic-history transform: second half of rows through w1+bias_r,
        # then everything through w2 (full matmul + row-select keeps shapes
        # static; discarded rows are harmless).
        his = his_ref[...]
        his_r = jnp.dot(his, w1_ref[...],
                        preferred_element_type=jnp.float32) + br_ref[...]
        rows = jax.lax.broadcasted_iota(jnp.int32, his.shape, 0)
        his_sem = jnp.where(rows >= half, his_r, his)
        ch4 = jnp.dot(his_sem, w2_ref[...], preferred_element_type=jnp.float32)

        # 5 stacked Conv1d input channels. Dropout p=0 -> identity. BN0's
        # eval-mode scale is folded into the conv weights (shift == 0).
        chans = (jnp.tanh(e1_ref[...]), jnp.tanh(e2_ref[...]),
                 t1_ref[...], t2_ref[...], ch4)

        # K shifted copies of every channel ('same' zero padding) built via
        # tiny 0/1 (E,E) shift-matrix matmuls — kept in VMEM, never in HBM.
        xs = [[jnp.dot(c, sh_ref[k], preferred_element_type=jnp.float32)
               for k in range(K)] for c in chans]

        # Conv1d (BN0+BN1 folded) as 5*K scalar FMAs per output channel on
        # the VPU, ReLU, then the fc contribution of that conv channel
        # (reproduces PyTorch's channel-major x.view(B, -1) exactly; BN2
        # scale folded into fcw).
        e_out = fcb_ref.shape[-1]
        fc_acc = jnp.zeros((B, e_out), jnp.float32)
        for oc in range(C):
            acc = jnp.zeros((B, E), jnp.float32)
            for cin in range(5):
                for k in range(K):
                    acc = acc + cw_ref[oc, cin * K + k] * xs[cin][k]
            y = jnp.maximum(acc + cb_ref[oc], 0.0)          # conv + BN1 + ReLU
            fc_acc = fc_acc + jnp.dot(y, fcw_ref[oc],
                                      preferred_element_type=jnp.float32)

        x = jnp.maximum(fc_acc + fcb_ref[...], 0.0)          # fc + BN2 + ReLU
        x_ref[...] = x.astype(jnp.bfloat16)

    # ---- head: one lane-dense (B, TR) tile of scores (bf16 MXU, f32 acc) ----
    out_ref[...] = jax.lax.dot_general(
        x_ref[...], rel_ref[...],
        dimension_numbers=(((1,), (1,)), ((), ())),
        preferred_element_type=jnp.float32)


def _full_vmem(shape):
    n = len(shape)
    return pl.BlockSpec(shape, lambda r, _n=n: (0,) * _n)


# ---------------------------------------------------------------------------
# Forward wrapper: gathers, one-time weight folding, pallas_call.
# ---------------------------------------------------------------------------
@jax.jit
def se_conv_trans_r_forward(params, embedding, emb_rel, emb_time, triplets,
                            e_e_his_emb, partial_embeding=None):
    B = triplets.shape[0]
    E = embedding.shape[1]
    S = e_e_his_emb.shape[1]
    C, _, K = params["conv_w"].shape
    R = emb_rel.shape[0]

    # Row gathers (tanh commutes with the gather, applied inside the kernel).
    # TODO(synk): for very large entity tables, gather rows via scalar
    # prefetch (PrefetchScalarGridSpec) inside the kernel instead of XLA.
    e1 = embedding[triplets[:, 0]]
    e2 = embedding[triplets[:, 2]]
    t1, t2 = emb_time

    # Eval-mode BatchNorm with default stats/affine: scale = 1/sqrt(1+eps),
    # shift = 0 for every channel -> fold all three BNs into the weights.
    # TODO(synk): parameterize from real BN buffers for trained checkpoints.
    s = 1.0 / math.sqrt(1.0 + BN_EPS)

    conv_w = params["conv_w"].astype(jnp.float32)
    conv_w_f = (conv_w * (s * s)).reshape(C, 5 * K)          # BN0 & BN1 folded
    conv_b_f = params["conv_b"].astype(jnp.float32) * s      # BN1 folded

    # fc weight (E_out, C*E) -> (C, E_l, E_out): conv channel oc (B, E_l)
    # contracts directly with fcw3[oc]; BN2 folded.
    fc_w = params["fc_w"].astype(jnp.float32) * s
    fcw3 = jnp.transpose(fc_w.reshape(E, C, E), (1, 2, 0))
    fcb = (params["fc_b"].astype(jnp.float32) * s).reshape(1, E)

    bias_r = params["bias_r"].astype(jnp.float32).reshape(1, S)

    # 0/1 shift matrices for the K conv taps: SH[k, j, l] = 1 iff j == l+k-K//2
    j_idx = jnp.arange(E)[None, :, None]
    l_idx = jnp.arange(E)[None, None, :]
    k_idx = jnp.arange(K)[:, None, None]
    shift_mats = (j_idx == (l_idx + k_idx - (K // 2))).astype(jnp.float32)

    # emb_rel: bf16 (halves HBM traffic of the largest operand) and padded to
    # a multiple of the 128-lane tile so output stores are lane-dense.
    RP = ((R + TR - 1) // TR) * TR
    rel = emb_rel.astype(jnp.bfloat16)
    if RP != R:
        rel = jnp.pad(rel, ((0, RP - R), (0, 0)))
    n_rb = RP // TR

    kernel = functools.partial(fused_kernel, half=B // 2, C=C, K=K)
    smem_spec = pl.BlockSpec(memory_space=pltpu.MemorySpace.SMEM)

    out_padded = pl.pallas_call(
        kernel,
        out_shape=jax.ShapeDtypeStruct((B, RP), jnp.float32),
        grid=(n_rb,),
        in_specs=[
            _full_vmem((B, E)), _full_vmem((B, E)),        # e1, e2
            _full_vmem((B, E)), _full_vmem((B, E)),        # t1, t2
            _full_vmem((B, S)), _full_vmem((S, S)),        # his, w1
            _full_vmem((1, S)), _full_vmem((S, E)),        # bias_r, w2
            _full_vmem((K, E, E)),                         # shift matrices
            smem_spec,                                     # conv weights (SMEM scalars)
            smem_spec,                                     # conv bias (SMEM scalars)
            _full_vmem((C, E, E)),                         # permuted fc weight
            _full_vmem((1, E)),                            # fc bias
            pl.BlockSpec((TR, E), lambda r: (r, 0)),       # streamed emb_rel tile
        ],
        out_specs=pl.BlockSpec((B, TR), lambda r: (0, r)),  # lane-dense tile
        scratch_shapes=[pltpu.VMEM((B, E), jnp.bfloat16)],  # carried fc activation
        compiler_params=pltpu.CompilerParams(
            # 'arbitrary': the fc activation is computed on the first R tile
            # and carried in VMEM scratch across the (sequential) R axis.
            dimension_semantics=("arbitrary",),
        ),
    )(e1, e2, t1, t2, e_e_his_emb, params["w1"].astype(jnp.float32), bias_r,
      params["w2"].astype(jnp.float32), shift_mats, conv_w_f, conv_b_f,
      fcw3, fcb, rel)

    out = out_padded[:, :R]
    if partial_embeding is not None:
        out = out * partial_embeding
    return out


if __name__ == "__main__":
    num_relations = 5
    embedding_dim = 32
    semantic_dim = 16
    channels = 16
    kernel_size = 3
    num_entities = 20
    batch = 8
    R = num_relations * 2

    key = jax.random.PRNGKey(0)
    ks = jax.random.split(key, 12)

    params = {
        "w1": jax.random.normal(ks[0], (semantic_dim, semantic_dim), jnp.float32),
        "w2": jax.random.normal(ks[1], (semantic_dim, embedding_dim), jnp.float32),
        "bias_r": jnp.zeros((semantic_dim,), jnp.float32),
        "conv_w": 0.1 * jax.random.normal(
            ks[2], (channels, 5, kernel_size), jnp.float32),
        "conv_b": jnp.zeros((channels,), jnp.float32),
        "fc_w": 0.05 * jax.random.normal(
            ks[3], (embedding_dim, embedding_dim * channels), jnp.float32),
        "fc_b": jnp.zeros((embedding_dim,), jnp.float32),
        # module parameter 'b' (zeros(2*num_relations)) is unused in forward.
    }

    embedding = jax.random.normal(ks[4], (num_entities, embedding_dim), jnp.float32)
    emb_rel = jax.random.normal(ks[5], (R, embedding_dim), jnp.float32)
    emb_time = (
        jax.random.normal(ks[6], (batch, embedding_dim), jnp.float32),
        jax.random.normal(ks[7], (batch, embedding_dim), jnp.float32),
    )
    triplets = jnp.stack([
        jax.random.randint(ks[8], (batch,), 0, num_entities),
        jax.random.randint(ks[9], (batch,), 0, R),
        jax.random.randint(ks[10], (batch,), 0, num_entities),
    ], axis=1)
    e_e_his_emb = jax.random.normal(ks[11], (batch, semantic_dim), jnp.float32)

    out = se_conv_trans_r_forward(params, embedding, emb_rel, emb_time,
                                  triplets, e_e_his_emb)
    out = jax.block_until_ready(out)
    assert out.shape == (batch, R) and out.dtype == jnp.float32
    print("KERNEL_OK")
</pallas_src>

<mosaic_0001>
module attributes {stable_mosaic.version = 11 : i64} {
  func.func @fused_kernel(%arg0: i32, %arg1: memref<8x32xf32, #tpu.memory_space<vmem>>, %arg2: memref<8x32xf32, #tpu.memory_space<vmem>>, %arg3: memref<8x32xf32, #tpu.memory_space<vmem>>, %arg4: memref<8x32xf32, #tpu.memory_space<vmem>>, %arg5: memref<8x16xf32, #tpu.memory_space<vmem>>, %arg6: memref<16x16xf32, #tpu.memory_space<vmem>>, %arg7: memref<1x16xf32, #tpu.memory_space<vmem>>, %arg8: memref<16x32xf32, #tpu.memory_space<vmem>>, %arg9: memref<3x32x32xf32, #tpu.memory_space<vmem>>, %arg10: memref<16x15xf32, #tpu.memory_space<smem>>, %arg11: memref<16xf32, #tpu.memory_space<smem>>, %arg12: memref<16x32x32xf32, #tpu.memory_space<vmem>>, %arg13: memref<1x32xf32, #tpu.memory_space<vmem>>, %arg14: memref<128x32xbf16, #tpu.memory_space<vmem>>, %arg15: memref<8x128xf32, #tpu.memory_space<vmem>>, %arg16: memref<8x32xbf16, #tpu.memory_space<vmem>>) attributes {dimension_semantics = [#tpu.dimension_semantics<arbitrary>], iteration_bounds = array<i64: 1>, scalar_prefetch = 0 : i64, scratch_operands = 1 : i64, tpu.core_type = #tpu.core_type<tc>, window_params = [{pipeline_mode = #tpu.pipeline_mode<synchronous>, transform_indices = @transform_0, window_bounds = array<i64: 8, 32>}, {pipeline_mode = #tpu.pipeline_mode<synchronous>, transform_indices = @transform_1, window_bounds = array<i64: 8, 32>}, {pipeline_mode = #tpu.pipeline_mode<synchronous>, transform_indices = @transform_2, window_bounds = array<i64: 8, 32>}, {pipeline_mode = #tpu.pipeline_mode<synchronous>, transform_indices = @transform_3, window_bounds = array<i64: 8, 32>}, {pipeline_mode = #tpu.pipeline_mode<synchronous>, transform_indices = @transform_4, window_bounds = array<i64: 8, 16>}, {pipeline_mode = #tpu.pipeline_mode<synchronous>, transform_indices = @transform_5, window_bounds = array<i64: 16, 16>}, {pipeline_mode = #tpu.pipeline_mode<synchronous>, transform_indices = @transform_6, window_bounds = array<i64: 1, 16>}, {pipeline_mode = #tpu.pipeline_mode<synchronous>, transform_indices = @transform_7, window_bounds = array<i64: 16, 32>}, {pipeline_mode = #tpu.pipeline_mode<synchronous>, transform_indices = @transform_8, window_bounds = array<i64: 3, 32, 32>}, {transform_indices = @transform_9, window_bounds = array<i64: 16, 15>}, {transform_indices = @transform_10, window_bounds = array<i64: 16>}, {pipeline_mode = #tpu.pipeline_mode<synchronous>, transform_indices = @transform_11, window_bounds = array<i64: 16, 32, 32>}, {pipeline_mode = #tpu.pipeline_mode<synchronous>, transform_indices = @transform_12, window_bounds = array<i64: 1, 32>}, {transform_indices = @transform_13, window_bounds = array<i64: 128, 32>}, {transform_indices = @transform_14, window_bounds = array<i64: 8, 128>}]} {
    %c0_i32 = arith.constant 0 : i32
    %0 = arith.cmpi eq, %arg0, %c0_i32 : i32
    %1 = arith.extui %0 : i1 to i32
    %c0_i32_0 = arith.constant 0 : i32
    %2 = arith.cmpi ne, %1, %c0_i32_0 : i32
    scf.if %2 {
      %c0_6 = arith.constant 0 : index
      %c0_7 = arith.constant 0 : index
      %7 = vector.load %arg5[%c0_6, %c0_7] : memref<8x16xf32, #tpu.memory_space<vmem>>, vector<8x16xf32>
      %c0_8 = arith.constant 0 : index
      %c0_9 = arith.constant 0 : index
      %8 = vector.load %arg6[%c0_8, %c0_9] : memref<16x16xf32, #tpu.memory_space<vmem>>, vector<16x16xf32>
      %cst_10 = arith.constant dense<0.000000e+00> : vector<8x16xf32>
      %9 = tpu.matmul %7, %8, %cst_10 {dimension_numbers = #tpu.dot_dimension_numbers<[1], [0], [0], [1], [0, 0, 1, 1], [], []>} : vector<8x16xf32>, vector<16x16xf32>, vector<8x16xf32> -> vector<8x16xf32>
      %c0_11 = arith.constant 0 : index
      %c0_12 = arith.constant 0 : index
      %10 = vector.load %arg7[%c0_11, %c0_12] : memref<1x16xf32, #tpu.memory_space<vmem>>, vector<1x16xf32>
      %11 = vector.broadcast %10 : vector<1x16xf32> to vector<8x16xf32>
      %12 = arith.addf %9, %11 : vector<8x16xf32>
      %13 = tpu.iota {dimensions = array<i32: 0>} : vector<8x16xi32>
      %c4_i32 = arith.constant 4 : i32
      %14 = vector.broadcast %c4_i32 : i32 to vector<8x16xi32>
      %15 = arith.cmpi sge, %13, %14 : vector<8x16xi32>
      %16 = arith.select %15, %12, %7 : vector<8x16xi1>, vector<8x16xf32>
      %c0_13 = arith.constant 0 : index
      %c0_14 = arith.constant 0 : index
      %17 = vector.load %arg8[%c0_13, %c0_14] : memref<16x32xf32, #tpu.memory_space<vmem>>, vector<16x32xf32>
      %cst_15 = arith.constant dense<0.000000e+00> : vector<8x32xf32>
      %18 = tpu.matmul %16, %17, %cst_15 {dimension_numbers = #tpu.dot_dimension_numbers<[1], [0], [0], [1], [0, 0, 1, 1], [], []>} : vector<8x16xf32>, vector<16x32xf32>, vector<8x32xf32> -> vector<8x32xf32>
      %c0_16 = arith.constant 0 : index
      %c0_17 = arith.constant 0 : index
      %19 = vector.load %arg1[%c0_16, %c0_17] : memref<8x32xf32, #tpu.memory_space<vmem>>, vector<8x32xf32>
      %20 = math.tanh %19 : vector<8x32xf32>
      %c0_18 = arith.constant 0 : index
      %c0_19 = arith.constant 0 : index
      %21 = vector.load %arg2[%c0_18, %c0_19] : memref<8x32xf32, #tpu.memory_space<vmem>>, vector<8x32xf32>
      %22 = math.tanh %21 : vector<8x32xf32>
      %c0_20 = arith.constant 0 : index
      %c0_21 = arith.constant 0 : index
      %23 = vector.load %arg3[%c0_20, %c0_21] : memref<8x32xf32, #tpu.memory_space<vmem>>, vector<8x32xf32>
      %c0_22 = arith.constant 0 : index
      %c0_23 = arith.constant 0 : index
      %24 = vector.load %arg4[%c0_22, %c0_23] : memref<8x32xf32, #tpu.memory_space<vmem>>, vector<8x32xf32>
      %c0_24 = arith.constant 0 : index
      %c0_25 = arith.constant 0 : index
      %c0_26 = arith.constant 0 : index
      %25 = vector.load %arg9[%c0_24, %c0_25, %c0_26] : memref<3x32x32xf32, #tpu.memory_space<vmem>>, vector<1x32x32xf32>
      %26 = vector.shape_cast %25 : vector<1x32x32xf32> to vector<32x32xf32>
      %cst_27 = arith.constant dense<0.000000e+00> : vector<8x32xf32>
      %27 = tpu.matmul %20, %26, %cst_27 {dimension_numbers = #tpu.dot_dimension_numbers<[1], [0], [0], [1], [0, 0, 1, 1], [], []>} : vector<8x32xf32>, vector<32x32xf32>, vector<8x32xf32> -> vector<8x32xf32>
      %c1 = arith.constant 1 : index
      %c0_28 = arith.constant 0 : index
      %c0_29 = arith.constant 0 : index
      %28 = vector.load %arg9[%c1, %c0_28, %c0_29] : memref<3x32x32xf32, #tpu.memory_space<vmem>>, vector<1x32x32xf32>
      %29 = vector.shape_cast %28 : vector<1x32x32xf32> to vector<32x32xf32>
      %cst_30 = arith.constant dense<0.000000e+00> : vector<8x32xf32>
      %30 = tpu.matmul %20, %29, %cst_30 {dimension_numbers = #tpu.dot_dimension_numbers<[1], [0], [0], [1], [0, 0, 1, 1], [], []>} : vector<8x32xf32>, vector<32x32xf32>, vector<8x32xf32> -> vector<8x32xf32>
      %c2 = arith.constant 2 : index
      %c0_31 = arith.constant 0 : index
      %c0_32 = arith.constant 0 : index
      %31 = vector.load %arg9[%c2, %c0_31, %c0_32] : memref<3x32x32xf32, #tpu.memory_space<vmem>>, vector<1x32x32xf32>
      %32 = vector.shape_cast %31 : vector<1x32x32xf32> to vector<32x32xf32>
      %cst_33 = arith.constant dense<0.000000e+00> : vector<8x32xf32>
      %33 = tpu.matmul %20, %32, %cst_33 {dimension_numbers = #tpu.dot_dimension_numbers<[1], [0], [0], [1], [0, 0, 1, 1], [], []>} : vector<8x32xf32>, vector<32x32xf32>, vector<8x32xf32> -> vector<8x32xf32>
      %c0_34 = arith.constant 0 : index
      %c0_35 = arith.constant 0 : index
      %c0_36 = arith.constant 0 : index
      %34 = vector.load %arg9[%c0_34, %c0_35, %c0_36] : memref<3x32x32xf32, #tpu.memory_space<vmem>>, vector<1x32x32xf32>
      %35 = vector.shape_cast %34 : vector<1x32x32xf32> to vector<32x32xf32>
      %cst_37 = arith.constant dense<0.000000e+00> : vector<8x32xf32>
      %36 = tpu.matmul %22, %35, %cst_37 {dimension_numbers = #tpu.dot_dimension_numbers<[1], [0], [0], [1], [0, 0, 1, 1], [], []>} : vector<8x32xf32>, vector<32x32xf32>, vector<8x32xf32> -> vector<8x32xf32>
      %c1_38 = arith.constant 1 : index
      %c0_39 = arith.constant 0 : index
      %c0_40 = arith.constant 0 : index
      %37 = vector.load %arg9[%c1_38, %c0_39, %c0_40] : memref<3x32x32xf32, #tpu.memory_space<vmem>>, vector<1x32x32xf32>
      %38 = vector.shape_cast %37 : vector<1x32x32xf32> to vector<32x32xf32>
      %cst_41 = arith.constant dense<0.000000e+00> : vector<8x32xf32>
      %39 = tpu.matmul %22, %38, %cst_41 {dimension_numbers = #tpu.dot_dimension_numbers<[1], [0], [0], [1], [0, 0, 1, 1], [], []>} : vector<8x32xf32>, vector<32x32xf32>, vector<8x32xf32> -> vector<8x32xf32>
      %c2_42 = arith.constant 2 : index
      %c0_43 = arith.constant 0 : index
      %c0_44 = arith.constant 0 : index
      %40 = vector.load %arg9[%c2_42, %c0_43, %c0_44] : memref<3x32x32xf32, #tpu.memory_space<vmem>>, vector<1x32x32xf32>
      %41 = vector.shape_cast %40 : vector<1x32x32xf32> to vector<32x32xf32>
      %cst_45 = arith.constant dense<0.000000e+00> : vector<8x32xf32>
      %42 = tpu.matmul %22, %41, %cst_45 {dimension_numbers = #tpu.dot_dimension_numbers<[1], [0], [0], [1], [0, 0, 1, 1], [], []>} : vector<8x32xf32>, vector<32x32xf32>, vector<8x32xf32> -> vector<8x32xf32>
      %c0_46 = arith.constant 0 : index
      %c0_47 = arith.constant 0 : index
      %c0_48 = arith.constant 0 : index
      %43 = vector.load %arg9[%c0_46, %c0_47, %c0_48] : memref<3x32x32xf32, #tpu.memory_space<vmem>>, vector<1x32x32xf32>
      %44 = vector.shape_cast %43 : vector<1x32x32xf32> to vector<32x32xf32>
      %cst_49 = arith.constant dense<0.000000e+00> : vector<8x32xf32>
      %45 = tpu.matmul %23, %44, %cst_49 {dimension_numbers = #tpu.dot_dimension_numbers<[1], [0], [0], [1], [0, 0, 1, 1], [], []>} : vector<8x32xf32>, vector<32x32xf32>, vector<8x32xf32> -> vector<8x32xf32>
      %c1_50 = arith.constant 1 : index
      %c0_51 = arith.constant 0 : index
      %c0_52 = arith.constant 0 : index
      %46 = vector.load %arg9[%c1_50, %c0_51, %c0_52] : memref<3x32x32xf32, #tpu.memory_space<vmem>>, vector<1x32x32xf32>
      %47 = vector.shape_cast %46 : vector<1x32x32xf32> to vector<32x32xf32>
      %cst_53 = arith.constant dense<0.000000e+00> : vector<8x32xf32>
      %48 = tpu.matmul %23, %47, %cst_53 {dimension_numbers = #tpu.dot_dimension_numbers<[1], [0], [0], [1], [0, 0, 1, 1], [], []>} : vector<8x32xf32>, vector<32x32xf32>, vector<8x32xf32> -> vector<8x32xf32>
      %c2_54 = arith.constant 2 : index
      %c0_55 = arith.constant 0 : index
      %c0_56 = arith.constant 0 : index
      %49 = vector.load %arg9[%c2_54, %c0_55, %c0_56] : memref<3x32x32xf32, #tpu.memory_space<vmem>>, vector<1x32x32xf32>
      %50 = vector.shape_cast %49 : vector<1x32x32xf32> to vector<32x32xf32>
      %cst_57 = arith.constant dense<0.000000e+00> : vector<8x32xf32>
      %51 = tpu.matmul %23, %50, %cst_57 {dimension_numbers = #tpu.dot_dimension_numbers<[1], [0], [0], [1], [0, 0, 1, 1], [], []>} : vector<8x32xf32>, vector<32x32xf32>, vector<8x32xf32> -> vector<8x32xf32>
      %c0_58 = arith.constant 0 : index
      %c0_59 = arith.constant 0 : index
      %c0_60 = arith.constant 0 : index
      %52 = vector.load %arg9[%c0_58, %c0_59, %c0_60] : memref<3x32x32xf32, #tpu.memory_space<vmem>>, vector<1x32x32xf32>
      %53 = vector.shape_cast %52 : vector<1x32x32xf32> to vector<32x32xf32>
      %cst_61 = arith.constant dense<0.000000e+00> : vector<8x32xf32>
      %54 = tpu.matmul %24, %53, %cst_61 {dimension_numbers = #tpu.dot_dimension_numbers<[1], [0], [0], [1], [0, 0, 1, 1], [], []>} : vector<8x32xf32>, vector<32x32xf32>, vector<8x32xf32> -> vector<8x32xf32>
      %c1_62 = arith.constant 1 : index
      %c0_63 = arith.constant 0 : index
      %c0_64 = arith.constant 0 : index
      %55 = vector.load %arg9[%c1_62, %c0_63, %c0_64] : memref<3x32x32xf32, #tpu.memory_space<vmem>>, vector<1x32x32xf32>
      %56 = vector.shape_cast %55 : vector<1x32x32xf32> to vector<32x32xf32>
      %cst_65 = arith.constant dense<0.000000e+00> : vector<8x32xf32>
      %57 = tpu.matmul %24, %56, %cst_65 {dimension_numbers = #tpu.dot_dimension_numbers<[1], [0], [0], [1], [0, 0, 1, 1], [], []>} : vector<8x32xf32>, vector<32x32xf32>, vector<8x32xf32> -> vector<8x32xf32>
      %c2_66 = arith.constant 2 : index
      %c0_67 = arith.constant 0 : index
      %c0_68 = arith.constant 0 : index
      %58 = vector.load %arg9[%c2_66, %c0_67, %c0_68] : memref<3x32x32xf32, #tpu.memory_space<vmem>>, vector<1x32x32xf32>
      %59 = vector.shape_cast %58 : vector<1x32x32xf32> to vector<32x32xf32>
      %cst_69 = arith.constant dense<0.000000e+00> : vector<8x32xf32>
      %60 = tpu.matmul %24, %59, %cst_69 {dimension_numbers = #tpu.dot_dimension_numbers<[1], [0], [0], [1], [0, 0, 1, 1], [], []>} : vector<8x32xf32>, vector<32x32xf32>, vector<8x32xf32> -> vector<8x32xf32>
      %c0_70 = arith.constant 0 : index
      %c0_71 = arith.constant 0 : index
      %c0_72 = arith.constant 0 : index
      %61 = vector.load %arg9[%c0_70, %c0_71, %c0_72] : memref<3x32x32xf32, #tpu.memory_space<vmem>>, vector<1x32x32xf32>
      %62 = vector.shape_cast %61 : vector<1x32x32xf32> to vector<32x32xf32>
      %cst_73 = arith.constant dense<0.000000e+00> : vector<8x32xf32>
      %63 = tpu.matmul %18, %62, %cst_73 {dimension_numbers = #tpu.dot_dimension_numbers<[1], [0], [0], [1], [0, 0, 1, 1], [], []>} : vector<8x32xf32>, vector<32x32xf32>, vector<8x32xf32> -> vector<8x32xf32>
      %c1_74 = arith.constant 1 : index
      %c0_75 = arith.constant 0 : index
      %c0_76 = arith.constant 0 : index
      %64 = vector.load %arg9[%c1_74, %c0_75, %c0_76] : memref<3x32x32xf32, #tpu.memory_space<vmem>>, vector<1x32x32xf32>
      %65 = vector.shape_cast %64 : vector<1x32x32xf32> to vector<32x32xf32>
      %cst_77 = arith.constant dense<0.000000e+00> : vector<8x32xf32>
      %66 = tpu.matmul %18, %65, %cst_77 {dimension_numbers = #tpu.dot_dimension_numbers<[1], [0], [0], [1], [0, 0, 1, 1], [], []>} : vector<8x32xf32>, vector<32x32xf32>, vector<8x32xf32> -> vector<8x32xf32>
      %c2_78 = arith.constant 2 : index
      %c0_79 = arith.constant 0 : index
      %c0_80 = arith.constant 0 : index
      %67 = vector.load %arg9[%c2_78, %c0_79, %c0_80] : memref<3x32x32xf32, #tpu.memory_space<vmem>>, vector<1x32x32xf32>
      %68 = vector.shape_cast %67 : vector<1x32x32xf32> to vector<32x32xf32>
      %cst_81 = arith.constant dense<0.000000e+00> : vector<8x32xf32>
      %69 = tpu.matmul %18, %68, %cst_81 {dimension_numbers = #tpu.dot_dimension_numbers<[1], [0], [0], [1], [0, 0, 1, 1], [], []>} : vector<8x32xf32>, vector<32x32xf32>, vector<8x32xf32> -> vector<8x32xf32>
      %cst_82 = arith.constant 0.000000e+00 : f32
      %70 = vector.broadcast %cst_82 : f32 to vector<8x32xf32>
      %cst_83 = arith.constant 0.000000e+00 : f32
      %71 = vector.broadcast %cst_83 : f32 to vector<8x32xf32>
      %c0_84 = arith.constant 0 : index
      %c0_85 = arith.constant 0 : index
      %72 = memref.load %arg10[%c0_84, %c0_85] : memref<16x15xf32, #tpu.memory_space<smem>>
      %73 = vector.broadcast %72 : f32 to vector<8x32xf32>
      %74 = arith.mulf %73, %27 : vector<8x32xf32>
      %75 = arith.addf %71, %74 : vector<8x32xf32>
      %c0_86 = arith.constant 0 : index
      %c1_87 = arith.constant 1 : index
      %76 = memref.load %arg10[%c0_86, %c1_87] : memref<16x15xf32, #tpu.memory_space<smem>>
      %77 = vector.broadcast %76 : f32 to vector<8x32xf32>
      %78 = arith.mulf %77, %30 : vector<8x32xf32>
      %79 = arith.addf %75, %78 : vector<8x32xf32>
      %c0_88 = arith.constant 0 : index
      %c2_89 = arith.constant 2 : index
      %80 = memref.load %arg10[%c0_88, %c2_89] : memref<16x15xf32, #tpu.memory_space<smem>>
      %81 = vector.broadcast %80 : f32 to vector<8x32xf32>
      %82 = arith.mulf %81, %33 : vector<8x32xf32>
      %83 = arith.addf %79, %82 : vector<8x32xf32>
      %c0_90 = arith.constant 0 : index
      %c3 = arith.constant 3 : index
      %84 = memref.load %arg10[%c0_90, %c3] : memref<16x15xf32, #tpu.memory_space<smem>>
      %85 = vector.broadcast %84 : f32 to vector<8x32xf32>
      %86 = arith.mulf %85, %36 : vector<8x32xf32>
      %87 = arith.addf %83, %86 : vector<8x32xf32>
      %c0_91 = arith.constant 0 : index
      %c4 = arith.constant 4 : index
      %88 = memref.load %arg10[%c0_91, %c4] : memref<16x15xf32, #tpu.memory_space<smem>>
      %89 = vector.broadcast %88 : f32 to vector<8x32xf32>
      %90 = arith.mulf %89, %39 : vector<8x32xf32>
      %91 = arith.addf %87, %90 : vector<8x32xf32>
      %c0_92 = arith.constant 0 : index
      %c5 = arith.constant 5 : index
      %92 = memref.load %arg10[%c0_92, %c5] : memref<16x15xf32, #tpu.memory_space<smem>>
      %93 = vector.broadcast %92 : f32 to vector<8x32xf32>
      %94 = arith.mulf %93, %42 : vector<8x32xf32>
      %95 = arith.addf %91, %94 : vector<8x32xf32>
      %c0_93 = arith.constant 0 : index
      %c6 = arith.constant 6 : index
      %96 = memref.load %arg10[%c0_93, %c6] : memref<16x15xf32, #tpu.memory_space<smem>>
      %97 = vector.broadcast %96 : f32 to vector<8x32xf32>
      %98 = arith.mulf %97, %45 : vector<8x32xf32>
      %99 = arith.addf %95, %98 : vector<8x32xf32>
      %c0_94 = arith.constant 0 : index
      %c7 = arith.constant 7 : index
      %100 = memref.load %arg10[%c0_94, %c7] : memref<16x15xf32, #tpu.memory_space<smem>>
      %101 = vector.broadcast %100 : f32 to vector<8x32xf32>
      %102 = arith.mulf %101, %48 : vector<8x32xf32>
      %103 = arith.addf %99, %102 : vector<8x32xf32>
      %c0_95 = arith.constant 0 : index
      %c8 = arith.constant 8 : index
      %104 = memref.load %arg10[%c0_95, %c8] : memref<16x15xf32, #tpu.memory_space<smem>>
      %105 = vector.broadcast %104 : f32 to vector<8x32xf32>
      %106 = arith.mulf %105, %51 : vector<8x32xf32>
      %107 = arith.addf %103, %106 : vector<8x32xf32>
      %c0_96 = arith.constant 0 : index
      %c9 = arith.constant 9 : index
      %108 = memref.load %arg10[%c0_96, %c9] : memref<16x15xf32, #tpu.memory_space<smem>>
      %109 = vector.broadcast %108 : f32 to vector<8x32xf32>
      %110 = arith.mulf %109, %54 : vector<8x32xf32>
      %111 = arith.addf %107, %110 : vector<8x32xf32>
      %c0_97 = arith.constant 0 : index
      %c10 = arith.constant 10 : index
      %112 = memref.load %arg10[%c0_97, %c10] : memref<16x15xf32, #tpu.memory_space<smem>>
      %113 = vector.broadcast %112 : f32 to vector<8x32xf32>
      %114 = arith.mulf %113, %57 : vector<8x32xf32>
      %115 = arith.addf %111, %114 : vector<8x32xf32>
      %c0_98 = arith.constant 0 : index
      %c11 = arith.constant 11 : index
      %116 = memref.load %arg10[%c0_98, %c11] : memref<16x15xf32, #tpu.memory_space<smem>>
      %117 = vector.broadcast %116 : f32 to vector<8x32xf32>
      %118 = arith.mulf %117, %60 : vector<8x32xf32>
      %119 = arith.addf %115, %118 : vector<8x32xf32>
      %c0_99 = arith.constant 0 : index
      %c12 = arith.constant 12 : index
      %120 = memref.load %arg10[%c0_99, %c12] : memref<16x15xf32, #tpu.memory_space<smem>>
      %121 = vector.broadcast %120 : f32 to vector<8x32xf32>
      %122 = arith.mulf %121, %63 : vector<8x32xf32>
      %123 = arith.addf %119, %122 : vector<8x32xf32>
      %c0_100 = arith.constant 0 : index
      %c13 = arith.constant 13 : index
      %124 = memref.load %arg10[%c0_100, %c13] : memref<16x15xf32, #tpu.memory_space<smem>>
      %125 = vector.broadcast %124 : f32 to vector<8x32xf32>
      %126 = arith.mulf %125, %66 : vector<8x32xf32>
      %127 = arith.addf %123, %126 : vector<8x32xf32>
      %c0_101 = arith.constant 0 : index
      %c14 = arith.constant 14 : index
      %128 = memref.load %arg10[%c0_101, %c14] : memref<16x15xf32, #tpu.memory_space<smem>>
      %129 = vector.broadcast %128 : f32 to vector<8x32xf32>
      %130 = arith.mulf %129, %69 : vector<8x32xf32>
      %131 = arith.addf %127, %130 : vector<8x32xf32>
      %c0_102 = arith.constant 0 : index
      %132 = memref.load %arg11[%c0_102] : memref<16xf32, #tpu.memory_space<smem>>
      %133 = vector.broadcast %132 : f32 to vector<8x32xf32>
      %134 = arith.addf %131, %133 : vector<8x32xf32>
      %cst_103 = arith.constant 0.000000e+00 : f32
      %135 = vector.broadcast %cst_103 : f32 to vector<8x32xf32>
      %136 = arith.maximumf %134, %135 : vector<8x32xf32>
      %c0_104 = arith.constant 0 : index
      %c0_105 = arith.constant 0 : index
      %c0_106 = arith.constant 0 : index
      %137 = vector.load %arg12[%c0_104, %c0_105, %c0_106] : memref<16x32x32xf32, #tpu.memory_space<vmem>>, vector<1x32x32xf32>
      %138 = vector.shape_cast %137 : vector<1x32x32xf32> to vector<32x32xf32>
      %cst_107 = arith.constant dense<0.000000e+00> : vector<8x32xf32>
      %139 = tpu.matmul %136, %138, %cst_107 {dimension_numbers = #tpu.dot_dimension_numbers<[1], [0], [0], [1], [0, 0, 1, 1], [], []>} : vector<8x32xf32>, vector<32x32xf32>, vector<8x32xf32> -> vector<8x32xf32>
      %140 = arith.addf %70, %139 : vector<8x32xf32>
      %cst_108 = arith.constant 0.000000e+00 : f32
      %141 = vector.broadcast %cst_108 : f32 to vector<8x32xf32>
      %c1_109 = arith.constant 1 : index
      %c0_110 = arith.constant 0 : index
      %142 = memref.load %arg10[%c1_109, %c0_110] : memref<16x15xf32, #tpu.memory_space<smem>>
      %143 = vector.broadcast %142 : f32 to vector<8x32xf32>
      %144 = arith.mulf %143, %27 : vector<8x32xf32>
      %145 = arith.addf %141, %144 : vector<8x32xf32>
      %c1_111 = arith.constant 1 : index
      %c1_112 = arith.constant 1 : index
      %146 = memref.load %arg10[%c1_111, %c1_112] : memref<16x15xf32, #tpu.memory_space<smem>>
      %147 = vector.broadcast %146 : f32 to vector<8x32xf32>
      %148 = arith.mulf %147, %30 : vector<8x32xf32>
      %149 = arith.addf %145, %148 : vector<8x32xf32>
      %c1_113 = arith.constant 1 : index
      %c2_114 = arith.constant 2 : index
      %150 = memref.load %arg10[%c1_113, %c2_114] : memref<16x15xf32, #tpu.memory_space<smem>>
      %151 = vector.broadcast %150 : f32 to vector<8x32xf32>
      %152 = arith.mulf %151, %33 : vector<8x32xf32>
      %153 = arith.addf %149, %152 : vector<8x32xf32>
      %c1_115 = arith.constant 1 : index
      %c3_116 = arith.constant 3 : index
      %154 = memref.load %arg10[%c1_115, %c3_116] : memref<16x15xf32, #tpu.memory_space<smem>>
      %155 = vector.broadcast %154 : f32 to vector<8x32xf32>
      %156 = arith.mulf %155, %36 : vector<8x32xf32>
      %157 = arith.addf %153, %156 : vector<8x32xf32>
      %c1_117 = arith.constant 1 : index
      %c4_118 = arith.constant 4 : index
      %158 = memref.load %arg10[%c1_117, %c4_118] : memref<16x15xf32, #tpu.memory_space<smem>>
      %159 = vector.broadcast %158 : f32 to vector<8x32xf32>
      %160 = arith.mulf %159, %39 : vector<8x32xf32>
      %161 = arith.addf %157, %160 : vector<8x32xf32>
      %c1_119 = arith.constant 1 : index
      %c5_120 = arith.constant 5 : index
      %162 = memref.load %arg10[%c1_119, %c5_120] : memref<16x15xf32, #tpu.memory_space<smem>>
      %163 = vector.broadcast %162 : f32 to vector<8x32xf32>
      %164 = arith.mulf %163, %42 : vector<8x32xf32>
      %165 = arith.addf %161, %164 : vector<8x32xf32>
      %c1_121 = arith.constant 1 : index
      %c6_122 = arith.constant 6 : index
      %166 = memref.load %arg10[%c1_121, %c6_122] : memref<16x15xf32, #tpu.memory_space<smem>>
      %167 = vector.broadcast %166 : f32 to vector<8x32xf32>
      %168 = arith.mulf %167, %45 : vector<8x32xf32>
      %169 = arith.addf %165, %168 : vector<8x32xf32>
      %c1_123 = arith.constant 1 : index
      %c7_124 = arith.constant 7 : index
      %170 = memref.load %arg10[%c1_123, %c7_124] : memref<16x15xf32, #tpu.memory_space<smem>>
      %171 = vector.broadcast %170 : f32 to vector<8x32xf32>
      %172 = arith.mulf %171, %48 : vector<8x32xf32>
      %173 = arith.addf %169, %172 : vector<8x32xf32>
      %c1_125 = arith.constant 1 : index
      %c8_126 = arith.constant 8 : index
      %174 = memref.load %arg10[%c1_125, %c8_126] : memref<16x15xf32, #tpu.memory_space<smem>>
      %175 = vector.broadcast %174 : f32 to vector<8x32xf32>
      %176 = arith.mulf %175, %51 : vector<8x32xf32>
      %177 = arith.addf %173, %176 : vector<8x32xf32>
      %c1_127 = arith.constant 1 : index
      %c9_128 = arith.constant 9 : index
      %178 = memref.load %arg10[%c1_127, %c9_128] : memref<16x15xf32, #tpu.memory_space<smem>>
      %179 = vector.broadcast %178 : f32 to vector<8x32xf32>
      %180 = arith.mulf %179, %54 : vector<8x32xf32>
      %181 = arith.addf %177, %180 : vector<8x32xf32>
      %c1_129 = arith.constant 1 : index
      %c10_130 = arith.constant 10 : index
      %182 = memref.load %arg10[%c1_129, %c10_130] : memref<16x15xf32, #tpu.memory_space<smem>>
      %183 = vector.broadcast %182 : f32 to vector<8x32xf32>
      %184 = arith.mulf %183, %57 : vector<8x32xf32>
      %185 = arith.addf %181, %184 : vector<8x32xf32>
      %c1_131 = arith.constant 1 : index
      %c11_132 = arith.constant 11 : index
      %186 = memref.load %arg10[%c1_131, %c11_132] : memref<16x15xf32, #tpu.memory_space<smem>>
      %187 = vector.broadcast %186 : f32 to vector<8x32xf32>
      %188 = arith.mulf %187, %60 : vector<8x32xf32>
      %189 = arith.addf %185, %188 : vector<8x32xf32>
      %c1_133 = arith.constant 1 : index
      %c12_134 = arith.constant 12 : index
      %190 = memref.load %arg10[%c1_133, %c12_134] : memref<16x15xf32, #tpu.memory_space<smem>>
      %191 = vector.broadcast %190 : f32 to vector<8x32xf32>
      %192 = arith.mulf %191, %63 : vector<8x32xf32>
      %193 = arith.addf %189, %192 : vector<8x32xf32>
      %c1_135 = arith.constant 1 : index
      %c13_136 = arith.constant 13 : index
      %194 = memref.load %arg10[%c1_135, %c13_136] : memref<16x15xf32, #tpu.memory_space<smem>>
      %195 = vector.broadcast %194 : f32 to vector<8x32xf32>
      %196 = arith.mulf %195, %66 : vector<8x32xf32>
      %197 = arith.addf %193, %196 : vector<8x32xf32>
      %c1_137 = arith.constant 1 : index
      %c14_138 = arith.constant 14 : index
      %198 = memref.load %arg10[%c1_137, %c14_138] : memref<16x15xf32, #tpu.memory_space<smem>>
      %199 = vector.broadcast %198 : f32 to vector<8x32xf32>
      %200 = arith.mulf %199, %69 : vector<8x32xf32>
      %201 = arith.addf %197, %200 : vector<8x32xf32>
      %c1_139 = arith.constant 1 : index
      %202 = memref.load %arg11[%c1_139] : memref<16xf32, #tpu.memory_space<smem>>
      %203 = vector.broadcast %202 : f32 to vector<8x32xf32>
      %204 = arith.addf %201, %203 : vector<8x32xf32>
      %cst_140 = arith.constant 0.000000e+00 : f32
      %205 = vector.broadcast %cst_140 : f32 to vector<8x32xf32>
      %206 = arith.maximumf %204, %205 : vector<8x32xf32>
      %c1_141 = arith.constant 1 : index
      %c0_142 = arith.constant 0 : index
      %c0_143 = arith.constant 0 : index
      %207 = vector.load %arg12[%c1_141, %c0_142, %c0_143] : memref<16x32x32xf32, #tpu.memory_space<vmem>>, vector<1x32x32xf32>
      %208 = vector.shape_cast %207 : vector<1x32x32xf32> to vector<32x32xf32>
      %cst_144 = arith.constant dense<0.000000e+00> : vector<8x32xf32>
      %209 = tpu.matmul %206, %208, %cst_144 {dimension_numbers = #tpu.dot_dimension_numbers<[1], [0], [0], [1], [0, 0, 1, 1], [], []>} : vector<8x32xf32>, vector<32x32xf32>, vector<8x32xf32> -> vector<8x32xf32>
      %210 = arith.addf %140, %209 : vector<8x32xf32>
      %cst_145 = arith.constant 0.000000e+00 : f32
      %211 = vector.broadcast %cst_145 : f32 to vector<8x32xf32>
      %c2_146 = arith.constant 2 : index
      %c0_147 = arith.constant 0 : index
      %212 = memref.load %arg10[%c2_146, %c0_147] : memref<16x15xf32, #tpu.memory_space<smem>>
      %213 = vector.broadcast %212 : f32 to vector<8x32xf32>
      %214 = arith.mulf %213, %27 : vector<8x32xf32>
      %215 = arith.addf %211, %214 : vector<8x32xf32>
      %c2_148 = arith.constant 2 : index
      %c1_149 = arith.constant 1 : index
      %216 = memref.load %arg10[%c2_148, %c1_149] : memref<16x15xf32, #tpu.memory_space<smem>>
      %217 = vector.broadcast %216 : f32 to vector<8x32xf32>
      %218 = arith.mulf %217, %30 : vector<8x32xf32>
      %219 = arith.addf %215, %218 : vector<8x32xf32>
      %c2_150 = arith.constant 2 : index
      %c2_151 = arith.constant 2 : index
      %220 = memref.load %arg10[%c2_150, %c2_151] : memref<16x15xf32, #tpu.memory_space<smem>>
      %221 = vector.broadcast %220 : f32 to vector<8x32xf32>
      %222 = arith.mulf %221, %33 : vector<8x32xf32>
      %223 = arith.addf %219, %222 : vector<8x32xf32>
      %c2_152 = arith.constant 2 : index
      %c3_153 = arith.constant 3 : index
      %224 = memref.load %arg10[%c2_152, %c3_153] : memref<16x15xf32, #tpu.memory_space<smem>>
      %225 = vector.broadcast %224 : f32 to vector<8x32xf32>
      %226 = arith.mulf %225, %36 : vector<8x32xf32>
      %227 = arith.addf %223, %226 : vector<8x32xf32>
      %c2_154 = arith.constant 2 : index
      %c4_155 = arith.constant 4 : index
      %228 = memref.load %arg10[%c2_154, %c4_155] : memref<16x15xf32, #tpu.memory_space<smem>>
      %229 = vector.broadcast %228 : f32 to vector<8x32xf32>
      %230 = arith.mulf %229, %39 : vector<8x32xf32>
      %231 = arith.addf %227, %230 : vector<8x32xf32>
      %c2_156 = arith.constant 2 : index
      %c5_157 = arith.constant 5 : index
      %232 = memref.load %arg10[%c2_156, %c5_157] : memref<16x15xf32, #tpu.memory_space<smem>>
      %233 = vector.broadcast %232 : f32 to vector<8x32xf32>
      %234 = arith.mulf %233, %42 : vector<8x32xf32>
      %235 = arith.addf %231, %234 : vector<8x32xf32>
      %c2_158 = arith.constant 2 : index
      %c6_159 = arith.constant 6 : index
      %236 = memref.load %arg10[%c2_158, %c6_159] : memref<16x15xf32, #tpu.memory_space<smem>>
      %237 = vector.broadcast %236 : f32 to vector<8x32xf32>
      %238 = arith.mulf %237, %45 : vector<8x32xf32>
      %239 = arith.addf %235, %238 : vector<8x32xf32>
      %c2_160 = arith.constant 2 : index
      %c7_161 = arith.constant 7 : index
      %240 = memref.load %arg10[%c2_160, %c7_161] : memref<16x15xf32, #tpu.memory_space<smem>>
      %241 = vector.broadcast %240 : f32 to vector<8x32xf32>
      %242 = arith.mulf %241, %48 : vector<8x32xf32>
      %243 = arith.addf %239, %242 : vector<8x32xf32>
      %c2_162 = arith.constant 2 : index
      %c8_163 = arith.constant 8 : index
      %244 = memref.load %arg10[%c2_162, %c8_163] : memref<16x15xf32, #tpu.memory_space<smem>>
      %245 = vector.broadcast %244 : f32 to vector<8x32xf32>
      %246 = arith.mulf %245, %51 : vector<8x32xf32>
      %247 = arith.addf %243, %246 : vector<8x32xf32>
      %c2_164 = arith.constant 2 : index
      %c9_165 = arith.constant 9 : index
      %248 = memref.load %arg10[%c2_164, %c9_165] : memref<16x15xf32, #tpu.memory_space<smem>>
      %249 = vector.broadcast %248 : f32 to vector<8x32xf32>
      %250 = arith.mulf %249, %54 : vector<8x32xf32>
      %251 = arith.addf %247, %250 : vector<8x32xf32>
      %c2_166 = arith.constant 2 : index
      %c10_167 = arith.constant 10 : index
      %252 = memref.load %arg10[%c2_166, %c10_167] : memref<16x15xf32, #tpu.memory_space<smem>>
      %253 = vector.broadcast %252 : f32 to vector<8x32xf32>
      %254 = arith.mulf %253, %57 : vector<8x32xf32>
      %255 = arith.addf %251, %254 : vector<8x32xf32>
      %c2_168 = arith.constant 2 : index
      %c11_169 = arith.constant 11 : index
      %256 = memref.load %arg10[%c2_168, %c11_169] : memref<16x15xf32, #tpu.memory_space<smem>>
      %257 = vector.broadcast %256 : f32 to vector<8x32xf32>
      %258 = arith.mulf %257, %60 : vector<8x32xf32>
      %259 = arith.addf %255, %258 : vector<8x32xf32>
      %c2_170 = arith.constant 2 : index
      %c12_171 = arith.constant 12 : index
      %260 = memref.load %arg10[%c2_170, %c12_171] : memref<16x15xf32, #tpu.memory_space<smem>>
      %261 = vector.broadcast %260 : f32 to vector<8x32xf32>
      %262 = arith.mulf %261, %63 : vector<8x32xf32>
      %263 = arith.addf %259, %262 : vector<8x32xf32>
      %c2_172 = arith.constant 2 : index
      %c13_173 = arith.constant 13 : index
      %264 = memref.load %arg10[%c2_172, %c13_173] : memref<16x15xf32, #tpu.memory_space<smem>>
      %265 = vector.broadcast %264 : f32 to vector<8x32xf32>
      %266 = arith.mulf %265, %66 : vector<8x32xf32>
      %267 = arith.addf %263, %266 : vector<8x32xf32>
      %c2_174 = arith.constant 2 : index
      %c14_175 = arith.constant 14 : index
      %268 = memref.load %arg10[%c2_174, %c14_175] : memref<16x15xf32, #tpu.memory_space<smem>>
      %269 = vector.broadcast %268 : f32 to vector<8x32xf32>
      %270 = arith.mulf %269, %69 : vector<8x32xf32>
      %271 = arith.addf %267, %270 : vector<8x32xf32>
      %c2_176 = arith.constant 2 : index
      %272 = memref.load %arg11[%c2_176] : memref<16xf32, #tpu.memory_space<smem>>
      %273 = vector.broadcast %272 : f32 to vector<8x32xf32>
      %274 = arith.addf %271, %273 : vector<8x32xf32>
      %cst_177 = arith.constant 0.000000e+00 : f32
      %275 = vector.broadcast %cst_177 : f32 to vector<8x32xf32>
      %276 = arith.maximumf %274, %275 : vector<8x32xf32>
      %c2_178 = arith.constant 2 : index
      %c0_179 = arith.constant 0 : index
      %c0_180 = arith.constant 0 : index
      %277 = vector.load %arg12[%c2_178, %c0_179, %c0_180] : memref<16x32x32xf32, #tpu.memory_space<vmem>>, vector<1x32x32xf32>
      %278 = vector.shape_cast %277 : vector<1x32x32xf32> to vector<32x32xf32>
      %cst_181 = arith.constant dense<0.000000e+00> : vector<8x32xf32>
      %279 = tpu.matmul %276, %278, %cst_181 {dimension_numbers = #tpu.dot_dimension_numbers<[1], [0], [0], [1], [0, 0, 1, 1], [], []>} : vector<8x32xf32>, vector<32x32xf32>, vector<8x32xf32> -> vector<8x32xf32>
      %280 = arith.addf %210, %279 : vector<8x32xf32>
      %cst_182 = arith.constant 0.000000e+00 : f32
      %281 = vector.broadcast %cst_182 : f32 to vector<8x32xf32>
      %c3_183 = arith.constant 3 : index
      %c0_184 = arith.constant 0 : index
      %282 = memref.load %arg10[%c3_183, %c0_184] : memref<16x15xf32, #tpu.memory_space<smem>>
      %283 = vector.broadcast %282 : f32 to vector<8x32xf32>
      %284 = arith.mulf %283, %27 : vector<8x32xf32>
      %285 = arith.addf %281, %284 : vector<8x32xf32>
      %c3_185 = arith.constant 3 : index
      %c1_186 = arith.constant 1 : index
      %286 = memref.load %arg10[%c3_185, %c1_186] : memref<16x15xf32, #tpu.memory_space<smem>>
      %287 = vector.broadcast %286 : f32 to vector<8x32xf32>
      %288 = arith.mulf %287, %30 : vector<8x32xf32>
      %289 = arith.addf %285, %288 : vector<8x32xf32>
      %c3_187 = arith.constant 3 : index
      %c2_188 = arith.constant 2 : index
      %290 = memref.load %arg10[%c3_187, %c2_188] : memref<16x15xf32, #tpu.memory_space<smem>>
      %291 = vector.broadcast %290 : f32 to vector<8x32xf32>
      %292 = arith.mulf %291, %33 : vector<8x32xf32>
      %293 = arith.addf %289, %292 : vector<8x32xf32>
      %c3_189 = arith.constant 3 : index
      %c3_190 = arith.constant 3 : index
      %294 = memref.load %arg10[%c3_189, %c3_190] : memref<16x15xf32, #tpu.memory_space<smem>>
      %295 = vector.broadcast %294 : f32 to vector<8x32xf32>
      %296 = arith.mulf %295, %36 : vector<8x32xf32>
      %297 = arith.addf %293, %296 : vector<8x32xf32>
      %c3_191 = arith.constant 3 : index
      %c4_192 = arith.constant 4 : index
      %298 = memref.load %arg10[%c3_191, %c4_192] : memref<16x15xf32, #tpu.memory_space<smem>>
      %299 = vector.broadcast %298 : f32 to vector<8x32xf32>
      %300 = arith.mulf %299, %39 : vector<8x32xf32>
      %301 = arith.addf %297, %300 : vector<8x32xf32>
      %c3_193 = arith.constant 3 : index
      %c5_194 = arith.constant 5 : index
      %302 = memref.load %arg10[%c3_193, %c5_194] : memref<16x15xf32, #tpu.memory_space<smem>>
      %303 = vector.broadcast %302 : f32 to vector<8x32xf32>
      %304 = arith.mulf %303, %42 : vector<8x32xf32>
      %305 = arith.addf %301, %304 : vector<8x32xf32>
      %c3_195 = arith.constant 3 : index
      %c6_196 = arith.constant 6 : index
      %306 = memref.load %arg10[%c3_195, %c6_196] : memref<16x15xf32, #tpu.memory_space<smem>>
      %307 = vector.broadcast %306 : f32 to vector<8x32xf32>
      %308 = arith.mulf %307, %45 : vector<8x32xf32>
      %309 = arith.addf %305, %308 : vector<8x32xf32>
      %c3_197 = arith.constant 3 : index
      %c7_198 = arith.constant 7 : index
      %310 = memref.load %arg10[%c3_197, %c7_198] : memref<16x15xf32, #tpu.memory_space<smem>>
      %311 = vector.broadcast %310 : f32 to vector<8x32xf32>
      %312 = arith.mulf %311, %48 : vector<8x32xf32>
      %313 = arith.addf %309, %312 : vector<8x32xf32>
      %c3_199 = arith.constant 3 : index
      %c8_200 = arith.constant 8 : index
      %314 = memref.load %arg10[%c3_199, %c8_200] : memref<16x15xf32, #tpu.memory_space<smem>>
      %315 = vector.broadcast %314 : f32 to vector<8x32xf32>
      %316 = arith.mulf %315, %51 : vector<8x32xf32>
      %317 = arith.addf %313, %316 : vector<8x32xf32>
      %c3_201 = arith.constant 3 : index
      %c9_202 = arith.constant 9 : index
      %318 = memref.load %arg10[%c3_201, %c9_202] : memref<16x15xf32, #tpu.memory_space<smem>>
      %319 = vector.broadcast %318 : f32 to vector<8x32xf32>
      %320 = arith.mulf %319, %54 : vector<8x32xf32>
      %321 = arith.addf %317, %320 : vector<8x32xf32>
      %c3_203 = arith.constant 3 : index
      %c10_204 = arith.constant 10 : index
      %322 = memref.load %arg10[%c3_203, %c10_204] : memref<16x15xf32, #tpu.memory_space<smem>>
      %323 = vector.broadcast %322 : f32 to vector<8x32xf32>
      %324 = arith.mulf %323, %57 : vector<8x32xf32>
      %325 = arith.addf %321, %324 : vector<8x32xf32>
      %c3_205 = arith.constant 3 : index
      %c11_206 = arith.constant 11 : index
      %326 = memref.load %arg10[%c3_205, %c11_206] : memref<16x15xf32, #tpu.memory_space<smem>>
      %327 = vector.broadcast %326 : f32 to vector<8x32xf32>
      %328 = arith.mulf %327, %60 : vector<8x32xf32>
      %329 = arith.addf %325, %328 : vector<8x32xf32>
      %c3_207 = arith.constant 3 : index
      %c12_208 = arith.constant 12 : index
      %330 = memref.load %arg10[%c3_207, %c12_208] : memref<16x15xf32, #tpu.memory_space<smem>>
      %331 = vector.broadcast %330 : f32 to vector<8x32xf32>
      %332 = arith.mulf %331, %63 : vector<8x32xf32>
      %333 = arith.addf %329, %332 : vector<8x32xf32>
      %c3_209 = arith.constant 3 : index
      %c13_210 = arith.constant 13 : index
      %334 = memref.load %arg10[%c3_209, %c13_210] : memref<16x15xf32, #tpu.memory_space<smem>>
      %335 = vector.broadcast %334 : f32 to vector<8x32xf32>
      %336 = arith.mulf %335, %66 : vector<8x32xf32>
      %337 = arith.addf %333, %336 : vector<8x32xf32>
      %c3_211 = arith.constant 3 : index
      %c14_212 = arith.constant 14 : index
      %338 = memref.load %arg10[%c3_211, %c14_212] : memref<16x15xf32, #tpu.memory_space<smem>>
      %339 = vector.broadcast %338 : f32 to vector<8x32xf32>
      %340 = arith.mulf %339, %69 : vector<8x32xf32>
      %341 = arith.addf %337, %340 : vector<8x32xf32>
      %c3_213 = arith.constant 3 : index
      %342 = memref.load %arg11[%c3_213] : memref<16xf32, #tpu.memory_space<smem>>
      %343 = vector.broadcast %342 : f32 to vector<8x32xf32>
      %344 = arith.addf %341, %343 : vector<8x32xf32>
      %cst_214 = arith.constant 0.000000e+00 : f32
      %345 = vector.broadcast %cst_214 : f32 to vector<8x32xf32>
      %346 = arith.maximumf %344, %345 : vector<8x32xf32>
      %c3_215 = arith.constant 3 : index
      %c0_216 = arith.constant 0 : index
      %c0_217 = arith.constant 0 : index
      %347 = vector.load %arg12[%c3_215, %c0_216, %c0_217] : memref<16x32x32xf32, #tpu.memory_space<vmem>>, vector<1x32x32xf32>
      %348 = vector.shape_cast %347 : vector<1x32x32xf32> to vector<32x32xf32>
      %cst_218 = arith.constant dense<0.000000e+00> : vector<8x32xf32>
      %349 = tpu.matmul %346, %348, %cst_218 {dimension_numbers = #tpu.dot_dimension_numbers<[1], [0], [0], [1], [0, 0, 1, 1], [], []>} : vector<8x32xf32>, vector<32x32xf32>, vector<8x32xf32> -> vector<8x32xf32>
      %350 = arith.addf %280, %349 : vector<8x32xf32>
      %cst_219 = arith.constant 0.000000e+00 : f32
      %351 = vector.broadcast %cst_219 : f32 to vector<8x32xf32>
      %c4_220 = arith.constant 4 : index
      %c0_221 = arith.constant 0 : index
      %352 = memref.load %arg10[%c4_220, %c0_221] : memref<16x15xf32, #tpu.memory_space<smem>>
      %353 = vector.broadcast %352 : f32 to vector<8x32xf32>
      %354 = arith.mulf %353, %27 : vector<8x32xf32>
      %355 = arith.addf %351, %354 : vector<8x32xf32>
      %c4_222 = arith.constant 4 : index
      %c1_223 = arith.constant 1 : index
      %356 = memref.load %arg10[%c4_222, %c1_223] : memref<16x15xf32, #tpu.memory_space<smem>>
      %357 = vector.broadcast %356 : f32 to vector<8x32xf32>
      %358 = arith.mulf %357, %30 : vector<8x32xf32>
      %359 = arith.addf %355, %358 : vector<8x32xf32>
      %c4_224 = arith.constant 4 : index
      %c2_225 = arith.constant 2 : index
      %360 = memref.load %arg10[%c4_224, %c2_225] : memref<16x15xf32, #tpu.memory_space<smem>>
      %361 = vector.broadcast %360 : f32 to vector<8x32xf32>
      %362 = arith.mulf %361, %33 : vector<8x32xf32>
      %363 = arith.addf %359, %362 : vector<8x32xf32>
      %c4_226 = arith.constant 4 : index
      %c3_227 = arith.constant 3 : index
      %364 = memref.load %arg10[%c4_226, %c3_227] : memref<16x15xf32, #tpu.memory_space<smem>>
      %365 = vector.broadcast %364 : f32 to vector<8x32xf32>
      %366 = arith.mulf %365, %36 : vector<8x32xf32>
      %367 = arith.addf %363, %366 : vector<8x32xf32>
      %c4_228 = arith.constant 4 : index
      %c4_229 = arith.constant 4 : index
      %368 = memref.load %arg10[%c4_228, %c4_229] : memref<16x15xf32, #tpu.memory_space<smem>>
      %369 = vector.broadcast %368 : f32 to vector<8x32xf32>
      %370 = arith.mulf %369, %39 : vector<8x32xf32>
      %371 = arith.addf %367, %370 : vector<8x32xf32>
      %c4_230 = arith.constant 4 : index
      %c5_231 = arith.constant 5 : index
      %372 = memref.load %arg10[%c4_230, %c5_231] : memref<16x15xf32, #tpu.memory_space<smem>>
      %373 = vector.broadcast %372 : f32 to vector<8x32xf32>
      %374 = arith.mulf %373, %42 : vector<8x32xf32>
      %375 = arith.addf %371, %374 : vector<8x32xf32>
      %c4_232 = arith.constant 4 : index
      %c6_233 = arith.constant 6 : index
      %376 = memref.load %arg10[%c4_232, %c6_233] : memref<16x15xf32, #tpu.memory_space<smem>>
      %377 = vector.broadcast %376 : f32 to vector<8x32xf32>
      %378 = arith.mulf %377, %45 : vector<8x32xf32>
      %379 = arith.addf %375, %378 : vector<8x32xf32>
      %c4_234 = arith.constant 4 : index
      %c7_235 = arith.constant 7 : index
      %380 = memref.load %arg10[%c4_234, %c7_235] : memref<16x15xf32, #tpu.memory_space<smem>>
      %381 = vector.broadcast %380 : f32 to vector<8x32xf32>
      %382 = arith.mulf %381, %48 : vector<8x32xf32>
      %383 = arith.addf %379, %382 : vector<8x32xf32>
      %c4_236 = arith.constant 4 : index
      %c8_237 = arith.constant 8 : index
      %384 = memref.load %arg10[%c4_236, %c8_237] : memref<16x15xf32, #tpu.memory_space<smem>>
      %385 = vector.broadcast %384 : f32 to vector<8x32xf32>
      %386 = arith.mulf %385, %51 : vector<8x32xf32>
      %387 = arith.addf %383, %386 : vector<8x32xf32>
      %c4_238 = arith.constant 4 : index
      %c9_239 = arith.constant 9 : index
      %388 = memref.load %arg10[%c4_238, %c9_239] : memref<16x15xf32, #tpu.memory_space<smem>>
      %389 = vector.broadcast %388 : f32 to vector<8x32xf32>
      %390 = arith.mulf %389, %54 : vector<8x32xf32>
      %391 = arith.addf %387, %390 : vector<8x32xf32>
      %c4_240 = arith.constant 4 : index
      %c10_241 = arith.constant 10 : index
      %392 = memref.load %arg10[%c4_240, %c10_241] : memref<16x15xf32, #tpu.memory_space<smem>>
      %393 = vector.broadcast %392 : f32 to vector<8x32xf32>
      %394 = arith.mulf %393, %57 : vector<8x32xf32>
      %395 = arith.addf %391, %394 : vector<8x32xf32>
      %c4_242 = arith.constant 4 : index
      %c11_243 = arith.constant 11 : index
      %396 = memref.load %arg10[%c4_242, %c11_243] : memref<16x15xf32, #tpu.memory_space<smem>>
      %397 = vector.broadcast %396 : f32 to vector<8x32xf32>
      %398 = arith.mulf %397, %60 : vector<8x32xf32>
      %399 = arith.addf %395, %398 : vector<8x32xf32>
      %c4_244 = arith.constant 4 : index
      %c12_245 = arith.constant 12 : index
      %400 = memref.load %arg10[%c4_244, %c12_245] : memref<16x15xf32, #tpu.memory_space<smem>>
      %401 = vector.broadcast %400 : f32 to vector<8x32xf32>
      %402 = arith.mulf %401, %63 : vector<8x32xf32>
      %403 = arith.addf %399, %402 : vector<8x32xf32>
      %c4_246 = arith.constant 4 : index
      %c13_247 = arith.constant 13 : index
      %404 = memref.load %arg10[%c4_246, %c13_247] : memref<16x15xf32, #tpu.memory_space<smem>>
      %405 = vector.broadcast %404 : f32 to vector<8x32xf32>
      %406 = arith.mulf %405, %66 : vector<8x32xf32>
      %407 = arith.addf %403, %406 : vector<8x32xf32>
      %c4_248 = arith.constant 4 : index
      %c14_249 = arith.constant 14 : index
      %408 = memref.load %arg10[%c4_248, %c14_249] : memref<16x15xf32, #tpu.memory_space<smem>>
      %409 = vector.broadcast %408 : f32 to vector<8x32xf32>
      %410 = arith.mulf %409, %69 : vector<8x32xf32>
      %411 = arith.addf %407, %410 : vector<8x32xf32>
      %c4_250 = arith.constant 4 : index
      %412 = memref.load %arg11[%c4_250] : memref<16xf32, #tpu.memory_space<smem>>
      %413 = vector.broadcast %412 : f32 to vector<8x32xf32>
      %414 = arith.addf %411, %413 : vector<8x32xf32>
      %cst_251 = arith.constant 0.000000e+00 : f32
      %415 = vector.broadcast %cst_251 : f32 to vector<8x32xf32>
      %416 = arith.maximumf %414, %415 : vector<8x32xf32>
      %c4_252 = arith.constant 4 : index
      %c0_253 = arith.constant 0 : index
      %c0_254 = arith.constant 0 : index
      %417 = vector.load %arg12[%c4_252, %c0_253, %c0_254] : memref<16x32x32xf32, #tpu.memory_space<vmem>>, vector<1x32x32xf32>
      %418 = vector.shape_cast %417 : vector<1x32x32xf32> to vector<32x32xf32>
      %cst_255 = arith.constant dense<0.000000e+00> : vector<8x32xf32>
      %419 = tpu.matmul %416, %418, %cst_255 {dimension_numbers = #tpu.dot_dimension_numbers<[1], [0], [0], [1], [0, 0, 1, 1], [], []>} : vector<8x32xf32>, vector<32x32xf32>, vector<8x32xf32> -> vector<8x32xf32>
      %420 = arith.addf %350, %419 : vector<8x32xf32>
      %cst_256 = arith.constant 0.000000e+00 : f32
      %421 = vector.broadcast %cst_256 : f32 to vector<8x32xf32>
      %c5_257 = arith.constant 5 : index
      %c0_258 = arith.constant 0 : index
      %422 = memref.load %arg10[%c5_257, %c0_258] : memref<16x15xf32, #tpu.memory_space<smem>>
      %423 = vector.broadcast %422 : f32 to vector<8x32xf32>
      %424 = arith.mulf %423, %27 : vector<8x32xf32>
      %425 = arith.addf %421, %424 : vector<8x32xf32>
      %c5_259 = arith.constant 5 : index
      %c1_260 = arith.constant 1 : index
      %426 = memref.load %arg10[%c5_259, %c1_260] : memref<16x15xf32, #tpu.memory_space<smem>>
      %427 = vector.broadcast %426 : f32 to vector<8x32xf32>
      %428 = arith.mulf %427, %30 : vector<8x32xf32>
      %429 = arith.addf %425, %428 : vector<8x32xf32>
      %c5_261 = arith.constant 5 : index
      %c2_262 = arith.constant 2 : index
      %430 = memref.load %arg10[%c5_261, %c2_262] : memref<16x15xf32, #tpu.memory_space<smem>>
      %431 = vector.broadcast %430 : f32 to vector<8x32xf32>
      %432 = arith.mulf %431, %33 : vector<8x32xf32>
      %433 = arith.addf %429, %432 : vector<8x32xf32>
      %c5_263 = arith.constant 5 : index
      %c3_264 = arith.constant 3 : index
      %434 = memref.load %arg10[%c5_263, %c3_264] : memref<16x15xf32, #tpu.memory_space<smem>>
      %435 = vector.broadcast %434 : f32 to vector<8x32xf32>
      %436 = arith.mulf %435, %36 : vector<8x32xf32>
      %437 = arith.addf %433, %436 : vector<8x32xf32>
      %c5_265 = arith.constant 5 : index
      %c4_266 = arith.constant 4 : index
      %438 = memref.load %arg10[%c5_265, %c4_266] : memref<16x15xf32, #tpu.memory_space<smem>>
      %439 = vector.broadcast %438 : f32 to vector<8x32xf32>
      %440 = arith.mulf %439, %39 : vector<8x32xf32>
      %441 = arith.addf %437, %440 : vector<8x32xf32>
      %c5_267 = arith.constant 5 : index
      %c5_268 = arith.constant 5 : index
      %442 = memref.load %arg10[%c5_267, %c5_268] : memref<16x15xf32, #tpu.memory_space<smem>>
      %443 = vector.broadcast %442 : f32 to vector<8x32xf32>
      %444 = arith.mulf %443, %42 : vector<8x32xf32>
      %445 = arith.addf %441, %444 : vector<8x32xf32>
      %c5_269 = arith.constant 5 : index
      %c6_270 = arith.constant 6 : index
      %446 = memref.load %arg10[%c5_269, %c6_270] : memref<16x15xf32, #tpu.memory_space<smem>>
      %447 = vector.broadcast %446 : f32 to vector<8x32xf32>
      %448 = arith.mulf %447, %45 : vector<8x32xf32>
      %449 = arith.addf %445, %448 : vector<8x32xf32>
      %c5_271 = arith.constant 5 : index
      %c7_272 = arith.constant 7 : index
      %450 = memref.load %arg10[%c5_271, %c7_272] : memref<16x15xf32, #tpu.memory_space<smem>>
      %451 = vector.broadcast %450 : f32 to vector<8x32xf32>
      %452 = arith.mulf %451, %48 : vector<8x32xf32>
      %453 = arith.addf %449, %452 : vector<8x32xf32>
      %c5_273 = arith.constant 5 : index
      %c8_274 = arith.constant 8 : index
      %454 = memref.load %arg10[%c5_273, %c8_274] : memref<16x15xf32, #tpu.memory_space<smem>>
      %455 = vector.broadcast %454 : f32 to vector<8x32xf32>
      %456 = arith.mulf %455, %51 : vector<8x32xf32>
      %457 = arith.addf %453, %456 : vector<8x32xf32>
      %c5_275 = arith.constant 5 : index
      %c9_276 = arith.constant 9 : index
      %458 = memref.load %arg10[%c5_275, %c9_276] : memref<16x15xf32, #tpu.memory_space<smem>>
      %459 = vector.broadcast %458 : f32 to vector<8x32xf32>
      %460 = arith.mulf %459, %54 : vector<8x32xf32>
      %461 = arith.addf %457, %460 : vector<8x32xf32>
      %c5_277 = arith.constant 5 : index
      %c10_278 = arith.constant 10 : index
      %462 = memref.load %arg10[%c5_277, %c10_278] : memref<16x15xf32, #tpu.memory_space<smem>>
      %463 = vector.broadcast %462 : f32 to vector<8x32xf32>
      %464 = arith.mulf %463, %57 : vector<8x32xf32>
      %465 = arith.addf %461, %464 : vector<8x32xf32>
      %c5_279 = arith.constant 5 : index
      %c11_280 = arith.constant 11 : index
      %466 = memref.load %arg10[%c5_279, %c11_280] : memref<16x15xf32, #tpu.memory_space<smem>>
      %467 = vector.broadcast %466 : f32 to vector<8x32xf32>
      %468 = arith.mulf %467, %60 : vector<8x32xf32>
      %469 = arith.addf %465, %468 : vector<8x32xf32>
      %c5_281 = arith.constant 5 : index
      %c12_282 = arith.constant 12 : index
      %470 = memref.load %arg10[%c5_281, %c12_282] : memref<16x15xf32, #tpu.memory_space<smem>>
      %471 = vector.broadcast %470 : f32 to vector<8x32xf32>
      %472 = arith.mulf %471, %63 : vector<8x32xf32>
      %473 = arith.addf %469, %472 : vector<8x32xf32>
      %c5_283 = arith.constant 5 : index
      %c13_284 = arith.constant 13 : index
      %474 = memref.load %arg10[%c5_283, %c13_284] : memref<16x15xf32, #tpu.memory_space<smem>>
      %475 = vector.broadcast %474 : f32 to vector<8x32xf32>
      %476 = arith.mulf %475, %66 : vector<8x32xf32>
      %477 = arith.addf %473, %476 : vector<8x32xf32>
      %c5_285 = arith.constant 5 : index
      %c14_286 = arith.constant 14 : index
      %478 = memref.load %arg10[%c5_285, %c14_286] : memref<16x15xf32, #tpu.memory_space<smem>>
      %479 = vector.broadcast %478 : f32 to vector<8x32xf32>
      %480 = arith.mulf %479, %69 : vector<8x32xf32>
      %481 = arith.addf %477, %480 : vector<8x32xf32>
      %c5_287 = arith.constant 5 : index
      %482 = memref.load %arg11[%c5_287] : memref<16xf32, #tpu.memory_space<smem>>
      %483 = vector.broadcast %482 : f32 to vector<8x32xf32>
      %484 = arith.addf %481, %483 : vector<8x32xf32>
      %cst_288 = arith.constant 0.000000e+00 : f32
      %485 = vector.broadcast %cst_288 : f32 to vector<8x32xf32>
      %486 = arith.maximumf %484, %485 : vector<8x32xf32>
      %c5_289 = arith.constant 5 : index
      %c0_290 = arith.constant 0 : index
      %c0_291 = arith.constant 0 : index
      %487 = vector.load %arg12[%c5_289, %c0_290, %c0_291] : memref<16x32x32xf32, #tpu.memory_space<vmem>>, vector<1x32x32xf32>
      %488 = vector.shape_cast %487 : vector<1x32x32xf32> to vector<32x32xf32>
      %cst_292 = arith.constant dense<0.000000e+00> : vector<8x32xf32>
      %489 = tpu.matmul %486, %488, %cst_292 {dimension_numbers = #tpu.dot_dimension_numbers<[1], [0], [0], [1], [0, 0, 1, 1], [], []>} : vector<8x32xf32>, vector<32x32xf32>, vector<8x32xf32> -> vector<8x32xf32>
      %490 = arith.addf %420, %489 : vector<8x32xf32>
      %cst_293 = arith.constant 0.000000e+00 : f32
      %491 = vector.broadcast %cst_293 : f32 to vector<8x32xf32>
      %c6_294 = arith.constant 6 : index
      %c0_295 = arith.constant 0 : index
      %492 = memref.load %arg10[%c6_294, %c0_295] : memref<16x15xf32, #tpu.memory_space<smem>>
      %493 = vector.broadcast %492 : f32 to vector<8x32xf32>
      %494 = arith.mulf %493, %27 : vector<8x32xf32>
      %495 = arith.addf %491, %494 : vector<8x32xf32>
      %c6_296 = arith.constant 6 : index
      %c1_297 = arith.constant 1 : index
      %496 = memref.load %arg10[%c6_296, %c1_297] : memref<16x15xf32, #tpu.memory_space<smem>>
      %497 = vector.broadcast %496 : f32 to vector<8x32xf32>
      %498 = arith.mulf %497, %30 : vector<8x32xf32>
      %499 = arith.addf %495, %498 : vector<8x32xf32>
      %c6_298 = arith.constant 6 : index
      %c2_299 = arith.constant 2 : index
      %500 = memref.load %arg10[%c6_298, %c2_299] : memref<16x15xf32, #tpu.memory_space<smem>>
      %501 = vector.broadcast %500 : f32 to vector<8x32xf32>
      %502 = arith.mulf %501, %33 : vector<8x32xf32>
      %503 = arith.addf %499, %502 : vector<8x32xf32>
      %c6_300 = arith.constant 6 : index
      %c3_301 = arith.constant 3 : index
      %504 = memref.load %arg10[%c6_300, %c3_301] : memref<16x15xf32, #tpu.memory_space<smem>>
      %505 = vector.broadcast %504 : f32 to vector<8x32xf32>
      %506 = arith.mulf %505, %36 : vector<8x32xf32>
      %507 = arith.addf %503, %506 : vector<8x32xf32>
      %c6_302 = arith.constant 6 : index
      %c4_303 = arith.constant 4 : index
      %508 = memref.load %arg10[%c6_302, %c4_303] : memref<16x15xf32, #tpu.memory_space<smem>>
      %509 = vector.broadcast %508 : f32 to vector<8x32xf32>
      %510 = arith.mulf %509, %39 : vector<8x32xf32>
      %511 = arith.addf %507, %510 : vector<8x32xf32>
      %c6_304 = arith.constant 6 : index
      %c5_305 = arith.constant 5 : index
      %512 = memref.load %arg10[%c6_304, %c5_305] : memref<16x15xf32, #tpu.memory_space<smem>>
      %513 = vector.broadcast %512 : f32 to vector<8x32xf32>
      %514 = arith.mulf %513, %42 : vector<8x32xf32>
      %515 = arith.addf %511, %514 : vector<8x32xf32>
      %c6_306 = arith.constant 6 : index
      %c6_307 = arith.constant 6 : index
      %516 = memref.load %arg10[%c6_306, %c6_307] : memref<16x15xf32, #tpu.memory_space<smem>>
      %517 = vector.broadcast %516 : f32 to vector<8x32xf32>
      %518 = arith.mulf %517, %45 : vector<8x32xf32>
      %519 = arith.addf %515, %518 : vector<8x32xf32>
      %c6_308 = arith.constant 6 : index
      %c7_309 = arith.constant 7 : index
      %520 = memref.load %arg10[%c6_308, %c7_309] : memref<16x15xf32, #tpu.memory_space<smem>>
      %521 = vector.broadcast %520 : f32 to vector<8x32xf32>
      %522 = arith.mulf %521, %48 : vector<8x32xf32>
      %523 = arith.addf %519, %522 : vector<8x32xf32>
      %c6_310 = arith.constant 6 : index
      %c8_311 = arith.constant 8 : index
      %524 = memref.load %arg10[%c6_310, %c8_311] : memref<16x15xf32, #tpu.memory_space<smem>>
      %525 = vector.broadcast %524 : f32 to vector<8x32xf32>
      %526 = arith.mulf %525, %51 : vector<8x32xf32>
      %527 = arith.addf %523, %526 : vector<8x32xf32>
      %c6_312 = arith.constant 6 : index
      %c9_313 = arith.constant 9 : index
      %528 = memref.load %arg10[%c6_312, %c9_313] : memref<16x15xf32, #tpu.memory_space<smem>>
      %529 = vector.broadcast %528 : f32 to vector<8x32xf32>
      %530 = arith.mulf %529, %54 : vector<8x32xf32>
      %531 = arith.addf %527, %530 : vector<8x32xf32>
      %c6_314 = arith.constant 6 : index
      %c10_315 = arith.constant 10 : index
      %532 = memref.load %arg10[%c6_314, %c10_315] : memref<16x15xf32, #tpu.memory_space<smem>>
      %533 = vector.broadcast %532 : f32 to vector<8x32xf32>
      %534 = arith.mulf %533, %57 : vector<8x32xf32>
      %535 = arith.addf %531, %534 : vector<8x32xf32>
      %c6_316 = arith.constant 6 : index
      %c11_317 = arith.constant 11 : index
      %536 = memref.load %arg10[%c6_316, %c11_317] : memref<16x15xf32, #tpu.memory_space<smem>>
      %537 = vector.broadcast %536 : f32 to vector<8x32xf32>
      %538 = arith.mulf %537, %60 : vector<8x32xf32>
      %539 = arith.addf %535, %538 : vector<8x32xf32>
      %c6_318 = arith.constant 6 : index
      %c12_319 = arith.constant 12 : index
      %540 = memref.load %arg10[%c6_318, %c12_319] : memref<16x15xf32, #tpu.memory_space<smem>>
      %541 = vector.broadcast %540 : f32 to vector<8x32xf32>
      %542 = arith.mulf %541, %63 : vector<8x32xf32>
      %543 = arith.addf %539, %542 : vector<8x32xf32>
      %c6_320 = arith.constant 6 : index
      %c13_321 = arith.constant 13 : index
      %544 = memref.load %arg10[%c6_320, %c13_321] : memref<16x15xf32, #tpu.memory_space<smem>>
      %545 = vector.broadcast %544 : f32 to vector<8x32xf32>
      %546 = arith.mulf %545, %66 : vector<8x32xf32>
      %547 = arith.addf %543, %546 : vector<8x32xf32>
      %c6_322 = arith.constant 6 : index
      %c14_323 = arith.constant 14 : index
      %548 = memref.load %arg10[%c6_322, %c14_323] : memref<16x15xf32, #tpu.memory_space<smem>>
      %549 = vector.broadcast %548 : f32 to vector<8x32xf32>
      %550 = arith.mulf %549, %69 : vector<8x32xf32>
      %551 = arith.addf %547, %550 : vector<8x32xf32>
      %c6_324 = arith.constant 6 : index
      %552 = memref.load %arg11[%c6_324] : memref<16xf32, #tpu.memory_space<smem>>
      %553 = vector.broadcast %552 : f32 to vector<8x32xf32>
      %554 = arith.addf %551, %553 : vector<8x32xf32>
      %cst_325 = arith.constant 0.000000e+00 : f32
      %555 = vector.broadcast %cst_325 : f32 to vector<8x32xf32>
      %556 = arith.maximumf %554, %555 : vector<8x32xf32>
      %c6_326 = arith.constant 6 : index
      %c0_327 = arith.constant 0 : index
      %c0_328 = arith.constant 0 : index
      %557 = vector.load %arg12[%c6_326, %c0_327, %c0_328] : memref<16x32x32xf32, #tpu.memory_space<vmem>>, vector<1x32x32xf32>
      %558 = vector.shape_cast %557 : vector<1x32x32xf32> to vector<32x32xf32>
      %cst_329 = arith.constant dense<0.000000e+00> : vector<8x32xf32>
      %559 = tpu.matmul %556, %558, %cst_329 {dimension_numbers = #tpu.dot_dimension_numbers<[1], [0], [0], [1], [0, 0, 1, 1], [], []>} : vector<8x32xf32>, vector<32x32xf32>, vector<8x32xf32> -> vector<8x32xf32>
      %560 = arith.addf %490, %559 : vector<8x32xf32>
      %cst_330 = arith.constant 0.000000e+00 : f32
      %561 = vector.broadcast %cst_330 : f32 to vector<8x32xf32>
      %c7_331 = arith.constant 7 : index
      %c0_332 = arith.constant 0 : index
      %562 = memref.load %arg10[%c7_331, %c0_332] : memref<16x15xf32, #tpu.memory_space<smem>>
      %563 = vector.broadcast %562 : f32 to vector<8x32xf32>
      %564 = arith.mulf %563, %27 : vector<8x32xf32>
      %565 = arith.addf %561, %564 : vector<8x32xf32>
      %c7_333 = arith.constant 7 : index
      %c1_334 = arith.constant 1 : index
      %566 = memref.load %arg10[%c7_333, %c1_334] : memref<16x15xf32, #tpu.memory_space<smem>>
      %567 = vector.broadcast %566 : f32 to vector<8x32xf32>
      %568 = arith.mulf %567, %30 : vector<8x32xf32>
      %569 = arith.addf %565, %568 : vector<8x32xf32>
      %c7_335 = arith.constant 7 : index
      %c2_336 = arith.constant 2 : index
      %570 = memref.load %arg10[%c7_335, %c2_336] : memref<16x15xf32, #tpu.memory_space<smem>>
      %571 = vector.broadcast %570 : f32 to vector<8x32xf32>
      %572 = arith.mulf %571, %33 : vector<8x32xf32>
      %573 = arith.addf %569, %572 : vector<8x32xf32>
      %c7_337 = arith.constant 7 : index
      %c3_338 = arith.constant 3 : index
      %574 = memref.load %arg10[%c7_337, %c3_338] : memref<16x15xf32, #tpu.memory_space<smem>>
      %575 = vector.broadcast %574 : f32 to vector<8x32xf32>
      %576 = arith.mulf %575, %36 : vector<8x32xf32>
      %577 = arith.addf %573, %576 : vector<8x32xf32>
      %c7_339 = arith.constant 7 : index
      %c4_340 = arith.constant 4 : index
      %578 = memref.load %arg10[%c7_339, %c4_340] : memref<16x15xf32, #tpu.memory_space<smem>>
      %579 = vector.broadcast %578 : f32 to vector<8x32xf32>
      %580 = arith.mulf %579, %39 : vector<8x32xf32>
      %581 = arith.addf %577, %580 : vector<8x32xf32>
      %c7_341 = arith.constant 7 : index
      %c5_342 = arith.constant 5 : index
      %582 = memref.load %arg10[%c7_341, %c5_342] : memref<16x15xf32, #tpu.memory_space<smem>>
      %583 = vector.broadcast %582 : f32 to vector<8x32xf32>
      %584 = arith.mulf %583, %42 : vector<8x32xf32>
      %585 = arith.addf %581, %584 : vector<8x32xf32>
      %c7_343 = arith.constant 7 : index
      %c6_344 = arith.constant 6 : index
      %586 = memref.load %arg10[%c7_343, %c6_344] : memref<16x15xf32, #tpu.memory_space<smem>>
      %587 = vector.broadcast %586 : f32 to vector<8x32xf32>
      %588 = arith.mulf %587, %45 : vector<8x32xf32>
      %589 = arith.addf %585, %588 : vector<8x32xf32>
      %c7_345 = arith.constant 7 : index
      %c7_346 = arith.constant 7 : index
      %590 = memref.load %arg10[%c7_345, %c7_346] : memref<16x15xf32, #tpu.memory_space<smem>>
      %591 = vector.broadcast %590 : f32 to vector<8x32xf32>
      %592 = arith.mulf %591, %48 : vector<8x32xf32>
      %593 = arith.addf %589, %592 : vector<8x32xf32>
      %c7_347 = arith.constant 7 : index
      %c8_348 = arith.constant 8 : index
      %594 = memref.load %arg10[%c7_347, %c8_348] : memref<16x15xf32, #tpu.memory_space<smem>>
      %595 = vector.broadcast %594 : f32 to vector<8x32xf32>
      %596 = arith.mulf %595, %51 : vector<8x32xf32>
      %597 = arith.addf %593, %596 : vector<8x32xf32>
      %c7_349 = arith.constant 7 : index
      %c9_350 = arith.constant 9 : index
      %598 = memref.load %arg10[%c7_349, %c9_350] : memref<16x15xf32, #tpu.memory_space<smem>>
      %599 = vector.broadcast %598 : f32 to vector<8x32xf32>
      %600 = arith.mulf %599, %54 : vector<8x32xf32>
      %601 = arith.addf %597, %600 : vector<8x32xf32>
      %c7_351 = arith.constant 7 : index
      %c10_352 = arith.constant 10 : index
      %602 = memref.load %arg10[%c7_351, %c10_352] : memref<16x15xf32, #tpu.memory_space<smem>>
      %603 = vector.broadcast %602 : f32 to vector<8x32xf32>
      %604 = arith.mulf %603, %57 : vector<8x32xf32>
      %605 = arith.addf %601, %604 : vector<8x32xf32>
      %c7_353 = arith.constant 7 : index
      %c11_354 = arith.constant 11 : index
      %606 = memref.load %arg10[%c7_353, %c11_354] : memref<16x15xf32, #tpu.memory_space<smem>>
      %607 = vector.broadcast %606 : f32 to vector<8x32xf32>
      %608 = arith.mulf %607, %60 : vector<8x32xf32>
      %609 = arith.addf %605, %608 : vector<8x32xf32>
      %c7_355 = arith.constant 7 : index
      %c12_356 = arith.constant 12 : index
      %610 = memref.load %arg10[%c7_355, %c12_356] : memref<16x15xf32, #tpu.memory_space<smem>>
      %611 = vector.broadcast %610 : f32 to vector<8x32xf32>
      %612 = arith.mulf %611, %63 : vector<8x32xf32>
      %613 = arith.addf %609, %612 : vector<8x32xf32>
      %c7_357 = arith.constant 7 : index
      %c13_358 = arith.constant 13 : index
      %614 = memref.load %arg10[%c7_357, %c13_358] : memref<16x15xf32, #tpu.memory_space<smem>>
      %615 = vector.broadcast %614 : f32 to vector<8x32xf32>
      %616 = arith.mulf %615, %66 : vector<8x32xf32>
      %617 = arith.addf %613, %616 : vector<8x32xf32>
      %c7_359 = arith.constant 7 : index
      %c14_360 = arith.constant 14 : index
      %618 = memref.load %arg10[%c7_359, %c14_360] : memref<16x15xf32, #tpu.memory_space<smem>>
      %619 = vector.broadcast %618 : f32 to vector<8x32xf32>
      %620 = arith.mulf %619, %69 : vector<8x32xf32>
      %621 = arith.addf %617, %620 : vector<8x32xf32>
      %c7_361 = arith.constant 7 : index
      %622 = memref.load %arg11[%c7_361] : memref<16xf32, #tpu.memory_space<smem>>
      %623 = vector.broadcast %622 : f32 to vector<8x32xf32>
      %624 = arith.addf %621, %623 : vector<8x32xf32>
      %cst_362 = arith.constant 0.000000e+00 : f32
      %625 = vector.broadcast %cst_362 : f32 to vector<8x32xf32>
      %626 = arith.maximumf %624, %625 : vector<8x32xf32>
      %c7_363 = arith.constant 7 : index
      %c0_364 = arith.constant 0 : index
      %c0_365 = arith.constant 0 : index
      %627 = vector.load %arg12[%c7_363, %c0_364, %c0_365] : memref<16x32x32xf32, #tpu.memory_space<vmem>>, vector<1x32x32xf32>
      %628 = vector.shape_cast %627 : vector<1x32x32xf32> to vector<32x32xf32>
      %cst_366 = arith.constant dense<0.000000e+00> : vector<8x32xf32>
      %629 = tpu.matmul %626, %628, %cst_366 {dimension_numbers = #tpu.dot_dimension_numbers<[1], [0], [0], [1], [0, 0, 1, 1], [], []>} : vector<8x32xf32>, vector<32x32xf32>, vector<8x32xf32> -> vector<8x32xf32>
      %630 = arith.addf %560, %629 : vector<8x32xf32>
      %cst_367 = arith.constant 0.000000e+00 : f32
      %631 = vector.broadcast %cst_367 : f32 to vector<8x32xf32>
      %c8_368 = arith.constant 8 : index
      %c0_369 = arith.constant 0 : index
      %632 = memref.load %arg10[%c8_368, %c0_369] : memref<16x15xf32, #tpu.memory_space<smem>>
      %633 = vector.broadcast %632 : f32 to vector<8x32xf32>
      %634 = arith.mulf %633, %27 : vector<8x32xf32>
      %635 = arith.addf %631, %634 : vector<8x32xf32>
      %c8_370 = arith.constant 8 : index
      %c1_371 = arith.constant 1 : index
      %636 = memref.load %arg10[%c8_370, %c1_371] : memref<16x15xf32, #tpu.memory_space<smem>>
      %637 = vector.broadcast %636 : f32 to vector<8x32xf32>
      %638 = arith.mulf %637, %30 : vector<8x32xf32>
      %639 = arith.addf %635, %638 : vector<8x32xf32>
      %c8_372 = arith.constant 8 : index
      %c2_373 = arith.constant 2 : index
      %640 = memref.load %arg10[%c8_372, %c2_373] : memref<16x15xf32, #tpu.memory_space<smem>>
      %641 = vector.broadcast %640 : f32 to vector<8x32xf32>
      %642 = arith.mulf %641, %33 : vector<8x32xf32>
      %643 = arith.addf %639, %642 : vector<8x32xf32>
      %c8_374 = arith.constant 8 : index
      %c3_375 = arith.constant 3 : index
      %644 = memref.load %arg10[%c8_374, %c3_375] : memref<16x15xf32, #tpu.memory_space<smem>>
      %645 = vector.broadcast %644 : f32 to vector<8x32xf32>
      %646 = arith.mulf %645, %36 : vector<8x32xf32>
      %647 = arith.addf %643, %646 : vector<8x32xf32>
      %c8_376 = arith.constant 8 : index
      %c4_377 = arith.constant 4 : index
      %648 = memref.load %arg10[%c8_376, %c4_377] : memref<16x15xf32, #tpu.memory_space<smem>>
      %649 = vector.broadcast %648 : f32 to vector<8x32xf32>
      %650 = arith.mulf %649, %39 : vector<8x32xf32>
      %651 = arith.addf %647, %650 : vector<8x32xf32>
      %c8_378 = arith.constant 8 : index
      %c5_379 = arith.constant 5 : index
      %652 = memref.load %arg10[%c8_378, %c5_379] : memref<16x15xf32, #tpu.memory_space<smem>>
      %653 = vector.broadcast %652 : f32 to vector<8x32xf32>
      %654 = arith.mulf %653, %42 : vector<8x32xf32>
      %655 = arith.addf %651, %654 : vector<8x32xf32>
      %c8_380 = arith.constant 8 : index
      %c6_381 = arith.constant 6 : index
      %656 = memref.load %arg10[%c8_380, %c6_381] : memref<16x15xf32, #tpu.memory_space<smem>>
      %657 = vector.broadcast %656 : f32 to vector<8x32xf32>
      %658 = arith.mulf %657, %45 : vector<8x32xf32>
      %659 = arith.addf %655, %658 : vector<8x32xf32>
      %c8_382 = arith.constant 8 : index
      %c7_383 = arith.constant 7 : index
      %660 = memref.load %arg10[%c8_382, %c7_383] : memref<16x15xf32, #tpu.memory_space<smem>>
      %661 = vector.broadcast %660 : f32 to vector<8x32xf32>
      %662 = arith.mulf %661, %48 : vector<8x32xf32>
      %663 = arith.addf %659, %662 : vector<8x32xf32>
      %c8_384 = arith.constant 8 : index
      %c8_385 = arith.constant 8 : index
      %664 = memref.load %arg10[%c8_384, %c8_385] : memref<16x15xf32, #tpu.memory_space<smem>>
      %665 = vector.broadcast %664 : f32 to vector<8x32xf32>
      %666 = arith.mulf %665, %51 : vector<8x32xf32>
      %667 = arith.addf %663, %666 : vector<8x32xf32>
      %c8_386 = arith.constant 8 : index
      %c9_387 = arith.constant 9 : index
      %668 = memref.load %arg10[%c8_386, %c9_387] : memref<16x15xf32, #tpu.memory_space<smem>>
      %669 = vector.broadcast %668 : f32 to vector<8x32xf32>
      %670 = arith.mulf %669, %54 : vector<8x32xf32>
      %671 = arith.addf %667, %670 : vector<8x32xf32>
      %c8_388 = arith.constant 8 : index
      %c10_389 = arith.constant 10 : index
      %672 = memref.load %arg10[%c8_388, %c10_389] : memref<16x15xf32, #tpu.memory_space<smem>>
      %673 = vector.broadcast %672 : f32 to vector<8x32xf32>
      %674 = arith.mulf %673, %57 : vector<8x32xf32>
      %675 = arith.addf %671, %674 : vector<8x32xf32>
      %c8_390 = arith.constant 8 : index
      %c11_391 = arith.constant 11 : index
      %676 = memref.load %arg10[%c8_390, %c11_391] : memref<16x15xf32, #tpu.memory_space<smem>>
      %677 = vector.broadcast %676 : f32 to vector<8x32xf32>
      %678 = arith.mulf %677, %60 : vector<8x32xf32>
      %679 = arith.addf %675, %678 : vector<8x32xf32>
      %c8_392 = arith.constant 8 : index
      %c12_393 = arith.constant 12 : index
      %680 = memref.load %arg10[%c8_392, %c12_393] : memref<16x15xf32, #tpu.memory_space<smem>>
      %681 = vector.broadcast %680 : f32 to vector<8x32xf32>
      %682 = arith.mulf %681, %63 : vector<8x32xf32>
      %683 = arith.addf %679, %682 : vector<8x32xf32>
      %c8_394 = arith.constant 8 : index
      %c13_395 = arith.constant 13 : index
      %684 = memref.load %arg10[%c8_394, %c13_395] : memref<16x15xf32, #tpu.memory_space<smem>>
      %685 = vector.broadcast %684 : f32 to vector<8x32xf32>
      %686 = arith.mulf %685, %66 : vector<8x32xf32>
      %687 = arith.addf %683, %686 : vector<8x32xf32>
      %c8_396 = arith.constant 8 : index
      %c14_397 = arith.constant 14 : index
      %688 = memref.load %arg10[%c8_396, %c14_397] : memref<16x15xf32, #tpu.memory_space<smem>>
      %689 = vector.broadcast %688 : f32 to vector<8x32xf32>
      %690 = arith.mulf %689, %69 : vector<8x32xf32>
      %691 = arith.addf %687, %690 : vector<8x32xf32>
      %c8_398 = arith.constant 8 : index
      %692 = memref.load %arg11[%c8_398] : memref<16xf32, #tpu.memory_space<smem>>
      %693 = vector.broadcast %692 : f32 to vector<8x32xf32>
      %694 = arith.addf %691, %693 : vector<8x32xf32>
      %cst_399 = arith.constant 0.000000e+00 : f32
      %695 = vector.broadcast %cst_399 : f32 to vector<8x32xf32>
      %696 = arith.maximumf %694, %695 : vector<8x32xf32>
      %c8_400 = arith.constant 8 : index
      %c0_401 = arith.constant 0 : index
      %c0_402 = arith.constant 0 : index
      %697 = vector.load %arg12[%c8_400, %c0_401, %c0_402] : memref<16x32x32xf32, #tpu.memory_space<vmem>>, vector<1x32x32xf32>
      %698 = vector.shape_cast %697 : vector<1x32x32xf32> to vector<32x32xf32>
      %cst_403 = arith.constant dense<0.000000e+00> : vector<8x32xf32>
      %699 = tpu.matmul %696, %698, %cst_403 {dimension_numbers = #tpu.dot_dimension_numbers<[1], [0], [0], [1], [0, 0, 1, 1], [], []>} : vector<8x32xf32>, vector<32x32xf32>, vector<8x32xf32> -> vector<8x32xf32>
      %700 = arith.addf %630, %699 : vector<8x32xf32>
      %cst_404 = arith.constant 0.000000e+00 : f32
      %701 = vector.broadcast %cst_404 : f32 to vector<8x32xf32>
      %c9_405 = arith.constant 9 : index
      %c0_406 = arith.constant 0 : index
      %702 = memref.load %arg10[%c9_405, %c0_406] : memref<16x15xf32, #tpu.memory_space<smem>>
      %703 = vector.broadcast %702 : f32 to vector<8x32xf32>
      %704 = arith.mulf %703, %27 : vector<8x32xf32>
      %705 = arith.addf %701, %704 : vector<8x32xf32>
      %c9_407 = arith.constant 9 : index
      %c1_408 = arith.constant 1 : index
      %706 = memref.load %arg10[%c9_407, %c1_408] : memref<16x15xf32, #tpu.memory_space<smem>>
      %707 = vector.broadcast %706 : f32 to vector<8x32xf32>
      %708 = arith.mulf %707, %30 : vector<8x32xf32>
      %709 = arith.addf %705, %708 : vector<8x32xf32>
      %c9_409 = arith.constant 9 : index
      %c2_410 = arith.constant 2 : index
      %710 = memref.load %arg10[%c9_409, %c2_410] : memref<16x15xf32, #tpu.memory_space<smem>>
      %711 = vector.broadcast %710 : f32 to vector<8x32xf32>
      %712 = arith.mulf %711, %33 : vector<8x32xf32>
      %713 = arith.addf %709, %712 : vector<8x32xf32>
      %c9_411 = arith.constant 9 : index
      %c3_412 = arith.constant 3 : index
      %714 = memref.load %arg10[%c9_411, %c3_412] : memref<16x15xf32, #tpu.memory_space<smem>>
      %715 = vector.broadcast %714 : f32 to vector<8x32xf32>
      %716 = arith.mulf %715, %36 : vector<8x32xf32>
      %717 = arith.addf %713, %716 : vector<8x32xf32>
      %c9_413 = arith.constant 9 : index
      %c4_414 = arith.constant 4 : index
      %718 = memref.load %arg10[%c9_413, %c4_414] : memref<16x15xf32, #tpu.memory_space<smem>>
      %719 = vector.broadcast %718 : f32 to vector<8x32xf32>
      %720 = arith.mulf %719, %39 : vector<8x32xf32>
      %721 = arith.addf %717, %720 : vector<8x32xf32>
      %c9_415 = arith.constant 9 : index
      %c5_416 = arith.constant 5 : index
      %722 = memref.load %arg10[%c9_415, %c5_416] : memref<16x15xf32, #tpu.memory_space<smem>>
      %723 = vector.broadcast %722 : f32 to vector<8x32xf32>
      %724 = arith.mulf %723, %42 : vector<8x32xf32>
      %725 = arith.addf %721, %724 : vector<8x32xf32>
      %c9_417 = arith.constant 9 : index
      %c6_418 = arith.constant 6 : index
      %726 = memref.load %arg10[%c9_417, %c6_418] : memref<16x15xf32, #tpu.memory_space<smem>>
      %727 = vector.broadcast %726 : f32 to vector<8x32xf32>
      %728 = arith.mulf %727, %45 : vector<8x32xf32>
      %729 = arith.addf %725, %728 : vector<8x32xf32>
      %c9_419 = arith.constant 9 : index
      %c7_420 = arith.constant 7 : index
      %730 = memref.load %arg10[%c9_419, %c7_420] : memref<16x15xf32, #tpu.memory_space<smem>>
      %731 = vector.broadcast %730 : f32 to vector<8x32xf32>
      %732 = arith.mulf %731, %48 : vector<8x32xf32>
      %733 = arith.addf %729, %732 : vector<8x32xf32>
      %c9_421 = arith.constant 9 : index
      %c8_422 = arith.constant 8 : index
      %734 = memref.load %arg10[%c9_421, %c8_422] : memref<16x15xf32, #tpu.memory_space<smem>>
      %735 = vector.broadcast %734 : f32 to vector<8x32xf32>
      %736 = arith.mulf %735, %51 : vector<8x32xf32>
      %737 = arith.addf %733, %736 : vector<8x32xf32>
      %c9_423 = arith.constant 9 : index
      %c9_424 = arith.constant 9 : index
      %738 = memref.load %arg10[%c9_423, %c9_424] : memref<16x15xf32, #tpu.memory_space<smem>>
      %739 = vector.broadcast %738 : f32 to vector<8x32xf32>
      %740 = arith.mulf %739, %54 : vector<8x32xf32>
      %741 = arith.addf %737, %740 : vector<8x32xf32>
      %c9_425 = arith.constant 9 : index
      %c10_426 = arith.constant 10 : index
      %742 = memref.load %arg10[%c9_425, %c10_426] : memref<16x15xf32, #tpu.memory_space<smem>>
      %743 = vector.broadcast %742 : f32 to vector<8x32xf32>
      %744 = arith.mulf %743, %57 : vector<8x32xf32>
      %745 = arith.addf %741, %744 : vector<8x32xf32>
      %c9_427 = arith.constant 9 : index
      %c11_428 = arith.constant 11 : index
      %746 = memref.load %arg10[%c9_427, %c11_428] : memref<16x15xf32, #tpu.memory_space<smem>>
      %747 = vector.broadcast %746 : f32 to vector<8x32xf32>
      %748 = arith.mulf %747, %60 : vector<8x32xf32>
      %749 = arith.addf %745, %748 : vector<8x32xf32>
      %c9_429 = arith.constant 9 : index
      %c12_430 = arith.constant 12 : index
      %750 = memref.load %arg10[%c9_429, %c12_430] : memref<16x15xf32, #tpu.memory_space<smem>>
      %751 = vector.broadcast %750 : f32 to vector<8x32xf32>
      %752 = arith.mulf %751, %63 : vector<8x32xf32>
      %753 = arith.addf %749, %752 : vector<8x32xf32>
      %c9_431 = arith.constant 9 : index
      %c13_432 = arith.constant 13 : index
      %754 = memref.load %arg10[%c9_431, %c13_432] : memref<16x15xf32, #tpu.memory_space<smem>>
      %755 = vector.broadcast %754 : f32 to vector<8x32xf32>
      %756 = arith.mulf %755, %66 : vector<8x32xf32>
      %757 = arith.addf %753, %756 : vector<8x32xf32>
      %c9_433 = arith.constant 9 : index
      %c14_434 = arith.constant 14 : index
      %758 = memref.load %arg10[%c9_433, %c14_434] : memref<16x15xf32, #tpu.memory_space<smem>>
      %759 = vector.broadcast %758 : f32 to vector<8x32xf32>
      %760 = arith.mulf %759, %69 : vector<8x32xf32>
      %761 = arith.addf %757, %760 : vector<8x32xf32>
      %c9_435 = arith.constant 9 : index
      %762 = memref.load %arg11[%c9_435] : memref<16xf32, #tpu.memory_space<smem>>
      %763 = vector.broadcast %762 : f32 to vector<8x32xf32>
      %764 = arith.addf %761, %763 : vector<8x32xf32>
      %cst_436 = arith.constant 0.000000e+00 : f32
      %765 = vector.broadcast %cst_436 : f32 to vector<8x32xf32>
      %766 = arith.maximumf %764, %765 : vector<8x32xf32>
      %c9_437 = arith.constant 9 : index
      %c0_438 = arith.constant 0 : index
      %c0_439 = arith.constant 0 : index
      %767 = vector.load %arg12[%c9_437, %c0_438, %c0_439] : memref<16x32x32xf32, #tpu.memory_space<vmem>>, vector<1x32x32xf32>
      %768 = vector.shape_cast %767 : vector<1x32x32xf32> to vector<32x32xf32>
      %cst_440 = arith.constant dense<0.000000e+00> : vector<8x32xf32>
      %769 = tpu.matmul %766, %768, %cst_440 {dimension_numbers = #tpu.dot_dimension_numbers<[1], [0], [0], [1], [0, 0, 1, 1], [], []>} : vector<8x32xf32>, vector<32x32xf32>, vector<8x32xf32> -> vector<8x32xf32>
      %770 = arith.addf %700, %769 : vector<8x32xf32>
      %cst_441 = arith.constant 0.000000e+00 : f32
      %771 = vector.broadcast %cst_441 : f32 to vector<8x32xf32>
      %c10_442 = arith.constant 10 : index
      %c0_443 = arith.constant 0 : index
      %772 = memref.load %arg10[%c10_442, %c0_443] : memref<16x15xf32, #tpu.memory_space<smem>>
      %773 = vector.broadcast %772 : f32 to vector<8x32xf32>
      %774 = arith.mulf %773, %27 : vector<8x32xf32>
      %775 = arith.addf %771, %774 : vector<8x32xf32>
      %c10_444 = arith.constant 10 : index
      %c1_445 = arith.constant 1 : index
      %776 = memref.load %arg10[%c10_444, %c1_445] : memref<16x15xf32, #tpu.memory_space<smem>>
      %777 = vector.broadcast %776 : f32 to vector<8x32xf32>
      %778 = arith.mulf %777, %30 : vector<8x32xf32>
      %779 = arith.addf %775, %778 : vector<8x32xf32>
      %c10_446 = arith.constant 10 : index
      %c2_447 = arith.constant 2 : index
      %780 = memref.load %arg10[%c10_446, %c2_447] : memref<16x15xf32, #tpu.memory_space<smem>>
      %781 = vector.broadcast %780 : f32 to vector<8x32xf32>
      %782 = arith.mulf %781, %33 : vector<8x32xf32>
      %783 = arith.addf %779, %782 : vector<8x32xf32>
      %c10_448 = arith.constant 10 : index
      %c3_449 = arith.constant 3 : index
      %784 = memref.load %arg10[%c10_448, %c3_449] : memref<16x15xf32, #tpu.memory_space<smem>>
      %785 = vector.broadcast %784 : f32 to vector<8x32xf32>
      %786 = arith.mulf %785, %36 : vector<8x32xf32>
      %787 = arith.addf %783, %786 : vector<8x32xf32>
      %c10_450 = arith.constant 10 : index
      %c4_451 = arith.constant 4 : index
      %788 = memref.load %arg10[%c10_450, %c4_451] : memref<16x15xf32, #tpu.memory_space<smem>>
      %789 = vector.broadcast %788 : f32 to vector<8x32xf32>
      %790 = arith.mulf %789, %39 : vector<8x32xf32>
      %791 = arith.addf %787, %790 : vector<8x32xf32>
      %c10_452 = arith.constant 10 : index
      %c5_453 = arith.constant 5 : index
      %792 = memref.load %arg10[%c10_452, %c5_453] : memref<16x15xf32, #tpu.memory_space<smem>>
      %793 = vector.broadcast %792 : f32 to vector<8x32xf32>
      %794 = arith.mulf %793, %42 : vector<8x32xf32>
      %795 = arith.addf %791, %794 : vector<8x32xf32>
      %c10_454 = arith.constant 10 : index
      %c6_455 = arith.constant 6 : index
      %796 = memref.load %arg10[%c10_454, %c6_455] : memref<16x15xf32, #tpu.memory_space<smem>>
      %797 = vector.broadcast %796 : f32 to vector<8x32xf32>
      %798 = arith.mulf %797, %45 : vector<8x32xf32>
      %799 = arith.addf %795, %798 : vector<8x32xf32>
      %c10_456 = arith.constant 10 : index
      %c7_457 = arith.constant 7 : index
      %800 = memref.load %arg10[%c10_456, %c7_457] : memref<16x15xf32, #tpu.memory_space<smem>>
      %801 = vector.broadcast %800 : f32 to vector<8x32xf32>
      %802 = arith.mulf %801, %48 : vector<8x32xf32>
      %803 = arith.addf %799, %802 : vector<8x32xf32>
      %c10_458 = arith.constant 10 : index
      %c8_459 = arith.constant 8 : index
      %804 = memref.load %arg10[%c10_458, %c8_459] : memref<16x15xf32, #tpu.memory_space<smem>>
      %805 = vector.broadcast %804 : f32 to vector<8x32xf32>
      %806 = arith.mulf %805, %51 : vector<8x32xf32>
      %807 = arith.addf %803, %806 : vector<8x32xf32>
      %c10_460 = arith.constant 10 : index
      %c9_461 = arith.constant 9 : index
      %808 = memref.load %arg10[%c10_460, %c9_461] : memref<16x15xf32, #tpu.memory_space<smem>>
      %809 = vector.broadcast %808 : f32 to vector<8x32xf32>
      %810 = arith.mulf %809, %54 : vector<8x32xf32>
      %811 = arith.addf %807, %810 : vector<8x32xf32>
      %c10_462 = arith.constant 10 : index
      %c10_463 = arith.constant 10 : index
      %812 = memref.load %arg10[%c10_462, %c10_463] : memref<16x15xf32, #tpu.memory_space<smem>>
      %813 = vector.broadcast %812 : f32 to vector<8x32xf32>
      %814 = arith.mulf %813, %57 : vector<8x32xf32>
      %815 = arith.addf %811, %814 : vector<8x32xf32>
      %c10_464 = arith.constant 10 : index
      %c11_465 = arith.constant 11 : index
      %816 = memref.load %arg10[%c10_464, %c11_465] : memref<16x15xf32, #tpu.memory_space<smem>>
      %817 = vector.broadcast %816 : f32 to vector<8x32xf32>
      %818 = arith.mulf %817, %60 : vector<8x32xf32>
      %819 = arith.addf %815, %818 : vector<8x32xf32>
      %c10_466 = arith.constant 10 : index
      %c12_467 = arith.constant 12 : index
      %820 = memref.load %arg10[%c10_466, %c12_467] : memref<16x15xf32, #tpu.memory_space<smem>>
      %821 = vector.broadcast %820 : f32 to vector<8x32xf32>
      %822 = arith.mulf %821, %63 : vector<8x32xf32>
      %823 = arith.addf %819, %822 : vector<8x32xf32>
      %c10_468 = arith.constant 10 : index
      %c13_469 = arith.constant 13 : index
      %824 = memref.load %arg10[%c10_468, %c13_469] : memref<16x15xf32, #tpu.memory_space<smem>>
      %825 = vector.broadcast %824 : f32 to vector<8x32xf32>
      %826 = arith.mulf %825, %66 : vector<8x32xf32>
      %827 = arith.addf %823, %826 : vector<8x32xf32>
      %c10_470 = arith.constant 10 : index
      %c14_471 = arith.constant 14 : index
      %828 = memref.load %arg10[%c10_470, %c14_471] : memref<16x15xf32, #tpu.memory_space<smem>>
      %829 = vector.broadcast %828 : f32 to vector<8x32xf32>
      %830 = arith.mulf %829, %69 : vector<8x32xf32>
      %831 = arith.addf %827, %830 : vector<8x32xf32>
      %c10_472 = arith.constant 10 : index
      %832 = memref.load %arg11[%c10_472] : memref<16xf32, #tpu.memory_space<smem>>
      %833 = vector.broadcast %832 : f32 to vector<8x32xf32>
      %834 = arith.addf %831, %833 : vector<8x32xf32>
      %cst_473 = arith.constant 0.000000e+00 : f32
      %835 = vector.broadcast %cst_473 : f32 to vector<8x32xf32>
      %836 = arith.maximumf %834, %835 : vector<8x32xf32>
      %c10_474 = arith.constant 10 : index
      %c0_475 = arith.constant 0 : index
      %c0_476 = arith.constant 0 : index
      %837 = vector.load %arg12[%c10_474, %c0_475, %c0_476] : memref<16x32x32xf32, #tpu.memory_space<vmem>>, vector<1x32x32xf32>
      %838 = vector.shape_cast %837 : vector<1x32x32xf32> to vector<32x32xf32>
      %cst_477 = arith.constant dense<0.000000e+00> : vector<8x32xf32>
      %839 = tpu.matmul %836, %838, %cst_477 {dimension_numbers = #tpu.dot_dimension_numbers<[1], [0], [0], [1], [0, 0, 1, 1], [], []>} : vector<8x32xf32>, vector<32x32xf32>, vector<8x32xf32> -> vector<8x32xf32>
      %840 = arith.addf %770, %839 : vector<8x32xf32>
      %cst_478 = arith.constant 0.000000e+00 : f32
      %841 = vector.broadcast %cst_478 : f32 to vector<8x32xf32>
      %c11_479 = arith.constant 11 : index
      %c0_480 = arith.constant 0 : index
      %842 = memref.load %arg10[%c11_479, %c0_480] : memref<16x15xf32, #tpu.memory_space<smem>>
      %843 = vector.broadcast %842 : f32 to vector<8x32xf32>
      %844 = arith.mulf %843, %27 : vector<8x32xf32>
      %845 = arith.addf %841, %844 : vector<8x32xf32>
      %c11_481 = arith.constant 11 : index
      %c1_482 = arith.constant 1 : index
      %846 = memref.load %arg10[%c11_481, %c1_482] : memref<16x15xf32, #tpu.memory_space<smem>>
      %847 = vector.broadcast %846 : f32 to vector<8x32xf32>
      %848 = arith.mulf %847, %30 : vector<8x32xf32>
      %849 = arith.addf %845, %848 : vector<8x32xf32>
      %c11_483 = arith.constant 11 : index
      %c2_484 = arith.constant 2 : index
      %850 = memref.load %arg10[%c11_483, %c2_484] : memref<16x15xf32, #tpu.memory_space<smem>>
      %851 = vector.broadcast %850 : f32 to vector<8x32xf32>
      %852 = arith.mulf %851, %33 : vector<8x32xf32>
      %853 = arith.addf %849, %852 : vector<8x32xf32>
      %c11_485 = arith.constant 11 : index
      %c3_486 = arith.constant 3 : index
      %854 = memref.load %arg10[%c11_485, %c3_486] : memref<16x15xf32, #tpu.memory_space<smem>>
      %855 = vector.broadcast %854 : f32 to vector<8x32xf32>
      %856 = arith.mulf %855, %36 : vector<8x32xf32>
      %857 = arith.addf %853, %856 : vector<8x32xf32>
      %c11_487 = arith.constant 11 : index
      %c4_488 = arith.constant 4 : index
      %858 = memref.load %arg10[%c11_487, %c4_488] : memref<16x15xf32, #tpu.memory_space<smem>>
      %859 = vector.broadcast %858 : f32 to vector<8x32xf32>
      %860 = arith.mulf %859, %39 : vector<8x32xf32>
      %861 = arith.addf %857, %860 : vector<8x32xf32>
      %c11_489 = arith.constant 11 : index
      %c5_490 = arith.constant 5 : index
      %862 = memref.load %arg10[%c11_489, %c5_490] : memref<16x15xf32, #tpu.memory_space<smem>>
      %863 = vector.broadcast %862 : f32 to vector<8x32xf32>
      %864 = arith.mulf %863, %42 : vector<8x32xf32>
      %865 = arith.addf %861, %864 : vector<8x32xf32>
      %c11_491 = arith.constant 11 : index
      %c6_492 = arith.constant 6 : index
      %866 = memref.load %arg10[%c11_491, %c6_492] : memref<16x15xf32, #tpu.memory_space<smem>>
      %867 = vector.broadcast %866 : f32 to vector<8x32xf32>
      %868 = arith.mulf %867, %45 : vector<8x32xf32>
      %869 = arith.addf %865, %868 : vector<8x32xf32>
      %c11_493 = arith.constant 11 : index
      %c7_494 = arith.constant 7 : index
      %870 = memref.load %arg10[%c11_493, %c7_494] : memref<16x15xf32, #tpu.memory_space<smem>>
      %871 = vector.broadcast %870 : f32 to vector<8x32xf32>
      %872 = arith.mulf %871, %48 : vector<8x32xf32>
      %873 = arith.addf %869, %872 : vector<8x32xf32>
      %c11_495 = arith.constant 11 : index
      %c8_496 = arith.constant 8 : index
      %874 = memref.load %arg10[%c11_495, %c8_496] : memref<16x15xf32, #tpu.memory_space<smem>>
      %875 = vector.broadcast %874 : f32 to vector<8x32xf32>
      %876 = arith.mulf %875, %51 : vector<8x32xf32>
      %877 = arith.addf %873, %876 : vector<8x32xf32>
      %c11_497 = arith.constant 11 : index
      %c9_498 = arith.constant 9 : index
      %878 = memref.load %arg10[%c11_497, %c9_498] : memref<16x15xf32, #tpu.memory_space<smem>>
      %879 = vector.broadcast %878 : f32 to vector<8x32xf32>
      %880 = arith.mulf %879, %54 : vector<8x32xf32>
      %881 = arith.addf %877, %880 : vector<8x32xf32>
      %c11_499 = arith.constant 11 : index
      %c10_500 = arith.constant 10 : index
      %882 = memref.load %arg10[%c11_499, %c10_500] : memref<16x15xf32, #tpu.memory_space<smem>>
      %883 = vector.broadcast %882 : f32 to vector<8x32xf32>
      %884 = arith.mulf %883, %57 : vector<8x32xf32>
      %885 = arith.addf %881, %884 : vector<8x32xf32>
      %c11_501 = arith.constant 11 : index
      %c11_502 = arith.constant 11 : index
      %886 = memref.load %arg10[%c11_501, %c11_502] : memref<16x15xf32, #tpu.memory_space<smem>>
      %887 = vector.broadcast %886 : f32 to vector<8x32xf32>
      %888 = arith.mulf %887, %60 : vector<8x32xf32>
      %889 = arith.addf %885, %888 : vector<8x32xf32>
      %c11_503 = arith.constant 11 : index
      %c12_504 = arith.constant 12 : index
      %890 = memref.load %arg10[%c11_503, %c12_504] : memref<16x15xf32, #tpu.memory_space<smem>>
      %891 = vector.broadcast %890 : f32 to vector<8x32xf32>
      %892 = arith.mulf %891, %63 : vector<8x32xf32>
      %893 = arith.addf %889, %892 : vector<8x32xf32>
      %c11_505 = arith.constant 11 : index
      %c13_506 = arith.constant 13 : index
      %894 = memref.load %arg10[%c11_505, %c13_506] : memref<16x15xf32, #tpu.memory_space<smem>>
      %895 = vector.broadcast %894 : f32 to vector<8x32xf32>
      %896 = arith.mulf %895, %66 : vector<8x32xf32>
      %897 = arith.addf %893, %896 : vector<8x32xf32>
      %c11_507 = arith.constant 11 : index
      %c14_508 = arith.constant 14 : index
      %898 = memref.load %arg10[%c11_507, %c14_508] : memref<16x15xf32, #tpu.memory_space<smem>>
      %899 = vector.broadcast %898 : f32 to vector<8x32xf32>
      %900 = arith.mulf %899, %69 : vector<8x32xf32>
      %901 = arith.addf %897, %900 : vector<8x32xf32>
      %c11_509 = arith.constant 11 : index
      %902 = memref.load %arg11[%c11_509] : memref<16xf32, #tpu.memory_space<smem>>
      %903 = vector.broadcast %902 : f32 to vector<8x32xf32>
      %904 = arith.addf %901, %903 : vector<8x32xf32>
      %cst_510 = arith.constant 0.000000e+00 : f32
      %905 = vector.broadcast %cst_510 : f32 to vector<8x32xf32>
      %906 = arith.maximumf %904, %905 : vector<8x32xf32>
      %c11_511 = arith.constant 11 : index
      %c0_512 = arith.constant 0 : index
      %c0_513 = arith.constant 0 : index
      %907 = vector.load %arg12[%c11_511, %c0_512, %c0_513] : memref<16x32x32xf32, #tpu.memory_space<vmem>>, vector<1x32x32xf32>
      %908 = vector.shape_cast %907 : vector<1x32x32xf32> to vector<32x32xf32>
      %cst_514 = arith.constant dense<0.000000e+00> : vector<8x32xf32>
      %909 = tpu.matmul %906, %908, %cst_514 {dimension_numbers = #tpu.dot_dimension_numbers<[1], [0], [0], [1], [0, 0, 1, 1], [], []>} : vector<8x32xf32>, vector<32x32xf32>, vector<8x32xf32> -> vector<8x32xf32>
      %910 = arith.addf %840, %909 : vector<8x32xf32>
      %cst_515 = arith.constant 0.000000e+00 : f32
      %911 = vector.broadcast %cst_515 : f32 to vector<8x32xf32>
      %c12_516 = arith.constant 12 : index
      %c0_517 = arith.constant 0 : index
      %912 = memref.load %arg10[%c12_516, %c0_517] : memref<16x15xf32, #tpu.memory_space<smem>>
      %913 = vector.broadcast %912 : f32 to vector<8x32xf32>
      %914 = arith.mulf %913, %27 : vector<8x32xf32>
      %915 = arith.addf %911, %914 : vector<8x32xf32>
      %c12_518 = arith.constant 12 : index
      %c1_519 = arith.constant 1 : index
      %916 = memref.load %arg10[%c12_518, %c1_519] : memref<16x15xf32, #tpu.memory_space<smem>>
      %917 = vector.broadcast %916 : f32 to vector<8x32xf32>
      %918 = arith.mulf %917, %30 : vector<8x32xf32>
      %919 = arith.addf %915, %918 : vector<8x32xf32>
      %c12_520 = arith.constant 12 : index
      %c2_521 = arith.constant 2 : index
      %920 = memref.load %arg10[%c12_520, %c2_521] : memref<16x15xf32, #tpu.memory_space<smem>>
      %921 = vector.broadcast %920 : f32 to vector<8x32xf32>
      %922 = arith.mulf %921, %33 : vector<8x32xf32>
      %923 = arith.addf %919, %922 : vector<8x32xf32>
      %c12_522 = arith.constant 12 : index
      %c3_523 = arith.constant 3 : index
      %924 = memref.load %arg10[%c12_522, %c3_523] : memref<16x15xf32, #tpu.memory_space<smem>>
      %925 = vector.broadcast %924 : f32 to vector<8x32xf32>
      %926 = arith.mulf %925, %36 : vector<8x32xf32>
      %927 = arith.addf %923, %926 : vector<8x32xf32>
      %c12_524 = arith.constant 12 : index
      %c4_525 = arith.constant 4 : index
      %928 = memref.load %arg10[%c12_524, %c4_525] : memref<16x15xf32, #tpu.memory_space<smem>>
      %929 = vector.broadcast %928 : f32 to vector<8x32xf32>
      %930 = arith.mulf %929, %39 : vector<8x32xf32>
      %931 = arith.addf %927, %930 : vector<8x32xf32>
      %c12_526 = arith.constant 12 : index
      %c5_527 = arith.constant 5 : index
      %932 = memref.load %arg10[%c12_526, %c5_527] : memref<16x15xf32, #tpu.memory_space<smem>>
      %933 = vector.broadcast %932 : f32 to vector<8x32xf32>
      %934 = arith.mulf %933, %42 : vector<8x32xf32>
      %935 = arith.addf %931, %934 : vector<8x32xf32>
      %c12_528 = arith.constant 12 : index
      %c6_529 = arith.constant 6 : index
      %936 = memref.load %arg10[%c12_528, %c6_529] : memref<16x15xf32, #tpu.memory_space<smem>>
      %937 = vector.broadcast %936 : f32 to vector<8x32xf32>
      %938 = arith.mulf %937, %45 : vector<8x32xf32>
      %939 = arith.addf %935, %938 : vector<8x32xf32>
      %c12_530 = arith.constant 12 : index
      %c7_531 = arith.constant 7 : index
      %940 = memref.load %arg10[%c12_530, %c7_531] : memref<16x15xf32, #tpu.memory_space<smem>>
      %941 = vector.broadcast %940 : f32 to vector<8x32xf32>
      %942 = arith.mulf %941, %48 : vector<8x32xf32>
      %943 = arith.addf %939, %942 : vector<8x32xf32>
      %c12_532 = arith.constant 12 : index
      %c8_533 = arith.constant 8 : index
      %944 = memref.load %arg10[%c12_532, %c8_533] : memref<16x15xf32, #tpu.memory_space<smem>>
      %945 = vector.broadcast %944 : f32 to vector<8x32xf32>
      %946 = arith.mulf %945, %51 : vector<8x32xf32>
      %947 = arith.addf %943, %946 : vector<8x32xf32>
      %c12_534 = arith.constant 12 : index
      %c9_535 = arith.constant 9 : index
      %948 = memref.load %arg10[%c12_534, %c9_535] : memref<16x15xf32, #tpu.memory_space<smem>>
      %949 = vector.broadcast %948 : f32 to vector<8x32xf32>
      %950 = arith.mulf %949, %54 : vector<8x32xf32>
      %951 = arith.addf %947, %950 : vector<8x32xf32>
      %c12_536 = arith.constant 12 : index
      %c10_537 = arith.constant 10 : index
      %952 = memref.load %arg10[%c12_536, %c10_537] : memref<16x15xf32, #tpu.memory_space<smem>>
      %953 = vector.broadcast %952 : f32 to vector<8x32xf32>
      %954 = arith.mulf %953, %57 : vector<8x32xf32>
      %955 = arith.addf %951, %954 : vector<8x32xf32>
      %c12_538 = arith.constant 12 : index
      %c11_539 = arith.constant 11 : index
      %956 = memref.load %arg10[%c12_538, %c11_539] : memref<16x15xf32, #tpu.memory_space<smem>>
      %957 = vector.broadcast %956 : f32 to vector<8x32xf32>
      %958 = arith.mulf %957, %60 : vector<8x32xf32>
      %959 = arith.addf %955, %958 : vector<8x32xf32>
      %c12_540 = arith.constant 12 : index
      %c12_541 = arith.constant 12 : index
      %960 = memref.load %arg10[%c12_540, %c12_541] : memref<16x15xf32, #tpu.memory_space<smem>>
      %961 = vector.broadcast %960 : f32 to vector<8x32xf32>
      %962 = arith.mulf %961, %63 : vector<8x32xf32>
      %963 = arith.addf %959, %962 : vector<8x32xf32>
      %c12_542 = arith.constant 12 : index
      %c13_543 = arith.constant 13 : index
      %964 = memref.load %arg10[%c12_542, %c13_543] : memref<16x15xf32, #tpu.memory_space<smem>>
      %965 = vector.broadcast %964 : f32 to vector<8x32xf32>
      %966 = arith.mulf %965, %66 : vector<8x32xf32>
      %967 = arith.addf %963, %966 : vector<8x32xf32>
      %c12_544 = arith.constant 12 : index
      %c14_545 = arith.constant 14 : index
      %968 = memref.load %arg10[%c12_544, %c14_545] : memref<16x15xf32, #tpu.memory_space<smem>>
      %969 = vector.broadcast %968 : f32 to vector<8x32xf32>
      %970 = arith.mulf %969, %69 : vector<8x32xf32>
      %971 = arith.addf %967, %970 : vector<8x32xf32>
      %c12_546 = arith.constant 12 : index
      %972 = memref.load %arg11[%c12_546] : memref<16xf32, #tpu.memory_space<smem>>
      %973 = vector.broadcast %972 : f32 to vector<8x32xf32>
      %974 = arith.addf %971, %973 : vector<8x32xf32>
      %cst_547 = arith.constant 0.000000e+00 : f32
      %975 = vector.broadcast %cst_547 : f32 to vector<8x32xf32>
      %976 = arith.maximumf %974, %975 : vector<8x32xf32>
      %c12_548 = arith.constant 12 : index
      %c0_549 = arith.constant 0 : index
      %c0_550 = arith.constant 0 : index
      %977 = vector.load %arg12[%c12_548, %c0_549, %c0_550] : memref<16x32x32xf32, #tpu.memory_space<vmem>>, vector<1x32x32xf32>
      %978 = vector.shape_cast %977 : vector<1x32x32xf32> to vector<32x32xf32>
      %cst_551 = arith.constant dense<0.000000e+00> : vector<8x32xf32>
      %979 = tpu.matmul %976, %978, %cst_551 {dimension_numbers = #tpu.dot_dimension_numbers<[1], [0], [0], [1], [0, 0, 1, 1], [], []>} : vector<8x32xf32>, vector<32x32xf32>, vector<8x32xf32> -> vector<8x32xf32>
      %980 = arith.addf %910, %979 : vector<8x32xf32>
      %cst_552 = arith.constant 0.000000e+00 : f32
      %981 = vector.broadcast %cst_552 : f32 to vector<8x32xf32>
      %c13_553 = arith.constant 13 : index
      %c0_554 = arith.constant 0 : index
      %982 = memref.load %arg10[%c13_553, %c0_554] : memref<16x15xf32, #tpu.memory_space<smem>>
      %983 = vector.broadcast %982 : f32 to vector<8x32xf32>
      %984 = arith.mulf %983, %27 : vector<8x32xf32>
      %985 = arith.addf %981, %984 : vector<8x32xf32>
      %c13_555 = arith.constant 13 : index
      %c1_556 = arith.constant 1 : index
      %986 = memref.load %arg10[%c13_555, %c1_556] : memref<16x15xf32, #tpu.memory_space<smem>>
      %987 = vector.broadcast %986 : f32 to vector<8x32xf32>
      %988 = arith.mulf %987, %30 : vector<8x32xf32>
      %989 = arith.addf %985, %988 : vector<8x32xf32>
      %c13_557 = arith.constant 13 : index
      %c2_558 = arith.constant 2 : index
      %990 = memref.load %arg10[%c13_557, %c2_558] : memref<16x15xf32, #tpu.memory_space<smem>>
      %991 = vector.broadcast %990 : f32 to vector<8x32xf32>
      %992 = arith.mulf %991, %33 : vector<8x32xf32>
      %993 = arith.addf %989, %992 : vector<8x32xf32>
      %c13_559 = arith.constant 13 : index
      %c3_560 = arith.constant 3 : index
      %994 = memref.load %arg10[%c13_559, %c3_560] : memref<16x15xf32, #tpu.memory_space<smem>>
      %995 = vector.broadcast %994 : f32 to vector<8x32xf32>
      %996 = arith.mulf %995, %36 : vector<8x32xf32>
      %997 = arith.addf %993, %996 : vector<8x32xf32>
      %c13_561 = arith.constant 13 : index
      %c4_562 = arith.constant 4 : index
      %998 = memref.load %arg10[%c13_561, %c4_562] : memref<16x15xf32, #tpu.memory_space<smem>>
      %999 = vector.broadcast %998 : f32 to vector<8x32xf32>
      %1000 = arith.mulf %999, %39 : vector<8x32xf32>
      %1001 = arith.addf %997, %1000 : vector<8x32xf32>
      %c13_563 = arith.constant 13 : index
      %c5_564 = arith.constant 5 : index
      %1002 = memref.load %arg10[%c13_563, %c5_564] : memref<16x15xf32, #tpu.memory_space<smem>>
      %1003 = vector.broadcast %1002 : f32 to vector<8x32xf32>
      %1004 = arith.mulf %1003, %42 : vector<8x32xf32>
      %1005 = arith.addf %1001, %1004 : vector<8x32xf32>
      %c13_565 = arith.constant 13 : index
      %c6_566 = arith.constant 6 : index
      %1006 = memref.load %arg10[%c13_565, %c6_566] : memref<16x15xf32, #tpu.memory_space<smem>>
      %1007 = vector.broadcast %1006 : f32 to vector<8x32xf32>
      %1008 = arith.mulf %1007, %45 : vector<8x32xf32>
      %1009 = arith.addf %1005, %1008 : vector<8x32xf32>
      %c13_567 = arith.constant 13 : index
      %c7_568 = arith.constant 7 : index
      %1010 = memref.load %arg10[%c13_567, %c7_568] : memref<16x15xf32, #tpu.memory_space<smem>>
      %1011 = vector.broadcast %1010 : f32 to vector<8x32xf32>
      %1012 = arith.mulf %1011, %48 : vector<8x32xf32>
      %1013 = arith.addf %1009, %1012 : vector<8x32xf32>
      %c13_569 = arith.constant 13 : index
      %c8_570 = arith.constant 8 : index
      %1014 = memref.load %arg10[%c13_569, %c8_570] : memref<16x15xf32, #tpu.memory_space<smem>>
      %1015 = vector.broadcast %1014 : f32 to vector<8x32xf32>
      %1016 = arith.mulf %1015, %51 : vector<8x32xf32>
      %1017 = arith.addf %1013, %1016 : vector<8x32xf32>
      %c13_571 = arith.constant 13 : index
      %c9_572 = arith.constant 9 : index
      %1018 = memref.load %arg10[%c13_571, %c9_572] : memref<16x15xf32, #tpu.memory_space<smem>>
      %1019 = vector.broadcast %1018 : f32 to vector<8x32xf32>
      %1020 = arith.mulf %1019, %54 : vector<8x32xf32>
      %1021 = arith.addf %1017, %1020 : vector<8x32xf32>
      %c13_573 = arith.constant 13 : index
      %c10_574 = arith.constant 10 : index
      %1022 = memref.load %arg10[%c13_573, %c10_574] : memref<16x15xf32, #tpu.memory_space<smem>>
      %1023 = vector.broadcast %1022 : f32 to vector<8x32xf32>
      %1024 = arith.mulf %1023, %57 : vector<8x32xf32>
      %1025 = arith.addf %1021, %1024 : vector<8x32xf32>
      %c13_575 = arith.constant 13 : index
      %c11_576 = arith.constant 11 : index
      %1026 = memref.load %arg10[%c13_575, %c11_576] : memref<16x15xf32, #tpu.memory_space<smem>>
      %1027 = vector.broadcast %1026 : f32 to vector<8x32xf32>
      %1028 = arith.mulf %1027, %60 : vector<8x32xf32>
      %1029 = arith.addf %1025, %1028 : vector<8x32xf32>
      %c13_577 = arith.constant 13 : index
      %c12_578 = arith.constant 12 : index
      %1030 = memref.load %arg10[%c13_577, %c12_578] : memref<16x15xf32, #tpu.memory_space<smem>>
      %1031 = vector.broadcast %1030 : f32 to vector<8x32xf32>
      %1032 = arith.mulf %1031, %63 : vector<8x32xf32>
      %1033 = arith.addf %1029, %1032 : vector<8x32xf32>
      %c13_579 = arith.constant 13 : index
      %c13_580 = arith.constant 13 : index
      %1034 = memref.load %arg10[%c13_579, %c13_580] : memref<16x15xf32, #tpu.memory_space<smem>>
      %1035 = vector.broadcast %1034 : f32 to vector<8x32xf32>
      %1036 = arith.mulf %1035, %66 : vector<8x32xf32>
      %1037 = arith.addf %1033, %1036 : vector<8x32xf32>
      %c13_581 = arith.constant 13 : index
      %c14_582 = arith.constant 14 : index
      %1038 = memref.load %arg10[%c13_581, %c14_582] : memref<16x15xf32, #tpu.memory_space<smem>>
      %1039 = vector.broadcast %1038 : f32 to vector<8x32xf32>
      %1040 = arith.mulf %1039, %69 : vector<8x32xf32>
      %1041 = arith.addf %1037, %1040 : vector<8x32xf32>
      %c13_583 = arith.constant 13 : index
      %1042 = memref.load %arg11[%c13_583] : memref<16xf32, #tpu.memory_space<smem>>
      %1043 = vector.broadcast %1042 : f32 to vector<8x32xf32>
      %1044 = arith.addf %1041, %1043 : vector<8x32xf32>
      %cst_584 = arith.constant 0.000000e+00 : f32
      %1045 = vector.broadcast %cst_584 : f32 to vector<8x32xf32>
      %1046 = arith.maximumf %1044, %1045 : vector<8x32xf32>
      %c13_585 = arith.constant 13 : index
      %c0_586 = arith.constant 0 : index
      %c0_587 = arith.constant 0 : index
      %1047 = vector.load %arg12[%c13_585, %c0_586, %c0_587] : memref<16x32x32xf32, #tpu.memory_space<vmem>>, vector<1x32x32xf32>
      %1048 = vector.shape_cast %1047 : vector<1x32x32xf32> to vector<32x32xf32>
      %cst_588 = arith.constant dense<0.000000e+00> : vector<8x32xf32>
      %1049 = tpu.matmul %1046, %1048, %cst_588 {dimension_numbers = #tpu.dot_dimension_numbers<[1], [0], [0], [1], [0, 0, 1, 1], [], []>} : vector<8x32xf32>, vector<32x32xf32>, vector<8x32xf32> -> vector<8x32xf32>
      %1050 = arith.addf %980, %1049 : vector<8x32xf32>
      %cst_589 = arith.constant 0.000000e+00 : f32
      %1051 = vector.broadcast %cst_589 : f32 to vector<8x32xf32>
      %c14_590 = arith.constant 14 : index
      %c0_591 = arith.constant 0 : index
      %1052 = memref.load %arg10[%c14_590, %c0_591] : memref<16x15xf32, #tpu.memory_space<smem>>
      %1053 = vector.broadcast %1052 : f32 to vector<8x32xf32>
      %1054 = arith.mulf %1053, %27 : vector<8x32xf32>
      %1055 = arith.addf %1051, %1054 : vector<8x32xf32>
      %c14_592 = arith.constant 14 : index
      %c1_593 = arith.constant 1 : index
      %1056 = memref.load %arg10[%c14_592, %c1_593] : memref<16x15xf32, #tpu.memory_space<smem>>
      %1057 = vector.broadcast %1056 : f32 to vector<8x32xf32>
      %1058 = arith.mulf %1057, %30 : vector<8x32xf32>
      %1059 = arith.addf %1055, %1058 : vector<8x32xf32>
      %c14_594 = arith.constant 14 : index
      %c2_595 = arith.constant 2 : index
      %1060 = memref.load %arg10[%c14_594, %c2_595] : memref<16x15xf32, #tpu.memory_space<smem>>
      %1061 = vector.broadcast %1060 : f32 to vector<8x32xf32>
      %1062 = arith.mulf %1061, %33 : vector<8x32xf32>
      %1063 = arith.addf %1059, %1062 : vector<8x32xf32>
      %c14_596 = arith.constant 14 : index
      %c3_597 = arith.constant 3 : index
      %1064 = memref.load %arg10[%c14_596, %c3_597] : memref<16x15xf32, #tpu.memory_space<smem>>
      %1065 = vector.broadcast %1064 : f32 to vector<8x32xf32>
      %1066 = arith.mulf %1065, %36 : vector<8x32xf32>
      %1067 = arith.addf %1063, %1066 : vector<8x32xf32>
      %c14_598 = arith.constant 14 : index
      %c4_599 = arith.constant 4 : index
      %1068 = memref.load %arg10[%c14_598, %c4_599] : memref<16x15xf32, #tpu.memory_space<smem>>
      %1069 = vector.broadcast %1068 : f32 to vector<8x32xf32>
      %1070 = arith.mulf %1069, %39 : vector<8x32xf32>
      %1071 = arith.addf %1067, %1070 : vector<8x32xf32>
      %c14_600 = arith.constant 14 : index
      %c5_601 = arith.constant 5 : index
      %1072 = memref.load %arg10[%c14_600, %c5_601] : memref<16x15xf32, #tpu.memory_space<smem>>
      %1073 = vector.broadcast %1072 : f32 to vector<8x32xf32>
      %1074 = arith.mulf %1073, %42 : vector<8x32xf32>
      %1075 = arith.addf %1071, %1074 : vector<8x32xf32>
      %c14_602 = arith.constant 14 : index
      %c6_603 = arith.constant 6 : index
      %1076 = memref.load %arg10[%c14_602, %c6_603] : memref<16x15xf32, #tpu.memory_space<smem>>
      %1077 = vector.broadcast %1076 : f32 to vector<8x32xf32>
      %1078 = arith.mulf %1077, %45 : vector<8x32xf32>
      %1079 = arith.addf %1075, %1078 : vector<8x32xf32>
      %c14_604 = arith.constant 14 : index
      %c7_605 = arith.constant 7 : index
      %1080 = memref.load %arg10[%c14_604, %c7_605] : memref<16x15xf32, #tpu.memory_space<smem>>
      %1081 = vector.broadcast %1080 : f32 to vector<8x32xf32>
      %1082 = arith.mulf %1081, %48 : vector<8x32xf32>
      %1083 = arith.addf %1079, %1082 : vector<8x32xf32>
      %c14_606 = arith.constant 14 : index
      %c8_607 = arith.constant 8 : index
      %1084 = memref.load %arg10[%c14_606, %c8_607] : memref<16x15xf32, #tpu.memory_space<smem>>
      %1085 = vector.broadcast %1084 : f32 to vector<8x32xf32>
      %1086 = arith.mulf %1085, %51 : vector<8x32xf32>
      %1087 = arith.addf %1083, %1086 : vector<8x32xf32>
      %c14_608 = arith.constant 14 : index
      %c9_609 = arith.constant 9 : index
      %1088 = memref.load %arg10[%c14_608, %c9_609] : memref<16x15xf32, #tpu.memory_space<smem>>
      %1089 = vector.broadcast %1088 : f32 to vector<8x32xf32>
      %1090 = arith.mulf %1089, %54 : vector<8x32xf32>
      %1091 = arith.addf %1087, %1090 : vector<8x32xf32>
      %c14_610 = arith.constant 14 : index
      %c10_611 = arith.constant 10 : index
      %1092 = memref.load %arg10[%c14_610, %c10_611] : memref<16x15xf32, #tpu.memory_space<smem>>
      %1093 = vector.broadcast %1092 : f32 to vector<8x32xf32>
      %1094 = arith.mulf %1093, %57 : vector<8x32xf32>
      %1095 = arith.addf %1091, %1094 : vector<8x32xf32>
      %c14_612 = arith.constant 14 : index
      %c11_613 = arith.constant 11 : index
      %1096 = memref.load %arg10[%c14_612, %c11_613] : memref<16x15xf32, #tpu.memory_space<smem>>
      %1097 = vector.broadcast %1096 : f32 to vector<8x32xf32>
      %1098 = arith.mulf %1097, %60 : vector<8x32xf32>
      %1099 = arith.addf %1095, %1098 : vector<8x32xf32>
      %c14_614 = arith.constant 14 : index
      %c12_615 = arith.constant 12 : index
      %1100 = memref.load %arg10[%c14_614, %c12_615] : memref<16x15xf32, #tpu.memory_space<smem>>
      %1101 = vector.broadcast %1100 : f32 to vector<8x32xf32>
      %1102 = arith.mulf %1101, %63 : vector<8x32xf32>
      %1103 = arith.addf %1099, %1102 : vector<8x32xf32>
      %c14_616 = arith.constant 14 : index
      %c13_617 = arith.constant 13 : index
      %1104 = memref.load %arg10[%c14_616, %c13_617] : memref<16x15xf32, #tpu.memory_space<smem>>
      %1105 = vector.broadcast %1104 : f32 to vector<8x32xf32>
      %1106 = arith.mulf %1105, %66 : vector<8x32xf32>
      %1107 = arith.addf %1103, %1106 : vector<8x32xf32>
      %c14_618 = arith.constant 14 : index
      %c14_619 = arith.constant 14 : index
      %1108 = memref.load %arg10[%c14_618, %c14_619] : memref<16x15xf32, #tpu.memory_space<smem>>
      %1109 = vector.broadcast %1108 : f32 to vector<8x32xf32>
      %1110 = arith.mulf %1109, %69 : vector<8x32xf32>
      %1111 = arith.addf %1107, %1110 : vector<8x32xf32>
      %c14_620 = arith.constant 14 : index
      %1112 = memref.load %arg11[%c14_620] : memref<16xf32, #tpu.memory_space<smem>>
      %1113 = vector.broadcast %1112 : f32 to vector<8x32xf32>
      %1114 = arith.addf %1111, %1113 : vector<8x32xf32>
      %cst_621 = arith.constant 0.000000e+00 : f32
      %1115 = vector.broadcast %cst_621 : f32 to vector<8x32xf32>
      %1116 = arith.maximumf %1114, %1115 : vector<8x32xf32>
      %c14_622 = arith.constant 14 : index
      %c0_623 = arith.constant 0 : index
      %c0_624 = arith.constant 0 : index
      %1117 = vector.load %arg12[%c14_622, %c0_623, %c0_624] : memref<16x32x32xf32, #tpu.memory_space<vmem>>, vector<1x32x32xf32>
      %1118 = vector.shape_cast %1117 : vector<1x32x32xf32> to vector<32x32xf32>
      %cst_625 = arith.constant dense<0.000000e+00> : vector<8x32xf32>
      %1119 = tpu.matmul %1116, %1118, %cst_625 {dimension_numbers = #tpu.dot_dimension_numbers<[1], [0], [0], [1], [0, 0, 1, 1], [], []>} : vector<8x32xf32>, vector<32x32xf32>, vector<8x32xf32> -> vector<8x32xf32>
      %1120 = arith.addf %1050, %1119 : vector<8x32xf32>
      %cst_626 = arith.constant 0.000000e+00 : f32
      %1121 = vector.broadcast %cst_626 : f32 to vector<8x32xf32>
      %c15 = arith.constant 15 : index
      %c0_627 = arith.constant 0 : index
      %1122 = memref.load %arg10[%c15, %c0_627] : memref<16x15xf32, #tpu.memory_space<smem>>
      %1123 = vector.broadcast %1122 : f32 to vector<8x32xf32>
      %1124 = arith.mulf %1123, %27 : vector<8x32xf32>
      %1125 = arith.addf %1121, %1124 : vector<8x32xf32>
      %c15_628 = arith.constant 15 : index
      %c1_629 = arith.constant 1 : index
      %1126 = memref.load %arg10[%c15_628, %c1_629] : memref<16x15xf32, #tpu.memory_space<smem>>
      %1127 = vector.broadcast %1126 : f32 to vector<8x32xf32>
      %1128 = arith.mulf %1127, %30 : vector<8x32xf32>
      %1129 = arith.addf %1125, %1128 : vector<8x32xf32>
      %c15_630 = arith.constant 15 : index
      %c2_631 = arith.constant 2 : index
      %1130 = memref.load %arg10[%c15_630, %c2_631] : memref<16x15xf32, #tpu.memory_space<smem>>
      %1131 = vector.broadcast %1130 : f32 to vector<8x32xf32>
      %1132 = arith.mulf %1131, %33 : vector<8x32xf32>
      %1133 = arith.addf %1129, %1132 : vector<8x32xf32>
      %c15_632 = arith.constant 15 : index
      %c3_633 = arith.constant 3 : index
      %1134 = memref.load %arg10[%c15_632, %c3_633] : memref<16x15xf32, #tpu.memory_space<smem>>
      %1135 = vector.broadcast %1134 : f32 to vector<8x32xf32>
      %1136 = arith.mulf %1135, %36 : vector<8x32xf32>
      %1137 = arith.addf %1133, %1136 : vector<8x32xf32>
      %c15_634 = arith.constant 15 : index
      %c4_635 = arith.constant 4 : index
      %1138 = memref.load %arg10[%c15_634, %c4_635] : memref<16x15xf32, #tpu.memory_space<smem>>
      %1139 = vector.broadcast %1138 : f32 to vector<8x32xf32>
      %1140 = arith.mulf %1139, %39 : vector<8x32xf32>
      %1141 = arith.addf %1137, %1140 : vector<8x32xf32>
      %c15_636 = arith.constant 15 : index
      %c5_637 = arith.constant 5 : index
      %1142 = memref.load %arg10[%c15_636, %c5_637] : memref<16x15xf32, #tpu.memory_space<smem>>
      %1143 = vector.broadcast %1142 : f32 to vector<8x32xf32>
      %1144 = arith.mulf %1143, %42 : vector<8x32xf32>
      %1145 = arith.addf %1141, %1144 : vector<8x32xf32>
      %c15_638 = arith.constant 15 : index
      %c6_639 = arith.constant 6 : index
      %1146 = memref.load %arg10[%c15_638, %c6_639] : memref<16x15xf32, #tpu.memory_space<smem>>
      %1147 = vector.broadcast %1146 : f32 to vector<8x32xf32>
      %1148 = arith.mulf %1147, %45 : vector<8x32xf32>
      %1149 = arith.addf %1145, %1148 : vector<8x32xf32>
      %c15_640 = arith.constant 15 : index
      %c7_641 = arith.constant 7 : index
      %1150 = memref.load %arg10[%c15_640, %c7_641] : memref<16x15xf32, #tpu.memory_space<smem>>
      %1151 = vector.broadcast %1150 : f32 to vector<8x32xf32>
      %1152 = arith.mulf %1151, %48 : vector<8x32xf32>
      %1153 = arith.addf %1149, %1152 : vector<8x32xf32>
      %c15_642 = arith.constant 15 : index
      %c8_643 = arith.constant 8 : index
      %1154 = memref.load %arg10[%c15_642, %c8_643] : memref<16x15xf32, #tpu.memory_space<smem>>
      %1155 = vector.broadcast %1154 : f32 to vector<8x32xf32>
      %1156 = arith.mulf %1155, %51 : vector<8x32xf32>
      %1157 = arith.addf %1153, %1156 : vector<8x32xf32>
      %c15_644 = arith.constant 15 : index
      %c9_645 = arith.constant 9 : index
      %1158 = memref.load %arg10[%c15_644, %c9_645] : memref<16x15xf32, #tpu.memory_space<smem>>
      %1159 = vector.broadcast %1158 : f32 to vector<8x32xf32>
      %1160 = arith.mulf %1159, %54 : vector<8x32xf32>
      %1161 = arith.addf %1157, %1160 : vector<8x32xf32>
      %c15_646 = arith.constant 15 : index
      %c10_647 = arith.constant 10 : index
      %1162 = memref.load %arg10[%c15_646, %c10_647] : memref<16x15xf32, #tpu.memory_space<smem>>
      %1163 = vector.broadcast %1162 : f32 to vector<8x32xf32>
      %1164 = arith.mulf %1163, %57 : vector<8x32xf32>
      %1165 = arith.addf %1161, %1164 : vector<8x32xf32>
      %c15_648 = arith.constant 15 : index
      %c11_649 = arith.constant 11 : index
      %1166 = memref.load %arg10[%c15_648, %c11_649] : memref<16x15xf32, #tpu.memory_space<smem>>
      %1167 = vector.broadcast %1166 : f32 to vector<8x32xf32>
      %1168 = arith.mulf %1167, %60 : vector<8x32xf32>
      %1169 = arith.addf %1165, %1168 : vector<8x32xf32>
      %c15_650 = arith.constant 15 : index
      %c12_651 = arith.constant 12 : index
      %1170 = memref.load %arg10[%c15_650, %c12_651] : memref<16x15xf32, #tpu.memory_space<smem>>
      %1171 = vector.broadcast %1170 : f32 to vector<8x32xf32>
      %1172 = arith.mulf %1171, %63 : vector<8x32xf32>
      %1173 = arith.addf %1169, %1172 : vector<8x32xf32>
      %c15_652 = arith.constant 15 : index
      %c13_653 = arith.constant 13 : index
      %1174 = memref.load %arg10[%c15_652, %c13_653] : memref<16x15xf32, #tpu.memory_space<smem>>
      %1175 = vector.broadcast %1174 : f32 to vector<8x32xf32>
      %1176 = arith.mulf %1175, %66 : vector<8x32xf32>
      %1177 = arith.addf %1173, %1176 : vector<8x32xf32>
      %c15_654 = arith.constant 15 : index
      %c14_655 = arith.constant 14 : index
      %1178 = memref.load %arg10[%c15_654, %c14_655] : memref<16x15xf32, #tpu.memory_space<smem>>
      %1179 = vector.broadcast %1178 : f32 to vector<8x32xf32>
      %1180 = arith.mulf %1179, %69 : vector<8x32xf32>
      %1181 = arith.addf %1177, %1180 : vector<8x32xf32>
      %c15_656 = arith.constant 15 : index
      %1182 = memref.load %arg11[%c15_656] : memref<16xf32, #tpu.memory_space<smem>>
      %1183 = vector.broadcast %1182 : f32 to vector<8x32xf32>
      %1184 = arith.addf %1181, %1183 : vector<8x32xf32>
      %cst_657 = arith.constant 0.000000e+00 : f32
      %1185 = vector.broadcast %cst_657 : f32 to vector<8x32xf32>
      %1186 = arith.maximumf %1184, %1185 : vector<8x32xf32>
      %c15_658 = arith.constant 15 : index
      %c0_659 = arith.constant 0 : index
      %c0_660 = arith.constant 0 : index
      %1187 = vector.load %arg12[%c15_658, %c0_659, %c0_660] : memref<16x32x32xf32, #tpu.memory_space<vmem>>, vector<1x32x32xf32>
      %1188 = vector.shape_cast %1187 : vector<1x32x32xf32> to vector<32x32xf32>
      %cst_661 = arith.constant dense<0.000000e+00> : vector<8x32xf32>
      %1189 = tpu.matmul %1186, %1188, %cst_661 {dimension_numbers = #tpu.dot_dimension_numbers<[1], [0], [0], [1], [0, 0, 1, 1], [], []>} : vector<8x32xf32>, vector<32x32xf32>, vector<8x32xf32> -> vector<8x32xf32>
      %1190 = arith.addf %1120, %1189 : vector<8x32xf32>
      %c0_662 = arith.constant 0 : index
      %c0_663 = arith.constant 0 : index
      %1191 = vector.load %arg13[%c0_662, %c0_663] : memref<1x32xf32, #tpu.memory_space<vmem>>, vector<1x32xf32>
      %1192 = vector.broadcast %1191 : vector<1x32xf32> to vector<8x32xf32>
      %1193 = arith.addf %1190, %1192 : vector<8x32xf32>
      %cst_664 = arith.constant 0.000000e+00 : f32
      %1194 = vector.broadcast %cst_664 : f32 to vector<8x32xf32>
      %1195 = arith.maximumf %1193, %1194 : vector<8x32xf32>
      %1196 = arith.truncf %1195 : vector<8x32xf32> to vector<8x32xbf16>
      %c0_665 = arith.constant 0 : index
      %c0_666 = arith.constant 0 : index
      %1197 = vector.load %arg16[%c0_665, %c0_666] : memref<8x32xbf16, #tpu.memory_space<vmem>>, vector<8x32xbf16>
      tpu.vector_store %arg16[%c0_665, %c0_666], %1196 {strides = array<i32>} : memref<8x32xbf16, #tpu.memory_space<vmem>>, vector<8x32xbf16>,
    } else {
    }
    %c0 = arith.constant 0 : index
    %c0_1 = arith.constant 0 : index
    %3 = vector.load %arg16[%c0, %c0_1] : memref<8x32xbf16, #tpu.memory_space<vmem>>, vector<8x32xbf16>
    %c0_2 = arith.constant 0 : index
    %c0_3 = arith.constant 0 : index
    %4 = vector.load %arg14[%c0_2, %c0_3] : memref<128x32xbf16, #tpu.memory_space<vmem>>, vector<128x32xbf16>
    %cst = arith.constant dense<0.000000e+00> : vector<8x128xf32>
    %5 = tpu.matmul %3, %4, %cst {dimension_numbers = #tpu.dot_dimension_numbers<[1], [1], [0], [0], [0, 0, 1, 0], [], []>} : vector<8x32xbf16>, vector<128x32xbf16>, vector<8x128xf32> -> vector<8x128xf32>
    %c0_4 = arith.constant 0 : index
    %c0_5 = arith.constant 0 : index
    %6 = vector.load %arg15[%c0_4, %c0_5] : memref<8x128xf32, #tpu.memory_space<vmem>>, vector<8x128xf32>
    tpu.vector_store %arg15[%c0_4, %c0_5], %5 {strides = array<i32>} : memref<8x128xf32, #tpu.memory_space<vmem>>, vector<8x128xf32>,
    return
  }
  func.func @transform_0(%arg0: i32) -> (i32, i32) {
    %c0_i32 = arith.constant 0 : i32
    %c0_i32_0 = arith.constant 0 : i32
    %c0_i32_1 = arith.constant 0 : i32
    return %c0_i32, %c0_i32_0 : i32, i32
  }
  func.func @transform_1(%arg0: i32) -> (i32, i32) {
    %c0_i32 = arith.constant 0 : i32
    %c0_i32_0 = arith.constant 0 : i32
    %c0_i32_1 = arith.constant 0 : i32
    return %c0_i32, %c0_i32_0 : i32, i32
  }
  func.func @transform_2(%arg0: i32) -> (i32, i32) {
    %c0_i32 = arith.constant 0 : i32
    %c0_i32_0 = arith.constant 0 : i32
    %c0_i32_1 = arith.constant 0 : i32
    return %c0_i32, %c0_i32_0 : i32, i32
  }
  func.func @transform_3(%arg0: i32) -> (i32, i32) {
    %c0_i32 = arith.constant 0 : i32
    %c0_i32_0 = arith.constant 0 : i32
    %c0_i32_1 = arith.constant 0 : i32
    return %c0_i32, %c0_i32_0 : i32, i32
  }
  func.func @transform_4(%arg0: i32) -> (i32, i32) {
    %c0_i32 = arith.constant 0 : i32
    %c0_i32_0 = arith.constant 0 : i32
    %c0_i32_1 = arith.constant 0 : i32
    return %c0_i32, %c0_i32_0 : i32, i32
  }
  func.func @transform_5(%arg0: i32) -> (i32, i32) {
    %c0_i32 = arith.constant 0 : i32
    %c0_i32_0 = arith.constant 0 : i32
    %c0_i32_1 = arith.constant 0 : i32
    return %c0_i32, %c0_i32_0 : i32, i32
  }
  func.func @transform_6(%arg0: i32) -> (i32, i32) {
    %c0_i32 = arith.constant 0 : i32
    %c0_i32_0 = arith.constant 0 : i32
    %c0_i32_1 = arith.constant 0 : i32
    return %c0_i32, %c0_i32_0 : i32, i32
  }
  func.func @transform_7(%arg0: i32) -> (i32, i32) {
    %c0_i32 = arith.constant 0 : i32
    %c0_i32_0 = arith.constant 0 : i32
    %c0_i32_1 = arith.constant 0 : i32
    return %c0_i32, %c0_i32_0 : i32, i32
  }
  func.func @transform_8(%arg0: i32) -> (i32, i32, i32) {
    %c0_i32 = arith.constant 0 : i32
    %c0_i32_0 = arith.constant 0 : i32
    %c0_i32_1 = arith.constant 0 : i32
    %c0_i32_2 = arith.constant 0 : i32
    return %c0_i32, %c0_i32_0, %c0_i32_1 : i32, i32, i32
  }
  func.func @transform_9(%arg0: i32) -> (i32, i32) {
    %c0_i32 = arith.constant 0 : i32
    %c0_i32_0 = arith.constant 0 : i32
    %c0_i32_1 = arith.constant 0 : i32
    return %c0_i32, %c0_i32_0 : i32, i32
  }
  func.func @transform_10(%arg0: i32) -> i32 {
    %c0_i32 = arith.constant 0 : i32
    %c0_i32_0 = arith.constant 0 : i32
    return %c0_i32 : i32
  }
  func.func @transform_11(%arg0: i32) -> (i32, i32, i32) {
    %c0_i32 = arith.constant 0 : i32
    %c0_i32_0 = arith.constant 0 : i32
    %c0_i32_1 = arith.constant 0 : i32
    %c0_i32_2 = arith.constant 0 : i32
    return %c0_i32, %c0_i32_0, %c0_i32_1 : i32, i32, i32
  }
  func.func @transform_12(%arg0: i32) -> (i32, i32) {
    %c0_i32 = arith.constant 0 : i32
    %c0_i32_0 = arith.constant 0 : i32
    %c0_i32_1 = arith.constant 0 : i32
    return %c0_i32, %c0_i32_0 : i32, i32
  }
  func.func @transform_13(%arg0: i32) -> (i32, i32) {
    %c0_i32 = arith.constant 0 : i32
    %c0_i32_0 = arith.constant 0 : i32
    return %arg0, %c0_i32 : i32, i32
  }
  func.func @transform_14(%arg0: i32) -> (i32, i32) {
    %c0_i32 = arith.constant 0 : i32
    %c0_i32_0 = arith.constant 0 : i32
    return %c0_i32, %arg0 : i32, i32
  }
}

</mosaic_0001>

<llo_original>
// kernel: se_conv_trans_r_forward.1
$region0: #{se_conv_trans_r_forward.1}
  #allocation0 [shape = 'u32[]', space=smem, size = 0x4, offset = 0x4, fixed_abs, tag = 'smem constant byte address 0x4 - core index']
  #allocation1 [shape = 'u32[144,128]{1,0:T(1,128)}', space=vmem, size = 0x12000, scoped, tag = 'internal scratch']
  #allocation2 [shape = 'bf16[8,32]{1,0:T(8,128)(2,1)}', space=vmem, size = 0x800, scoped, tag = 'scratch operand']
  %s0 = inlined_call_operand.vmem [shape: f32[8,32], index: 0, kind: input, shape index: {}]
  %s1 = inlined_call_operand.vmem [shape: f32[8,32], index: 1, kind: input, shape index: {}]
  %s2 = inlined_call_operand.vmem [shape: f32[8,32], index: 2, kind: input, shape index: {}]
  %s3 = inlined_call_operand.vmem [shape: f32[8,32], index: 3, kind: input, shape index: {}]
  %s4 = inlined_call_operand.vmem [shape: f32[8,16], index: 4, kind: input, shape index: {}]
  %s5 = inlined_call_operand.vmem [shape: f32[16,16], index: 5, kind: input, shape index: {}]
  %s6 = inlined_call_operand.vmem [shape: f32[1,16], index: 6, kind: input, shape index: {}]
  %s7 = inlined_call_operand.vmem [shape: f32[16,32], index: 7, kind: input, shape index: {}]
  %s8 = inlined_call_operand.vmem [shape: f32[3,32,32], index: 8, kind: input, shape index: {}]
  %s9 = inlined_call_operand.vmem [shape: f32[16,15], index: 9, kind: input, shape index: {}]
  %s10 = inlined_call_operand.vmem [shape: f32[16], index: 10, kind: input, shape index: {}]
  %s11 = inlined_call_operand.vmem [shape: f32[16,32,32], index: 11, kind: input, shape index: {}]
  %s12 = inlined_call_operand.vmem [shape: f32[1,32], index: 12, kind: input, shape index: {}]
  %s13 = inlined_call_operand.vmem [shape: bf16[128,32], index: 13, kind: input, shape index: {}]
  %s14 = inlined_call_operand.hbm [shape: f32[8,128], index: 14, kind: output, shape index: {}]
  %s15 = sld [smem:[#allocation0]]
  $region78: #{se_conv_trans_r_forward.1} parent=0
    _
  %s17 = ssub.s32 1, %s15
  %s18 = scalar_select 0, %s17, %s15
  $region1: #{se_conv_trans_r_forward.1} parent=0
    #allocation3 [shape = 'u8[8192]{0}', space=smem, size = 0x2000, scoped, tag = 'input window, operand 9, single buffered']
    #allocation4 [shape = 's32[1]{0}', space=sflag, size = 0x4, scoped, tag = 'scoped memory for se_conv_trans_r_forward.1']
    #allocation5 [shape = 's32[1]{0}', space=sflag, size = 0x4, scoped, tag = 'scoped memory for se_conv_trans_r_forward.1']
    #allocation6 [shape = 'u8[512]{0}', space=smem, size = 0x200, scoped, tag = 'input window, operand 10, single buffered']
    #allocation7 [shape = 's32[1]{0}', space=sflag, size = 0x4, scoped, tag = 'scoped memory for se_conv_trans_r_forward.1']
    #allocation8 [shape = 'u8[4096]{0}', space=vmem, size = 0x1000, scoped, tag = 'output window, operand 0, single buffered']
    %19 = vsyncpa [#allocation5], 0
    %20 = vsyncpa [#allocation7], 0
    %21 = vsyncpa [#allocation4], 0
    // Predicated region
    $region2: #{se_conv_trans_r_forward.1} parent=1 // pred_check
      _
    $region3: #{se_conv_trans_r_forward.1} parent=1 // pred_check_branch
      %23 = sbr.rel (0) target = $region5
    $region4: #{se_conv_trans_r_forward.1} parent=1 // pred_region
      _
    $region5: #{se_conv_trans_r_forward.1} parent=1 // pred_fallthru
      _
    // Predicated region
    $region6: #{se_conv_trans_r_forward.1} parent=1 // pred_check
      _
    $region7: #{se_conv_trans_r_forward.1} parent=1 // pred_check_branch
      %25 = sbr.rel (0) target = $region9
    $region8: #{se_conv_trans_r_forward.1} parent=1 // pred_region
      _
    $region9: #{se_conv_trans_r_forward.1} parent=1 // pred_fallthru
      _
    // Predicated region
    $region10: #{se_conv_trans_r_forward.1} parent=1 // pred_check
      _
    $region11: #{se_conv_trans_r_forward.1} parent=1 // pred_check_branch
      %27 = sbr.rel (0) target = $region13
    $region12: #{se_conv_trans_r_forward.1} parent=1 // pred_region
      _
    $region13: #{se_conv_trans_r_forward.1} parent=1 // pred_fallthru
      _
    // Predicated region
    $region14: #{se_conv_trans_r_forward.1} parent=1 // pred_check
      _
    $region15: #{se_conv_trans_r_forward.1} parent=1 // pred_check_branch
      %29 = sbr.rel (0) target = $region17
    $region16: #{se_conv_trans_r_forward.1} parent=1 // pred_region
      _
    $region17: #{se_conv_trans_r_forward.1} parent=1 // pred_fallthru
      _
    // Predicated region
    $region18: #{se_conv_trans_r_forward.1} parent=1 // pred_check
      _
    $region19: #{se_conv_trans_r_forward.1} parent=1 // pred_check_branch
      %31 = sbr.rel (0) target = $region21
    $region20: #{se_conv_trans_r_forward.1} parent=1 // pred_region
      _
    $region21: #{se_conv_trans_r_forward.1} parent=1 // pred_fallthru
      _
    // Predicated region
    $region22: #{se_conv_trans_r_forward.1} parent=1 // pred_check
      _
    $region23: #{se_conv_trans_r_forward.1} parent=1 // pred_check_branch
      %33 = sbr.rel (0) target = $region25
    $region24: #{se_conv_trans_r_forward.1} parent=1 // pred_region
      _
    $region25: #{se_conv_trans_r_forward.1} parent=1 // pred_fallthru
      _
    // Predicated region
    $region26: #{se_conv_trans_r_forward.1} parent=1 // pred_check
      _
    $region27: #{se_conv_trans_r_forward.1} parent=1 // pred_check_branch
      %35 = sbr.rel (0) target = $region29
    $region28: #{se_conv_trans_r_forward.1} parent=1 // pred_region
      _
    $region29: #{se_conv_trans_r_forward.1} parent=1 // pred_fallthru
      _
    // Predicated region
    $region30: #{se_conv_trans_r_forward.1} parent=1 // pred_check
      _
    $region31: #{se_conv_trans_r_forward.1} parent=1 // pred_check_branch
      %37 = sbr.rel (0) target = $region33
    $region32: #{se_conv_trans_r_forward.1} parent=1 // pred_region
      _
    $region33: #{se_conv_trans_r_forward.1} parent=1 // pred_fallthru
      _
    // Predicated region
    $region34: #{se_conv_trans_r_forward.1} parent=1 // pred_check
      _
    $region35: #{se_conv_trans_r_forward.1} parent=1 // pred_check_branch
      %39 = sbr.rel (0) target = $region37
    $region36: #{se_conv_trans_r_forward.1} parent=1 // pred_region
      _
    $region37: #{se_conv_trans_r_forward.1} parent=1 // pred_fallthru
      _
    // Predicated region
    $region38: #{se_conv_trans_r_forward.1} parent=1 // pred_check
      _
    $region39: #{se_conv_trans_r_forward.1} parent=1 // pred_check_branch
      %41 = sbr.rel (0) target = $region41
    $region40: #{se_conv_trans_r_forward.1} parent=1 // pred_region
      %s43 = ssub.s32 256, 256
      %44 = vsyncadd [#allocation5], %s43
      %s45 = sshll.u32 %s9, 4
      %s46 = int_to_ptr.vmem [resolvable:$true] %s45
      %51 = dma.vmem_to_smem %s46, 256, [#allocation3], [#allocation5], 128, 128, 8
    $region41: #{se_conv_trans_r_forward.1} parent=1 // pred_fallthru
      _
    // Predicated region
    $region42: #{se_conv_trans_r_forward.1} parent=1 // pred_check
      _
    $region43: #{se_conv_trans_r_forward.1} parent=1 // pred_check_branch
      %53 = sbr.rel (0) target = $region45
    $region44: #{se_conv_trans_r_forward.1} parent=1 // pred_region
      %s55 = ssub.s32 16, 16
      %56 = vsyncadd [#allocation7], %s55
      %s58 = sshll.u32 %s10, 4
      %s59 = int_to_ptr.vmem [resolvable:$true] %s58
      %61 = dma.vmem_to_smem %s59, 16, [#allocation6], [#allocation7]
    $region45: #{se_conv_trans_r_forward.1} parent=1 // pred_fallthru
      _
    // Predicated region
    $region46: #{se_conv_trans_r_forward.1} parent=1 // pred_check
      _
    $region47: #{se_conv_trans_r_forward.1} parent=1 // pred_check_branch
      %63 = sbr.rel (0) target = $region49
    $region48: #{se_conv_trans_r_forward.1} parent=1 // pred_region
      _
    $region49: #{se_conv_trans_r_forward.1} parent=1 // pred_fallthru
      _
    // Predicated region
    $region50: #{se_conv_trans_r_forward.1} parent=1 // pred_check
      _
    $region51: #{se_conv_trans_r_forward.1} parent=1 // pred_check_branch
      %65 = sbr.rel (0) target = $region53
    $region52: #{se_conv_trans_r_forward.1} parent=1 // pred_region
      _
    $region53: #{se_conv_trans_r_forward.1} parent=1 // pred_fallthru
      _
    // Predicated region
    $region54: #{se_conv_trans_r_forward.1} parent=1 // pred_check
      _
    $region55: #{se_conv_trans_r_forward.1} parent=1 // pred_check_branch
      %67 = sbr.rel (0) target = $region57
    $region56: #{se_conv_trans_r_forward.1} parent=1 // pred_region
      _
    $region57: #{se_conv_trans_r_forward.1} parent=1 // pred_fallthru
      _
    // Predicated region
    $region58: #{se_conv_trans_r_forward.1} parent=1 // pred_check
      _
    $region59: #{se_conv_trans_r_forward.1} parent=1 // pred_check_branch
      %69 = sbr.rel (0) target = $region61
    $region60: #{se_conv_trans_r_forward.1} parent=1 // pred_region
      %70 = dma.done [#allocation5], 256
    $region61: #{se_conv_trans_r_forward.1} parent=1 // pred_fallthru
      _
    // Predicated region
    $region62: #{se_conv_trans_r_forward.1} parent=1 // pred_check
      _
    $region63: #{se_conv_trans_r_forward.1} parent=1 // pred_check_branch
      %72 = sbr.rel (0) target = $region65
    $region64: #{se_conv_trans_r_forward.1} parent=1 // pred_region
      %73 = dma.done [#allocation7], 16
    $region65: #{se_conv_trans_r_forward.1} parent=1 // pred_fallthru
      _
    %74 = sfence
    %p76 = scmp.eq.s32.totalorder 0, 0
    // Predicated region
    $region66: #{se_conv_trans_r_forward.1} parent=1 // pred_check
      %p77 = pneg %p76
    $region67: #{se_conv_trans_r_forward.1} parent=1 // pred_check_branch
      %79 = sbr.rel (%p77) target = $region69
    $region68: #{se_conv_trans_r_forward.1} parent=1 // pred_region
      %v80 = vld [vmem:[%s4] sm:$0xff]
      %v81 = vld [vmem:[%s5] sm:$0xff]
      %v82 = vld [vmem:[%s5 + $0x8] sm:$0xff]
      %v83 = vld [vmem:[%s6] sm:$0x1]
      %v85 = vlaneseq
      %v86 = vshrl.u32 %v85, 7
      %v87 = vsub.s32 0, %v86
      %v88 = vrot.slane %v83, %v87
      %vm90 = vcmask 130048
      %v92 = vsel %vm90, %v80, 0
      %94 = vmatprep.subr.mxu0 0.0
      %95 = vmatpush1.msra.mxu0 0.0
      %96 = vmatprep.subr.mxu0 0.0
      %97 = vmatpush1.msra.mxu0 0.0
      %98 = vmatprep.subr.mxu0 0.0
      %99 = vmatpush1.msra.mxu0 0.0
      %100 = vmatprep.subr.mxu0 0.0
      %101 = vmatpush1.msra.mxu0 0.0
      %102 = vmatprep.subr.mxu0 0.0
      %103 = vmatpush1.msra.mxu0 0.0
      %104 = vmatprep.subr.mxu0 0.0
      %105 = vmatpush1.msra.mxu0 0.0
      %106 = vmatprep.subr.mxu0 0.0
      %107 = vmatpush1.msra.mxu0 0.0
      %108 = vmatprep.subr.mxu0 0.0
      %109 = vmatpush1.msra.mxu0 0.0
      %110 = vmatprep.subr.mxu0 0.0
      %111 = vmatpush1.msra.mxu0 0.0
      %112 = vmatprep.subr.mxu0 0.0
      %113 = vmatpush1.msra.mxu0 0.0
      %114 = vmatprep.subr.mxu0 0.0
      %115 = vmatpush1.msra.mxu0 0.0
      %116 = vmatprep.subr.mxu0 0.0
      %117 = vmatpush1.msra.mxu0 0.0
      %118 = vmatprep.subr.mxu0 0.0
      %119 = vmatpush1.msra.mxu0 0.0
      %120 = vmatprep.subr.mxu0 0.0
      %121 = vmatpush1.msra.mxu0 0.0
      %122 = vmatprep.subr.mxu0 0.0
      %123 = vmatpush1.msra.mxu0 %v82
      %124 = vmatprep.subr.mxu0 0.0
      %125 = vmatpush1.msra.mxu0 %v81
      %126 = vmatprep.subr.mxu0 0.0
      %127 = vmatpush2.msra.mxu0 0.0
      %128 = vmatprep.subr.mxu0 0.0
      %129 = vmatpush2.msra.mxu0 0.0
      %130 = vmatprep.subr.mxu0 0.0
      %131 = vmatpush2.msra.mxu0 0.0
      %132 = vmatprep.subr.mxu0 0.0
      %133 = vmatpush2.msra.mxu0 0.0
      %134 = vmatprep.subr.mxu0 0.0
      %135 = vmatpush2.msra.mxu0 0.0
      %136 = vmatprep.subr.mxu0 0.0
      %137 = vmatpush2.msra.mxu0 0.0
      %138 = vmatprep.subr.mxu0 0.0
      %139 = vmatpush2.msra.mxu0 0.0
      %140 = vmatprep.subr.mxu0 0.0
      %141 = vmatpush2.msra.mxu0 0.0
      %142 = vmatprep.subr.mxu0 0.0
      %143 = vmatpush2.msra.mxu0 0.0
      %144 = vmatprep.subr.mxu0 0.0
      %145 = vmatpush2.msra.mxu0 0.0
      %146 = vmatprep.subr.mxu0 0.0
      %147 = vmatpush2.msra.mxu0 0.0
      %148 = vmatprep.subr.mxu0 0.0
      %149 = vmatpush2.msra.mxu0 0.0
      %150 = vmatprep.subr.mxu0 0.0
      %151 = vmatpush2.msra.mxu0 0.0
      %152 = vmatprep.subr.mxu0 0.0
      %153 = vmatpush2.msra.mxu0 0.0
      %154 = vmatprep.subr.mxu0 0.0
      %155 = vmatpush2.msra.mxu0 0.0
      %156 = vmatprep.subr.mxu0 0.0
      %157 = vmatpush2.msra.mxu0 0.0
      %158 = vmatprep.mubr.f32.mxu0 0.0
      %159 = vmatmul.mubr.f32.gmra.mxu0 %v92
      %v160 = vpop.f32.mrf.mxu0
      %v161 = vadd.f32 %v88, %v160
      %v162 = vpop.f32.mrf.mxu0
      %163 = vdwg.mxu0
      %v164 = vlaneseq
      %v165 = vshrl.u32 %v164, 7
      %vm166 = vcmp.ge.s32.totalorder %v165, 4
      %v167 = vsel %vm166, %v161, %v80
      %v168 = vld [vmem:[%s7] sm:$0xff]
      %v169 = vld [vmem:[%s7 + $0x8] sm:$0xff]
      %v171 = vsel %vm90, %v167, 0
      %173 = vmatprep.subr.mxu0 0.0
      %174 = vmatpush1.msra.mxu0 0.0
      %175 = vmatprep.subr.mxu0 0.0
      %176 = vmatpush1.msra.mxu0 0.0
      %177 = vmatprep.subr.mxu0 0.0
      %178 = vmatpush1.msra.mxu0 0.0
      %179 = vmatprep.subr.mxu0 0.0
      %180 = vmatpush1.msra.mxu0 0.0
      %181 = vmatprep.subr.mxu0 0.0
      %182 = vmatpush1.msra.mxu0 0.0
      %183 = vmatprep.subr.mxu0 0.0
      %184 = vmatpush1.msra.mxu0 0.0
      %185 = vmatprep.subr.mxu0 0.0
      %186 = vmatpush1.msra.mxu0 0.0
      %187 = vmatprep.subr.mxu0 0.0
      %188 = vmatpush1.msra.mxu0 0.0
      %189 = vmatprep.subr.mxu0 0.0
      %190 = vmatpush1.msra.mxu0 0.0
      %191 = vmatprep.subr.mxu0 0.0
      %192 = vmatpush1.msra.mxu0 0.0
      %193 = vmatprep.subr.mxu0 0.0
      %194 = vmatpush1.msra.mxu0 0.0
      %195 = vmatprep.subr.mxu0 0.0
      %196 = vmatpush1.msra.mxu0 0.0
      %197 = vmatprep.subr.mxu0 0.0
      %198 = vmatpush1.msra.mxu0 0.0
      %199 = vmatprep.subr.mxu0 0.0
      %200 = vmatpush1.msra.mxu0 0.0
      %201 = vmatprep.subr.mxu0 0.0
      %202 = vmatpush1.msra.mxu0 %v169
      %203 = vmatprep.subr.mxu0 0.0
      %204 = vmatpush1.msra.mxu0 %v168
      %205 = vmatprep.subr.mxu0 0.0
      %206 = vmatpush2.msra.mxu0 0.0
      %207 = vmatprep.subr.mxu0 0.0
      %208 = vmatpush2.msra.mxu0 0.0
      %209 = vmatprep.subr.mxu0 0.0
      %210 = vmatpush2.msra.mxu0 0.0
      %211 = vmatprep.subr.mxu0 0.0
      %212 = vmatpush2.msra.mxu0 0.0
      %213 = vmatprep.subr.mxu0 0.0
      %214 = vmatpush2.msra.mxu0 0.0
      %215 = vmatprep.subr.mxu0 0.0
      %216 = vmatpush2.msra.mxu0 0.0
      %217 = vmatprep.subr.mxu0 0.0
      %218 = vmatpush2.msra.mxu0 0.0
      %219 = vmatprep.subr.mxu0 0.0
      %220 = vmatpush2.msra.mxu0 0.0
      %221 = vmatprep.subr.mxu0 0.0
      %222 = vmatpush2.msra.mxu0 0.0
      %223 = vmatprep.subr.mxu0 0.0
      %224 = vmatpush2.msra.mxu0 0.0
      %225 = vmatprep.subr.mxu0 0.0
      %226 = vmatpush2.msra.mxu0 0.0
      %227 = vmatprep.subr.mxu0 0.0
      %228 = vmatpush2.msra.mxu0 0.0
      %229 = vmatprep.subr.mxu0 0.0
      %230 = vmatpush2.msra.mxu0 0.0
      %231 = vmatprep.subr.mxu0 0.0
      %232 = vmatpush2.msra.mxu0 0.0
      %233 = vmatprep.subr.mxu0 0.0
      %234 = vmatpush2.msra.mxu0 0.0
      %235 = vmatprep.subr.mxu0 0.0
      %236 = vmatpush2.msra.mxu0 0.0
      %237 = vmatprep.mubr.f32.mxu0 0.0
      %238 = vmatmul.mubr.f32.gmra.mxu0 %v171
      %v239 = vpop.f32.mrf.mxu0
      %v240 = vadd.f32 0.0, %v239
      %v241 = vpop.f32.mrf.mxu0
      %242 = vdwg.mxu0
      %v243 = vld [vmem:[%s0] sm:$0xff]
      %v244 = vtanh.pop %v243
      %v245 = vld [vmem:[%s1] sm:$0xff]
      %v246 = vtanh.pop %v245
      %v247 = vld [vmem:[%s2] sm:$0xff]
      %v248 = vld [vmem:[%s3] sm:$0xff]
      %v249 = vld [vmem:[%s8] sm:$0xff]
      %v250 = vld [vmem:[%s8 + $0x8] sm:$0xff]
      %v251 = vld [vmem:[%s8 + $0x10] sm:$0xff]
      %v252 = vld [vmem:[%s8 + $0x18] sm:$0xff]
      %vm253 = vcmask 261120
      %v255 = vsel %vm253, %v244, 0
      %257 = vmatprep.subr.mxu0 0.0
      %258 = vmatpush1.msra.mxu0 0.0
      %259 = vmatprep.subr.mxu0 0.0
      %260 = vmatpush1.msra.mxu0 0.0
      %261 = vmatprep.subr.mxu0 0.0
      %262 = vmatpush1.msra.mxu0 0.0
      %263 = vmatprep.subr.mxu0 0.0
      %264 = vmatpush1.msra.mxu0 0.0
      %265 = vmatprep.subr.mxu0 0.0
      %266 = vmatpush1.msra.mxu0 0.0
      %267 = vmatprep.subr.mxu0 0.0
      %268 = vmatpush1.msra.mxu0 0.0
      %269 = vmatprep.subr.mxu0 0.0
      %270 = vmatpush1.msra.mxu0 0.0
      %271 = vmatprep.subr.mxu0 0.0
      %272 = vmatpush1.msra.mxu0 0.0
      %273 = vmatprep.subr.mxu0 0.0
      %274 = vmatpush1.msra.mxu0 0.0
      %275 = vmatprep.subr.mxu0 0.0
      %276 = vmatpush1.msra.mxu0 0.0
      %277 = vmatprep.subr.mxu0 0.0
      %278 = vmatpush1.msra.mxu0 0.0
      %279 = vmatprep.subr.mxu0 0.0
      %280 = vmatpush1.msra.mxu0 0.0
      %281 = vmatprep.subr.mxu0 0.0
      %282 = vmatpush1.msra.mxu0 %v252
      %283 = vmatprep.subr.mxu0 0.0
      %284 = vmatpush1.msra.mxu0 %v251
      %285 = vmatprep.subr.mxu0 0.0
      %286 = vmatpush1.msra.mxu0 %v250
      %287 = vmatprep.subr.mxu0 0.0
      %288 = vmatpush1.msra.mxu0 %v249
      %289 = vmatprep.subr.mxu0 0.0
      %290 = vmatpush2.msra.mxu0 0.0
      %291 = vmatprep.subr.mxu0 0.0
      %292 = vmatpush2.msra.mxu0 0.0
      %293 = vmatprep.subr.mxu0 0.0
      %294 = vmatpush2.msra.mxu0 0.0
      %295 = vmatprep.subr.mxu0 0.0
      %296 = vmatpush2.msra.mxu0 0.0
      %297 = vmatprep.subr.mxu0 0.0
      %298 = vmatpush2.msra.mxu0 0.0
      %299 = vmatprep.subr.mxu0 0.0
      %300 = vmatpush2.msra.mxu0 0.0
      %301 = vmatprep.subr.mxu0 0.0
      %302 = vmatpush2.msra.mxu0 0.0
      %303 = vmatprep.subr.mxu0 0.0
      %304 = vmatpush2.msra.mxu0 0.0
      %305 = vmatprep.subr.mxu0 0.0
      %306 = vmatpush2.msra.mxu0 0.0
      %307 = vmatprep.subr.mxu0 0.0
      %308 = vmatpush2.msra.mxu0 0.0
      %309 = vmatprep.subr.mxu0 0.0
      %310 = vmatpush2.msra.mxu0 0.0
      %311 = vmatprep.subr.mxu0 0.0
      %312 = vmatpush2.msra.mxu0 0.0
      %313 = vmatprep.subr.mxu0 0.0
      %314 = vmatpush2.msra.mxu0 0.0
      %315 = vmatprep.subr.mxu0 0.0
      %316 = vmatpush2.msra.mxu0 0.0
      %317 = vmatprep.subr.mxu0 0.0
      %318 = vmatpush2.msra.mxu0 0.0
      %319 = vmatprep.subr.mxu0 0.0
      %320 = vmatpush2.msra.mxu0 0.0
      %321 = vmatprep.mubr.f32.mxu0 0.0
      %322 = vmatmul.mubr.f32.gmra.mxu0 %v255
      %v323 = vpop.f32.mrf.mxu0
      %v324 = vadd.f32 0.0, %v323
      %v325 = vpop.f32.mrf.mxu0
      %326 = vdwg.mxu0
      %s327 = scalar_lea.vmem %s8, 32
      %v328 = vld [vmem:[%s327] sm:$0xff]
      %v329 = vld [vmem:[%s327 + $0x8] sm:$0xff]
      %v330 = vld [vmem:[%s327 + $0x10] sm:$0xff]
      %v331 = vld [vmem:[%s327 + $0x18] sm:$0xff]
      %332 = vmatprep.subr.mxu0 0.0
      %333 = vmatpush1.msra.mxu0 0.0
      %334 = vmatprep.subr.mxu0 0.0
      %335 = vmatpush1.msra.mxu0 0.0
      %336 = vmatprep.subr.mxu0 0.0
      %337 = vmatpush1.msra.mxu0 0.0
      %338 = vmatprep.subr.mxu0 0.0
      %339 = vmatpush1.msra.mxu0 0.0
      %340 = vmatprep.subr.mxu0 0.0
      %341 = vmatpush1.msra.mxu0 0.0
      %342 = vmatprep.subr.mxu0 0.0
      %343 = vmatpush1.msra.mxu0 0.0
      %344 = vmatprep.subr.mxu0 0.0
      %345 = vmatpush1.msra.mxu0 0.0
      %346 = vmatprep.subr.mxu0 0.0
      %347 = vmatpush1.msra.mxu0 0.0
      %348 = vmatprep.subr.mxu0 0.0
      %349 = vmatpush1.msra.mxu0 0.0
      %350 = vmatprep.subr.mxu0 0.0
      %351 = vmatpush1.msra.mxu0 0.0
      %352 = vmatprep.subr.mxu0 0.0
      %353 = vmatpush1.msra.mxu0 0.0
      %354 = vmatprep.subr.mxu0 0.0
      %355 = vmatpush1.msra.mxu0 0.0
      %356 = vmatprep.subr.mxu0 0.0
      %357 = vmatpush1.msra.mxu0 %v331
      %358 = vmatprep.subr.mxu0 0.0
      %359 = vmatpush1.msra.mxu0 %v330
      %360 = vmatprep.subr.mxu0 0.0
      %361 = vmatpush1.msra.mxu0 %v329
      %362 = vmatprep.subr.mxu0 0.0
      %363 = vmatpush1.msra.mxu0 %v328
      %364 = vmatprep.subr.mxu0 0.0
      %365 = vmatpush2.msra.mxu0 0.0
      %366 = vmatprep.subr.mxu0 0.0
      %367 = vmatpush2.msra.mxu0 0.0
      %368 = vmatprep.subr.mxu0 0.0
      %369 = vmatpush2.msra.mxu0 0.0
      %370 = vmatprep.subr.mxu0 0.0
      %371 = vmatpush2.msra.mxu0 0.0
      %372 = vmatprep.subr.mxu0 0.0
      %373 = vmatpush2.msra.mxu0 0.0
      %374 = vmatprep.subr.mxu0 0.0
      %375 = vmatpush2.msra.mxu0 0.0
      %376 = vmatprep.subr.mxu0 0.0
      %377 = vmatpush2.msra.mxu0 0.0
      %378 = vmatprep.subr.mxu0 0.0
      %379 = vmatpush2.msra.mxu0 0.0
      %380 = vmatprep.subr.mxu0 0.0
      %381 = vmatpush2.msra.mxu0 0.0
      %382 = vmatprep.subr.mxu0 0.0
      %383 = vmatpush2.msra.mxu0 0.0
      %384 = vmatprep.subr.mxu0 0.0
      %385 = vmatpush2.msra.mxu0 0.0
      %386 = vmatprep.subr.mxu0 0.0
      %387 = vmatpush2.msra.mxu0 0.0
      %388 = vmatprep.subr.mxu0 0.0
      %389 = vmatpush2.msra.mxu0 0.0
      %390 = vmatprep.subr.mxu0 0.0
      %391 = vmatpush2.msra.mxu0 0.0
      %392 = vmatprep.subr.mxu0 0.0
      %393 = vmatpush2.msra.mxu0 0.0
      %394 = vmatprep.subr.mxu0 0.0
      %395 = vmatpush2.msra.mxu0 0.0
      %396 = vmatprep.mubr.f32.mxu0 0.0
      %397 = vmatmul.mubr.f32.gmra.mxu0 %v255
      %v398 = vpop.f32.mrf.mxu0
      %v399 = vadd.f32 0.0, %v398
      %v400 = vpop.f32.mrf.mxu0
      %401 = vdwg.mxu0
      %s402 = scalar_lea.vmem %s8, 64
      %v403 = vld [vmem:[%s402] sm:$0xff]
      %v404 = vld [vmem:[%s402 + $0x8] sm:$0xff]
      %v405 = vld [vmem:[%s402 + $0x10] sm:$0xff]
      %v406 = vld [vmem:[%s402 + $0x18] sm:$0xff]
      %407 = vmatprep.subr.mxu0 0.0
      %408 = vmatpush1.msra.mxu0 0.0
      %409 = vmatprep.subr.mxu0 0.0
      %410 = vmatpush1.msra.mxu0 0.0
      %411 = vmatprep.subr.mxu0 0.0
      %412 = vmatpush1.msra.mxu0 0.0
      %413 = vmatprep.subr.mxu0 0.0
      %414 = vmatpush1.msra.mxu0 0.0
      %415 = vmatprep.subr.mxu0 0.0
      %416 = vmatpush1.msra.mxu0 0.0
      %417 = vmatprep.subr.mxu0 0.0
      %418 = vmatpush1.msra.mxu0 0.0
      %419 = vmatprep.subr.mxu0 0.0
      %420 = vmatpush1.msra.mxu0 0.0
      %421 = vmatprep.subr.mxu0 0.0
      %422 = vmatpush1.msra.mxu0 0.0
      %423 = vmatprep.subr.mxu0 0.0
      %424 = vmatpush1.msra.mxu0 0.0
      %425 = vmatprep.subr.mxu0 0.0
      %426 = vmatpush1.msra.mxu0 0.0
      %427 = vmatprep.subr.mxu0 0.0
      %428 = vmatpush1.msra.mxu0 0.0
      %429 = vmatprep.subr.mxu0 0.0
      %430 = vmatpush1.msra.mxu0 0.0
      %431 = vmatprep.subr.mxu0 0.0
      %432 = vmatpush1.msra.mxu0 %v406
      %433 = vmatprep.subr.mxu0 0.0
      %434 = vmatpush1.msra.mxu0 %v405
      %435 = vmatprep.subr.mxu0 0.0
      %436 = vmatpush1.msra.mxu0 %v404
      %437 = vmatprep.subr.mxu0 0.0
      %438 = vmatpush1.msra.mxu0 %v403
      %439 = vmatprep.subr.mxu0 0.0
      %440 = vmatpush2.msra.mxu0 0.0
      %441 = vmatprep.subr.mxu0 0.0
      %442 = vmatpush2.msra.mxu0 0.0
      %443 = vmatprep.subr.mxu0 0.0
      %444 = vmatpush2.msra.mxu0 0.0
      %445 = vmatprep.subr.mxu0 0.0
      %446 = vmatpush2.msra.mxu0 0.0
      %447 = vmatprep.subr.mxu0 0.0
      %448 = vmatpush2.msra.mxu0 0.0
      %449 = vmatprep.subr.mxu0 0.0
      %450 = vmatpush2.msra.mxu0 0.0
      %451 = vmatprep.subr.mxu0 0.0
      %452 = vmatpush2.msra.mxu0 0.0
      %453 = vmatprep.subr.mxu0 0.0
      %454 = vmatpush2.msra.mxu0 0.0
      %455 = vmatprep.subr.mxu0 0.0
      %456 = vmatpush2.msra.mxu0 0.0
      %457 = vmatprep.subr.mxu0 0.0
      %458 = vmatpush2.msra.mxu0 0.0
      %459 = vmatprep.subr.mxu0 0.0
      %460 = vmatpush2.msra.mxu0 0.0
      %461 = vmatprep.subr.mxu0 0.0
      %462 = vmatpush2.msra.mxu0 0.0
      %463 = vmatprep.subr.mxu0 0.0
      %464 = vmatpush2.msra.mxu0 0.0
      %465 = vmatprep.subr.mxu0 0.0
      %466 = vmatpush2.msra.mxu0 0.0
      %467 = vmatprep.subr.mxu0 0.0
      %468 = vmatpush2.msra.mxu0 0.0
      %469 = vmatprep.subr.mxu0 0.0
      %470 = vmatpush2.msra.mxu0 0.0
      %471 = vmatprep.mubr.f32.mxu0 0.0
      %472 = vmatmul.mubr.f32.gmra.mxu0 %v255
      %v473 = vpop.f32.mrf.mxu0
      %v474 = vadd.f32 0.0, %v473
      %v475 = vpop.f32.mrf.mxu0
      %476 = vdwg.mxu0
      %v478 = vsel %vm253, %v246, 0
      %480 = vmatprep.subr.mxu0 0.0
      %481 = vmatpush1.msra.mxu0 0.0
      %482 = vmatprep.subr.mxu0 0.0
      %483 = vmatpush1.msra.mxu0 0.0
      %484 = vmatprep.subr.mxu0 0.0
      %485 = vmatpush1.msra.mxu0 0.0
      %486 = vmatprep.subr.mxu0 0.0
      %487 = vmatpush1.msra.mxu0 0.0
      %488 = vmatprep.subr.mxu0 0.0
      %489 = vmatpush1.msra.mxu0 0.0
      %490 = vmatprep.subr.mxu0 0.0
      %491 = vmatpush1.msra.mxu0 0.0
      %492 = vmatprep.subr.mxu0 0.0
      %493 = vmatpush1.msra.mxu0 0.0
      %494 = vmatprep.subr.mxu0 0.0
      %495 = vmatpush1.msra.mxu0 0.0
      %496 = vmatprep.subr.mxu0 0.0
      %497 = vmatpush1.msra.mxu0 0.0
      %498 = vmatprep.subr.mxu0 0.0
      %499 = vmatpush1.msra.mxu0 0.0
      %500 = vmatprep.subr.mxu0 0.0
      %501 = vmatpush1.msra.mxu0 0.0
      %502 = vmatprep.subr.mxu0 0.0
      %503 = vmatpush1.msra.mxu0 0.0
      %504 = vmatprep.subr.mxu0 0.0
      %505 = vmatpush1.msra.mxu0 %v252
      %506 = vmatprep.subr.mxu0 0.0
      %507 = vmatpush1.msra.mxu0 %v251
      %508 = vmatprep.subr.mxu0 0.0
      %509 = vmatpush1.msra.mxu0 %v250
      %510 = vmatprep.subr.mxu0 0.0
      %511 = vmatpush1.msra.mxu0 %v249
      %512 = vmatprep.subr.mxu0 0.0
      %513 = vmatpush2.msra.mxu0 0.0
      %514 = vmatprep.subr.mxu0 0.0
      %515 = vmatpush2.msra.mxu0 0.0
      %516 = vmatprep.subr.mxu0 0.0
      %517 = vmatpush2.msra.mxu0 0.0
      %518 = vmatprep.subr.mxu0 0.0
      %519 = vmatpush2.msra.mxu0 0.0
      %520 = vmatprep.subr.mxu0 0.0
      %521 = vmatpush2.msra.mxu0 0.0
      %522 = vmatprep.subr.mxu0 0.0
      %523 = vmatpush2.msra.mxu0 0.0
      %524 = vmatprep.subr.mxu0 0.0
      %525 = vmatpush2.msra.mxu0 0.0
      %526 = vmatprep.subr.mxu0 0.0
      %527 = vmatpush2.msra.mxu0 0.0
      %528 = vmatprep.subr.mxu0 0.0
      %529 = vmatpush2.msra.mxu0 0.0
      %530 = vmatprep.subr.mxu0 0.0
      %531 = vmatpush2.msra.mxu0 0.0
      %532 = vmatprep.subr.mxu0 0.0
      %533 = vmatpush2.msra.mxu0 0.0
      %534 = vmatprep.subr.mxu0 0.0
      %535 = vmatpush2.msra.mxu0 0.0
      %536 = vmatprep.subr.mxu0 0.0
      %537 = vmatpush2.msra.mxu0 0.0
      %538 = vmatprep.subr.mxu0 0.0
      %539 = vmatpush2.msra.mxu0 0.0
      %540 = vmatprep.subr.mxu0 0.0
      %541 = vmatpush2.msra.mxu0 0.0
      %542 = vmatprep.subr.mxu0 0.0
      %543 = vmatpush2.msra.mxu0 0.0
      %544 = vmatprep.mubr.f32.mxu0 0.0
      %545 = vmatmul.mubr.f32.gmra.mxu0 %v478
      %v546 = vpop.f32.mrf.mxu0
      %v547 = vadd.f32 0.0, %v546
      %v548 = vpop.f32.mrf.mxu0
      %549 = vdwg.mxu0
      %550 = vmatprep.subr.mxu0 0.0
      %551 = vmatpush1.msra.mxu0 0.0
      %552 = vmatprep.subr.mxu0 0.0
      %553 = vmatpush1.msra.mxu0 0.0
      %554 = vmatprep.subr.mxu0 0.0
      %555 = vmatpush1.msra.mxu0 0.0
      %556 = vmatprep.subr.mxu0 0.0
      %557 = vmatpush1.msra.mxu0 0.0
      %558 = vmatprep.subr.mxu0 0.0
      %559 = vmatpush1.msra.mxu0 0.0
      %560 = vmatprep.subr.mxu0 0.0
      %561 = vmatpush1.msra.mxu0 0.0
      %562 = vmatprep.subr.mxu0 0.0
      %563 = vmatpush1.msra.mxu0 0.0
      %564 = vmatprep.subr.mxu0 0.0
      %565 = vmatpush1.msra.mxu0 0.0
      %566 = vmatprep.subr.mxu0 0.0
      %567 = vmatpush1.msra.mxu0 0.0
      %568 = vmatprep.subr.mxu0 0.0
      %569 = vmatpush1.msra.mxu0 0.0
      %570 = vmatprep.subr.mxu0 0.0
      %571 = vmatpush1.msra.mxu0 0.0
      %572 = vmatprep.subr.mxu0 0.0
      %573 = vmatpush1.msra.mxu0 0.0
      %574 = vmatprep.subr.mxu0 0.0
      %575 = vmatpush1.msra.mxu0 %v331
      %576 = vmatprep.subr.mxu0 0.0
      %577 = vmatpush1.msra.mxu0 %v330
      %578 = vmatprep.subr.mxu0 0.0
      %579 = vmatpush1.msra.mxu0 %v329
      %580 = vmatprep.subr.mxu0 0.0
      %581 = vmatpush1.msra.mxu0 %v328
      %582 = vmatprep.subr.mxu0 0.0
      %583 = vmatpush2.msra.mxu0 0.0
      %584 = vmatprep.subr.mxu0 0.0
      %585 = vmatpush2.msra.mxu0 0.0
      %586 = vmatprep.subr.mxu0 0.0
      %587 = vmatpush2.msra.mxu0 0.0
      %588 = vmatprep.subr.mxu0 0.0
      %589 = vmatpush2.msra.mxu0 0.0
      %590 = vmatprep.subr.mxu0 0.0
      %591 = vmatpush2.msra.mxu0 0.0
      %592 = vmatprep.subr.mxu0 0.0
      %593 = vmatpush2.msra.mxu0 0.0
      %594 = vmatprep.subr.mxu0 0.0
      %595 = vmatpush2.msra.mxu0 0.0
      %596 = vmatprep.subr.mxu0 0.0
      %597 = vmatpush2.msra.mxu0 0.0
      %598 = vmatprep.subr.mxu0 0.0
      %599 = vmatpush2.msra.mxu0 0.0
      %600 = vmatprep.subr.mxu0 0.0
      %601 = vmatpush2.msra.mxu0 0.0
      %602 = vmatprep.subr.mxu0 0.0
      %603 = vmatpush2.msra.mxu0 0.0
      %604 = vmatprep.subr.mxu0 0.0
      %605 = vmatpush2.msra.mxu0 0.0
      %606 = vmatprep.subr.mxu0 0.0
      %607 = vmatpush2.msra.mxu0 0.0
      %608 = vmatprep.subr.mxu0 0.0
      %609 = vmatpush2.msra.mxu0 0.0
      %610 = vmatprep.subr.mxu0 0.0
      %611 = vmatpush2.msra.mxu0 0.0
      %612 = vmatprep.subr.mxu0 0.0
      %613 = vmatpush2.msra.mxu0 0.0
      %614 = vmatprep.mubr.f32.mxu0 0.0
      %615 = vmatmul.mubr.f32.gmra.mxu0 %v478
      %v616 = vpop.f32.mrf.mxu0
      %v617 = vadd.f32 0.0, %v616
      %v618 = vpop.f32.mrf.mxu0
      %619 = vdwg.mxu0
      %620 = vmatprep.subr.mxu0 0.0
      %621 = vmatpush1.msra.mxu0 0.0
      %622 = vmatprep.subr.mxu0 0.0
      %623 = vmatpush1.msra.mxu0 0.0
      %624 = vmatprep.subr.mxu0 0.0
      %625 = vmatpush1.msra.mxu0 0.0
      %626 = vmatprep.subr.mxu0 0.0
      %627 = vmatpush1.msra.mxu0 0.0
      %628 = vmatprep.subr.mxu0 0.0
      %629 = vmatpush1.msra.mxu0 0.0
      %630 = vmatprep.subr.mxu0 0.0
      %631 = vmatpush1.msra.mxu0 0.0
      %632 = vmatprep.subr.mxu0 0.0
      %633 = vmatpush1.msra.mxu0 0.0
      %634 = vmatprep.subr.mxu0 0.0
      %635 = vmatpush1.msra.mxu0 0.0
      %636 = vmatprep.subr.mxu0 0.0
      %637 = vmatpush1.msra.mxu0 0.0
      %638 = vmatprep.subr.mxu0 0.0
      %639 = vmatpush1.msra.mxu0 0.0
      %640 = vmatprep.subr.mxu0 0.0
      %641 = vmatpush1.msra.mxu0 0.0
      %642 = vmatprep.subr.mxu0 0.0
      %643 = vmatpush1.msra.mxu0 0.0
      %644 = vmatprep.subr.mxu0 0.0
      %645 = vmatpush1.msra.mxu0 %v406
      %646 = vmatprep.subr.mxu0 0.0
      %647 = vmatpush1.msra.mxu0 %v405
      %648 = vmatprep.subr.mxu0 0.0
      %649 = vmatpush1.msra.mxu0 %v404
      %650 = vmatprep.subr.mxu0 0.0
      %651 = vmatpush1.msra.mxu0 %v403
      %652 = vmatprep.subr.mxu0 0.0
      %653 = vmatpush2.msra.mxu0 0.0
      %654 = vmatprep.subr.mxu0 0.0
      %655 = vmatpush2.msra.mxu0 0.0
      %656 = vmatprep.subr.mxu0 0.0
      %657 = vmatpush2.msra.mxu0 0.0
      %658 = vmatprep.subr.mxu0 0.0
      %659 = vmatpush2.msra.mxu0 0.0
      %660 = vmatprep.subr.mxu0 0.0
      %661 = vmatpush2.msra.mxu0 0.0
      %662 = vmatprep.subr.mxu0 0.0
      %663 = vmatpush2.msra.mxu0 0.0
      %664 = vmatprep.subr.mxu0 0.0
      %665 = vmatpush2.msra.mxu0 0.0
      %666 = vmatprep.subr.mxu0 0.0
      %667 = vmatpush2.msra.mxu0 0.0
      %668 = vmatprep.subr.mxu0 0.0
      %669 = vmatpush2.msra.mxu0 0.0
      %670 = vmatprep.subr.mxu0 0.0
      %671 = vmatpush2.msra.mxu0 0.0
      %672 = vmatprep.subr.mxu0 0.0
      %673 = vmatpush2.msra.mxu0 0.0
      %674 = vmatprep.subr.mxu0 0.0
      %675 = vmatpush2.msra.mxu0 0.0
      %676 = vmatprep.subr.mxu0 0.0
      %677 = vmatpush2.msra.mxu0 0.0
      %678 = vmatprep.subr.mxu0 0.0
      %679 = vmatpush2.msra.mxu0 0.0
      %680 = vmatprep.subr.mxu0 0.0
      %681 = vmatpush2.msra.mxu0 0.0
      %682 = vmatprep.subr.mxu0 0.0
      %683 = vmatpush2.msra.mxu0 0.0
      %684 = vmatprep.mubr.f32.mxu0 0.0
      %685 = vmatmul.mubr.f32.gmra.mxu0 %v478
      %v686 = vpop.f32.mrf.mxu0
      %v687 = vadd.f32 0.0, %v686
      %v688 = vpop.f32.mrf.mxu0
      %689 = vdwg.mxu0
      %v691 = vsel %vm253, %v247, 0
      %693 = vmatprep.subr.mxu0 0.0
      %694 = vmatpush1.msra.mxu0 0.0
      %695 = vmatprep.subr.mxu0 0.0
      %696 = vmatpush1.msra.mxu0 0.0
      %697 = vmatprep.subr.mxu0 0.0
      %698 = vmatpush1.msra.mxu0 0.0
      %699 = vmatprep.subr.mxu0 0.0
      %700 = vmatpush1.msra.mxu0 0.0
      %701 = vmatprep.subr.mxu0 0.0
      %702 = vmatpush1.msra.mxu0 0.0
      %703 = vmatprep.subr.mxu0 0.0
      %704 = vmatpush1.msra.mxu0 0.0
      %705 = vmatprep.subr.mxu0 0.0
      %706 = vmatpush1.msra.mxu0 0.0
      %707 = vmatprep.subr.mxu0 0.0
      %708 = vmatpush1.msra.mxu0 0.0
      %709 = vmatprep.subr.mxu0 0.0
      %710 = vmatpush1.msra.mxu0 0.0
      %711 = vmatprep.subr.mxu0 0.0
      %712 = vmatpush1.msra.mxu0 0.0
      %713 = vmatprep.subr.mxu0 0.0
      %714 = vmatpush1.msra.mxu0 0.0
      %715 = vmatprep.subr.mxu0 0.0
      %716 = vmatpush1.msra.mxu0 0.0
      %717 = vmatprep.subr.mxu0 0.0
      %718 = vmatpush1.msra.mxu0 %v252
      %719 = vmatprep.subr.mxu0 0.0
      %720 = vmatpush1.msra.mxu0 %v251
      %721 = vmatprep.subr.mxu0 0.0
      %722 = vmatpush1.msra.mxu0 %v250
      %723 = vmatprep.subr.mxu0 0.0
      %724 = vmatpush1.msra.mxu0 %v249
      %725 = vmatprep.subr.mxu0 0.0
      %726 = vmatpush2.msra.mxu0 0.0
      %727 = vmatprep.subr.mxu0 0.0
      %728 = vmatpush2.msra.mxu0 0.0
      %729 = vmatprep.subr.mxu0 0.0
      %730 = vmatpush2.msra.mxu0 0.0
      %731 = vmatprep.subr.mxu0 0.0
      %732 = vmatpush2.msra.mxu0 0.0
      %733 = vmatprep.subr.mxu0 0.0
      %734 = vmatpush2.msra.mxu0 0.0
      %735 = vmatprep.subr.mxu0 0.0
      %736 = vmatpush2.msra.mxu0 0.0
      %737 = vmatprep.subr.mxu0 0.0
      %738 = vmatpush2.msra.mxu0 0.0
      %739 = vmatprep.subr.mxu0 0.0
      %740 = vmatpush2.msra.mxu0 0.0
      %741 = vmatprep.subr.mxu0 0.0
      %742 = vmatpush2.msra.mxu0 0.0
      %743 = vmatprep.subr.mxu0 0.0
      %744 = vmatpush2.msra.mxu0 0.0
      %745 = vmatprep.subr.mxu0 0.0
      %746 = vmatpush2.msra.mxu0 0.0
      %747 = vmatprep.subr.mxu0 0.0
      %748 = vmatpush2.msra.mxu0 0.0
      %749 = vmatprep.subr.mxu0 0.0
      %750 = vmatpush2.msra.mxu0 0.0
      %751 = vmatprep.subr.mxu0 0.0
      %752 = vmatpush2.msra.mxu0 0.0
      %753 = vmatprep.subr.mxu0 0.0
      %754 = vmatpush2.msra.mxu0 0.0
      %755 = vmatprep.subr.mxu0 0.0
      %756 = vmatpush2.msra.mxu0 0.0
      %757 = vmatprep.mubr.f32.mxu0 0.0
      %758 = vmatmul.mubr.f32.gmra.mxu0 %v691
      %v759 = vpop.f32.mrf.mxu0
      %v760 = vadd.f32 0.0, %v759
      %v761 = vpop.f32.mrf.mxu0
      %762 = vdwg.mxu0
      %763 = vmatprep.subr.mxu0 0.0
      %764 = vmatpush1.msra.mxu0 0.0
      %765 = vmatprep.subr.mxu0 0.0
      %766 = vmatpush1.msra.mxu0 0.0
      %767 = vmatprep.subr.mxu0 0.0
      %768 = vmatpush1.msra.mxu0 0.0
      %769 = vmatprep.subr.mxu0 0.0
      %770 = vmatpush1.msra.mxu0 0.0
      %771 = vmatprep.subr.mxu0 0.0
      %772 = vmatpush1.msra.mxu0 0.0
      %773 = vmatprep.subr.mxu0 0.0
      %774 = vmatpush1.msra.mxu0 0.0
      %775 = vmatprep.subr.mxu0 0.0
      %776 = vmatpush1.msra.mxu0 0.0
      %777 = vmatprep.subr.mxu0 0.0
      %778 = vmatpush1.msra.mxu0 0.0
      %779 = vmatprep.subr.mxu0 0.0
      %780 = vmatpush1.msra.mxu0 0.0
      %781 = vmatprep.subr.mxu0 0.0
      %782 = vmatpush1.msra.mxu0 0.0
      %783 = vmatprep.subr.mxu0 0.0
      %784 = vmatpush1.msra.mxu0 0.0
      %785 = vmatprep.subr.mxu0 0.0
      %786 = vmatpush1.msra.mxu0 0.0
      %787 = vmatprep.subr.mxu0 0.0
      %788 = vmatpush1.msra.mxu0 %v331
      %789 = vmatprep.subr.mxu0 0.0
      %790 = vmatpush1.msra.mxu0 %v330
      %791 = vmatprep.subr.mxu0 0.0
      %792 = vmatpush1.msra.mxu0 %v329
      %793 = vmatprep.subr.mxu0 0.0
      %794 = vmatpush1.msra.mxu0 %v328
      %795 = vmatprep.subr.mxu0 0.0
      %796 = vmatpush2.msra.mxu0 0.0
      %797 = vmatprep.subr.mxu0 0.0
      %798 = vmatpush2.msra.mxu0 0.0
      %799 = vmatprep.subr.mxu0 0.0
      %800 = vmatpush2.msra.mxu0 0.0
      %801 = vmatprep.subr.mxu0 0.0
      %802 = vmatpush2.msra.mxu0 0.0
      %803 = vmatprep.subr.mxu0 0.0
      %804 = vmatpush2.msra.mxu0 0.0
      %805 = vmatprep.subr.mxu0 0.0
      %806 = vmatpush2.msra.mxu0 0.0
      %807 = vmatprep.subr.mxu0 0.0
      %808 = vmatpush2.msra.mxu0 0.0
      %809 = vmatprep.subr.mxu0 0.0
      %810 = vmatpush2.msra.mxu0 0.0
      %811 = vmatprep.subr.mxu0 0.0
      %812 = vmatpush2.msra.mxu0 0.0
      %813 = vmatprep.subr.mxu0 0.0
      %814 = vmatpush2.msra.mxu0 0.0
      %815 = vmatprep.subr.mxu0 0.0
      %816 = vmatpush2.msra.mxu0 0.0
      %817 = vmatprep.subr.mxu0 0.0
      %818 = vmatpush2.msra.mxu0 0.0
      %819 = vmatprep.subr.mxu0 0.0
      %820 = vmatpush2.msra.mxu0 0.0
      %821 = vmatprep.subr.mxu0 0.0
      %822 = vmatpush2.msra.mxu0 0.0
      %823 = vmatprep.subr.mxu0 0.0
      %824 = vmatpush2.msra.mxu0 0.0
      %825 = vmatprep.subr.mxu0 0.0
      %826 = vmatpush2.msra.mxu0 0.0
      %827 = vmatprep.mubr.f32.mxu0 0.0
      %828 = vmatmul.mubr.f32.gmra.mxu0 %v691
      %v829 = vpop.f32.mrf.mxu0
      %v830 = vadd.f32 0.0, %v829
      %v831 = vpop.f32.mrf.mxu0
      %832 = vdwg.mxu0
      %833 = vmatprep.subr.mxu0 0.0
      %834 = vmatpush1.msra.mxu0 0.0
      %835 = vmatprep.subr.mxu0 0.0
      %836 = vmatpush1.msra.mxu0 0.0
      %837 = vmatprep.subr.mxu0 0.0
      %838 = vmatpush1.msra.mxu0 0.0
      %839 = vmatprep.subr.mxu0 0.0
      %840 = vmatpush1.msra.mxu0 0.0
      %841 = vmatprep.subr.mxu0 0.0
      %842 = vmatpush1.msra.mxu0 0.0
      %843 = vmatprep.subr.mxu0 0.0
      %844 = vmatpush1.msra.mxu0 0.0
      %845 = vmatprep.subr.mxu0 0.0
      %846 = vmatpush1.msra.mxu0 0.0
      %847 = vmatprep.subr.mxu0 0.0
      %848 = vmatpush1.msra.mxu0 0.0
      %849 = vmatprep.subr.mxu0 0.0
      %850 = vmatpush1.msra.mxu0 0.0
      %851 = vmatprep.subr.mxu0 0.0
      %852 = vmatpush1.msra.mxu0 0.0
      %853 = vmatprep.subr.mxu0 0.0
      %854 = vmatpush1.msra.mxu0 0.0
      %855 = vmatprep.subr.mxu0 0.0
      %856 = vmatpush1.msra.mxu0 0.0
      %857 = vmatprep.subr.mxu0 0.0
      %858 = vmatpush1.msra.mxu0 %v406
      %859 = vmatprep.subr.mxu0 0.0
      %860 = vmatpush1.msra.mxu0 %v405
      %861 = vmatprep.subr.mxu0 0.0
      %862 = vmatpush1.msra.mxu0 %v404
      %863 = vmatprep.subr.mxu0 0.0
      %864 = vmatpush1.msra.mxu0 %v403
      %865 = vmatprep.subr.mxu0 0.0
      %866 = vmatpush2.msra.mxu0 0.0
      %867 = vmatprep.subr.mxu0 0.0
      %868 = vmatpush2.msra.mxu0 0.0
      %869 = vmatprep.subr.mxu0 0.0
      %870 = vmatpush2.msra.mxu0 0.0
      %871 = vmatprep.subr.mxu0 0.0
      %872 = vmatpush2.msra.mxu0 0.0
      %873 = vmatprep.subr.mxu0 0.0
      %874 = vmatpush2.msra.mxu0 0.0
      %875 = vmatprep.subr.mxu0 0.0
      %876 = vmatpush2.msra.mxu0 0.0
      %877 = vmatprep.subr.mxu0 0.0
      %878 = vmatpush2.msra.mxu0 0.0
      %879 = vmatprep.subr.mxu0 0.0
      %880 = vmatpush2.msra.mxu0 0.0
      %881 = vmatprep.subr.mxu0 0.0
      %882 = vmatpush2.msra.mxu0 0.0
      %883 = vmatprep.subr.mxu0 0.0
      %884 = vmatpush2.msra.mxu0 0.0
      %885 = vmatprep.subr.mxu0 0.0
      %886 = vmatpush2.msra.mxu0 0.0
      %887 = vmatprep.subr.mxu0 0.0
      %888 = vmatpush2.msra.mxu0 0.0
      %889 = vmatprep.subr.mxu0 0.0
      %890 = vmatpush2.msra.mxu0 0.0
      %891 = vmatprep.subr.mxu0 0.0
      %892 = vmatpush2.msra.mxu0 0.0
      %893 = vmatprep.subr.mxu0 0.0
      %894 = vmatpush2.msra.mxu0 0.0
      %895 = vmatprep.subr.mxu0 0.0
      %896 = vmatpush2.msra.mxu0 0.0
      %897 = vmatprep.mubr.f32.mxu0 0.0
      %898 = vmatmul.mubr.f32.gmra.mxu0 %v691
      %v899 = vpop.f32.mrf.mxu0
      %v900 = vadd.f32 0.0, %v899
      %v901 = vpop.f32.mrf.mxu0
      %902 = vdwg.mxu0
      %v904 = vsel %vm253, %v248, 0
      %906 = vmatprep.subr.mxu0 0.0
      %907 = vmatpush1.msra.mxu0 0.0
      %908 = vmatprep.subr.mxu0 0.0
      %909 = vmatpush1.msra.mxu0 0.0
      %910 = vmatprep.subr.mxu0 0.0
      %911 = vmatpush1.msra.mxu0 0.0
      %912 = vmatprep.subr.mxu0 0.0
      %913 = vmatpush1.msra.mxu0 0.0
      %914 = vmatprep.subr.mxu0 0.0
      %915 = vmatpush1.msra.mxu0 0.0
      %916 = vmatprep.subr.mxu0 0.0
      %917 = vmatpush1.msra.mxu0 0.0
      %918 = vmatprep.subr.mxu0 0.0
      %919 = vmatpush1.msra.mxu0 0.0
      %920 = vmatprep.subr.mxu0 0.0
      %921 = vmatpush1.msra.mxu0 0.0
      %922 = vmatprep.subr.mxu0 0.0
      %923 = vmatpush1.msra.mxu0 0.0
      %924 = vmatprep.subr.mxu0 0.0
      %925 = vmatpush1.msra.mxu0 0.0
      %926 = vmatprep.subr.mxu0 0.0
      %927 = vmatpush1.msra.mxu0 0.0
      %928 = vmatprep.subr.mxu0 0.0
      %929 = vmatpush1.msra.mxu0 0.0
      %930 = vmatprep.subr.mxu0 0.0
      %931 = vmatpush1.msra.mxu0 %v252
      %932 = vmatprep.subr.mxu0 0.0
      %933 = vmatpush1.msra.mxu0 %v251
      %934 = vmatprep.subr.mxu0 0.0
      %935 = vmatpush1.msra.mxu0 %v250
      %936 = vmatprep.subr.mxu0 0.0
      %937 = vmatpush1.msra.mxu0 %v249
      %938 = vmatprep.subr.mxu0 0.0
      %939 = vmatpush2.msra.mxu0 0.0
      %940 = vmatprep.subr.mxu0 0.0
      %941 = vmatpush2.msra.mxu0 0.0
      %942 = vmatprep.subr.mxu0 0.0
      %943 = vmatpush2.msra.mxu0 0.0
      %944 = vmatprep.subr.mxu0 0.0
      %945 = vmatpush2.msra.mxu0 0.0
      %946 = vmatprep.subr.mxu0 0.0
      %947 = vmatpush2.msra.mxu0 0.0
      %948 = vmatprep.subr.mxu0 0.0
      %949 = vmatpush2.msra.mxu0 0.0
      %950 = vmatprep.subr.mxu0 0.0
      %951 = vmatpush2.msra.mxu0 0.0
      %952 = vmatprep.subr.mxu0 0.0
      %953 = vmatpush2.msra.mxu0 0.0
      %954 = vmatprep.subr.mxu0 0.0
      %955 = vmatpush2.msra.mxu0 0.0
      %956 = vmatprep.subr.mxu0 0.0
      %957 = vmatpush2.msra.mxu0 0.0
      %958 = vmatprep.subr.mxu0 0.0
      %959 = vmatpush2.msra.mxu0 0.0
      %960 = vmatprep.subr.mxu0 0.0
      %961 = vmatpush2.msra.mxu0 0.0
      %962 = vmatprep.subr.mxu0 0.0
      %963 = vmatpush2.msra.mxu0 0.0
      %964 = vmatprep.subr.mxu0 0.0
      %965 = vmatpush2.msra.mxu0 0.0
      %966 = vmatprep.subr.mxu0 0.0
      %967 = vmatpush2.msra.mxu0 0.0
      %968 = vmatprep.subr.mxu0 0.0
      %969 = vmatpush2.msra.mxu0 0.0
      %970 = vmatprep.mubr.f32.mxu0 0.0
      %971 = vmatmul.mubr.f32.gmra.mxu0 %v904
      %v972 = vpop.f32.mrf.mxu0
      %v973 = vadd.f32 0.0, %v972
      %v974 = vpop.f32.mrf.mxu0
      %975 = vdwg.mxu0
      %976 = vmatprep.subr.mxu0 0.0
      %977 = vmatpush1.msra.mxu0 0.0
      %978 = vmatprep.subr.mxu0 0.0
      %979 = vmatpush1.msra.mxu0 0.0
      %980 = vmatprep.subr.mxu0 0.0
      %981 = vmatpush1.msra.mxu0 0.0
      %982 = vmatprep.subr.mxu0 0.0
      %983 = vmatpush1.msra.mxu0 0.0
      %984 = vmatprep.subr.mxu0 0.0
      %985 = vmatpush1.msra.mxu0 0.0
      %986 = vmatprep.subr.mxu0 0.0
      %987 = vmatpush1.msra.mxu0 0.0
      %988 = vmatprep.subr.mxu0 0.0
      %989 = vmatpush1.msra.mxu0 0.0
      %990 = vmatprep.subr.mxu0 0.0
      %991 = vmatpush1.msra.mxu0 0.0
      %992 = vmatprep.subr.mxu0 0.0
      %993 = vmatpush1.msra.mxu0 0.0
      %994 = vmatprep.subr.mxu0 0.0
      %995 = vmatpush1.msra.mxu0 0.0
      %996 = vmatprep.subr.mxu0 0.0
      %997 = vmatpush1.msra.mxu0 0.0
      %998 = vmatprep.subr.mxu0 0.0
      %999 = vmatpush1.msra.mxu0 0.0
      %1000 = vmatprep.subr.mxu0 0.0
      %1001 = vmatpush1.msra.mxu0 %v331
      %1002 = vmatprep.subr.mxu0 0.0
      %1003 = vmatpush1.msra.mxu0 %v330
      %1004 = vmatprep.subr.mxu0 0.0
      %1005 = vmatpush1.msra.mxu0 %v329
      %1006 = vmatprep.subr.mxu0 0.0
      %1007 = vmatpush1.msra.mxu0 %v328
      %1008 = vmatprep.subr.mxu0 0.0
      %1009 = vmatpush2.msra.mxu0 0.0
      %1010 = vmatprep.subr.mxu0 0.0
      %1011 = vmatpush2.msra.mxu0 0.0
      %1012 = vmatprep.subr.mxu0 0.0
      %1013 = vmatpush2.msra.mxu0 0.0
      %1014 = vmatprep.subr.mxu0 0.0
      %1015 = vmatpush2.msra.mxu0 0.0
      %1016 = vmatprep.subr.mxu0 0.0
      %1017 = vmatpush2.msra.mxu0 0.0
      %1018 = vmatprep.subr.mxu0 0.0
      %1019 = vmatpush2.msra.mxu0 0.0
      %1020 = vmatprep.subr.mxu0 0.0
      %1021 = vmatpush2.msra.mxu0 0.0
      %1022 = vmatprep.subr.mxu0 0.0
      %1023 = vmatpush2.msra.mxu0 0.0
      %1024 = vmatprep.subr.mxu0 0.0
      %1025 = vmatpush2.msra.mxu0 0.0
      %1026 = vmatprep.subr.mxu0 0.0
      %1027 = vmatpush2.msra.mxu0 0.0
      %1028 = vmatprep.subr.mxu0 0.0
      %1029 = vmatpush2.msra.mxu0 0.0
      %1030 = vmatprep.subr.mxu0 0.0
      %1031 = vmatpush2.msra.mxu0 0.0
      %1032 = vmatprep.subr.mxu0 0.0
      %1033 = vmatpush2.msra.mxu0 0.0
      %1034 = vmatprep.subr.mxu0 0.0
      %1035 = vmatpush2.msra.mxu0 0.0
      %1036 = vmatprep.subr.mxu0 0.0
      %1037 = vmatpush2.msra.mxu0 0.0
      %1038 = vmatprep.subr.mxu0 0.0
      %1039 = vmatpush2.msra.mxu0 0.0
      %1040 = vmatprep.mubr.f32.mxu0 0.0
      %1041 = vmatmul.mubr.f32.gmra.mxu0 %v904
      %v1042 = vpop.f32.mrf.mxu0
      %v1043 = vadd.f32 0.0, %v1042
      %v1044 = vpop.f32.mrf.mxu0
      %1045 = vdwg.mxu0
      %1046 = vmatprep.subr.mxu0 0.0
      %1047 = vmatpush1.msra.mxu0 0.0
      %1048 = vmatprep.subr.mxu0 0.0
      %1049 = vmatpush1.msra.mxu0 0.0
      %1050 = vmatprep.subr.mxu0 0.0
      %1051 = vmatpush1.msra.mxu0 0.0
      %1052 = vmatprep.subr.mxu0 0.0
      %1053 = vmatpush1.msra.mxu0 0.0
      %1054 = vmatprep.subr.mxu0 0.0
      %1055 = vmatpush1.msra.mxu0 0.0
      %1056 = vmatprep.subr.mxu0 0.0
      %1057 = vmatpush1.msra.mxu0 0.0
      %1058 = vmatprep.subr.mxu0 0.0
      %1059 = vmatpush1.msra.mxu0 0.0
      %1060 = vmatprep.subr.mxu0 0.0
      %1061 = vmatpush1.msra.mxu0 0.0
      %1062 = vmatprep.subr.mxu0 0.0
      %1063 = vmatpush1.msra.mxu0 0.0
      %1064 = vmatprep.subr.mxu0 0.0
      %1065 = vmatpush1.msra.mxu0 0.0
      %1066 = vmatprep.subr.mxu0 0.0
      %1067 = vmatpush1.msra.mxu0 0.0
      %1068 = vmatprep.subr.mxu0 0.0
      %1069 = vmatpush1.msra.mxu0 0.0
      %1070 = vmatprep.subr.mxu0 0.0
      %1071 = vmatpush1.msra.mxu0 %v406
      %1072 = vmatprep.subr.mxu0 0.0
      %1073 = vmatpush1.msra.mxu0 %v405
      %1074 = vmatprep.subr.mxu0 0.0
      %1075 = vmatpush1.msra.mxu0 %v404
      %1076 = vmatprep.subr.mxu0 0.0
      %1077 = vmatpush1.msra.mxu0 %v403
      %1078 = vmatprep.subr.mxu0 0.0
      %1079 = vmatpush2.msra.mxu0 0.0
      %1080 = vmatprep.subr.mxu0 0.0
      %1081 = vmatpush2.msra.mxu0 0.0
      %1082 = vmatprep.subr.mxu0 0.0
      %1083 = vmatpush2.msra.mxu0 0.0
      %1084 = vmatprep.subr.mxu0 0.0
      %1085 = vmatpush2.msra.mxu0 0.0
      %1086 = vmatprep.subr.mxu0 0.0
      %1087 = vmatpush2.msra.mxu0 0.0
      %1088 = vmatprep.subr.mxu0 0.0
      %1089 = vmatpush2.msra.mxu0 0.0
      %1090 = vmatprep.subr.mxu0 0.0
      %1091 = vmatpush2.msra.mxu0 0.0
      %1092 = vmatprep.subr.mxu0 0.0
      %1093 = vmatpush2.msra.mxu0 0.0
      %1094 = vmatprep.subr.mxu0 0.0
      %1095 = vmatpush2.msra.mxu0 0.0
      %1096 = vmatprep.subr.mxu0 0.0
      %1097 = vmatpush2.msra.mxu0 0.0
      %1098 = vmatprep.subr.mxu0 0.0
      %1099 = vmatpush2.msra.mxu0 0.0
      %1100 = vmatprep.subr.mxu0 0.0
      %1101 = vmatpush2.msra.mxu0 0.0
      %1102 = vmatprep.subr.mxu0 0.0
      %1103 = vmatpush2.msra.mxu0 0.0
      %1104 = vmatprep.subr.mxu0 0.0
      %1105 = vmatpush2.msra.mxu0 0.0
      %1106 = vmatprep.subr.mxu0 0.0
      %1107 = vmatpush2.msra.mxu0 0.0
      %1108 = vmatprep.subr.mxu0 0.0
      %1109 = vmatpush2.msra.mxu0 0.0
      %1110 = vmatprep.mubr.f32.mxu0 0.0
      %1111 = vmatmul.mubr.f32.gmra.mxu0 %v904
      %v1112 = vpop.f32.mrf.mxu0
      %v1113 = vadd.f32 0.0, %v1112
      %v1114 = vpop.f32.mrf.mxu0
      %1115 = vdwg.mxu0
      %v1117 = vsel %vm253, %v240, 0
      %1119 = vmatprep.subr.mxu0 0.0
      %1120 = vmatpush1.msra.mxu0 0.0
      %1121 = vmatprep.subr.mxu0 0.0
      %1122 = vmatpush1.msra.mxu0 0.0
      %1123 = vmatprep.subr.mxu0 0.0
      %1124 = vmatpush1.msra.mxu0 0.0
      %1125 = vmatprep.subr.mxu0 0.0
      %1126 = vmatpush1.msra.mxu0 0.0
      %1127 = vmatprep.subr.mxu0 0.0
      %1128 = vmatpush1.msra.mxu0 0.0
      %1129 = vmatprep.subr.mxu0 0.0
      %1130 = vmatpush1.msra.mxu0 0.0
      %1131 = vmatprep.subr.mxu0 0.0
      %1132 = vmatpush1.msra.mxu0 0.0
      %1133 = vmatprep.subr.mxu0 0.0
      %1134 = vmatpush1.msra.mxu0 0.0
      %1135 = vmatprep.subr.mxu0 0.0
      %1136 = vmatpush1.msra.mxu0 0.0
      %1137 = vmatprep.subr.mxu0 0.0
      %1138 = vmatpush1.msra.mxu0 0.0
      %1139 = vmatprep.subr.mxu0 0.0
      %1140 = vmatpush1.msra.mxu0 0.0
      %1141 = vmatprep.subr.mxu0 0.0
      %1142 = vmatpush1.msra.mxu0 0.0
      %1143 = vmatprep.subr.mxu0 0.0
      %1144 = vmatpush1.msra.mxu0 %v252
      %1145 = vmatprep.subr.mxu0 0.0
      %1146 = vmatpush1.msra.mxu0 %v251
      %1147 = vmatprep.subr.mxu0 0.0
      %1148 = vmatpush1.msra.mxu0 %v250
      %1149 = vmatprep.subr.mxu0 0.0
      %1150 = vmatpush1.msra.mxu0 %v249
      %1151 = vmatprep.subr.mxu0 0.0
      %1152 = vmatpush2.msra.mxu0 0.0
      %1153 = vmatprep.subr.mxu0 0.0
      %1154 = vmatpush2.msra.mxu0 0.0
      %1155 = vmatprep.subr.mxu0 0.0
      %1156 = vmatpush2.msra.mxu0 0.0
      %1157 = vmatprep.subr.mxu0 0.0
      %1158 = vmatpush2.msra.mxu0 0.0
      %1159 = vmatprep.subr.mxu0 0.0
      %1160 = vmatpush2.msra.mxu0 0.0
      %1161 = vmatprep.subr.mxu0 0.0
      %1162 = vmatpush2.msra.mxu0 0.0
      %1163 = vmatprep.subr.mxu0 0.0
      %1164 = vmatpush2.msra.mxu0 0.0
      %1165 = vmatprep.subr.mxu0 0.0
      %1166 = vmatpush2.msra.mxu0 0.0
      %1167 = vmatprep.subr.mxu0 0.0
      %1168 = vmatpush2.msra.mxu0 0.0
      %1169 = vmatprep.subr.mxu0 0.0
      %1170 = vmatpush2.msra.mxu0 0.0
      %1171 = vmatprep.subr.mxu0 0.0
      %1172 = vmatpush2.msra.mxu0 0.0
      %1173 = vmatprep.subr.mxu0 0.0
      %1174 = vmatpush2.msra.mxu0 0.0
      %1175 = vmatprep.subr.mxu0 0.0
      %1176 = vmatpush2.msra.mxu0 0.0
      %1177 = vmatprep.subr.mxu0 0.0
      %1178 = vmatpush2.msra.mxu0 0.0
      %1179 = vmatprep.subr.mxu0 0.0
      %1180 = vmatpush2.msra.mxu0 0.0
      %1181 = vmatprep.subr.mxu0 0.0
      %1182 = vmatpush2.msra.mxu0 0.0
      %1183 = vmatprep.mubr.f32.mxu0 0.0
      %1184 = vmatmul.mubr.f32.gmra.mxu0 %v1117
      %v1185 = vpop.f32.mrf.mxu0
      %v1186 = vadd.f32 0.0, %v1185
      %v1187 = vpop.f32.mrf.mxu0
      %1188 = vdwg.mxu0
      %1189 = vmatprep.subr.mxu0 0.0
      %1190 = vmatpush1.msra.mxu0 0.0
      %1191 = vmatprep.subr.mxu0 0.0
      %1192 = vmatpush1.msra.mxu0 0.0
      %1193 = vmatprep.subr.mxu0 0.0
      %1194 = vmatpush1.msra.mxu0 0.0
      %1195 = vmatprep.subr.mxu0 0.0
      %1196 = vmatpush1.msra.mxu0 0.0
      %1197 = vmatprep.subr.mxu0 0.0
      %1198 = vmatpush1.msra.mxu0 0.0
      %1199 = vmatprep.subr.mxu0 0.0
      %1200 = vmatpush1.msra.mxu0 0.0
      %1201 = vmatprep.subr.mxu0 0.0
      %1202 = vmatpush1.msra.mxu0 0.0
      %1203 = vmatprep.subr.mxu0 0.0
      %1204 = vmatpush1.msra.mxu0 0.0
      %1205 = vmatprep.subr.mxu0 0.0
      %1206 = vmatpush1.msra.mxu0 0.0
      %1207 = vmatprep.subr.mxu0 0.0
      %1208 = vmatpush1.msra.mxu0 0.0
      %1209 = vmatprep.subr.mxu0 0.0
      %1210 = vmatpush1.msra.mxu0 0.0
      %1211 = vmatprep.subr.mxu0 0.0
      %1212 = vmatpush1.msra.mxu0 0.0
      %1213 = vmatprep.subr.mxu0 0.0
      %1214 = vmatpush1.msra.mxu0 %v331
      %1215 = vmatprep.subr.mxu0 0.0
      %1216 = vmatpush1.msra.mxu0 %v330
      %1217 = vmatprep.subr.mxu0 0.0
      %1218 = vmatpush1.msra.mxu0 %v329
      %1219 = vmatprep.subr.mxu0 0.0
      %1220 = vmatpush1.msra.mxu0 %v328
      %1221 = vmatprep.subr.mxu0 0.0
      %1222 = vmatpush2.msra.mxu0 0.0
      %1223 = vmatprep.subr.mxu0 0.0
      %1224 = vmatpush2.msra.mxu0 0.0
      %1225 = vmatprep.subr.mxu0 0.0
      %1226 = vmatpush2.msra.mxu0 0.0
      %1227 = vmatprep.subr.mxu0 0.0
      %1228 = vmatpush2.msra.mxu0 0.0
      %1229 = vmatprep.subr.mxu0 0.0
      %1230 = vmatpush2.msra.mxu0 0.0
      %1231 = vmatprep.subr.mxu0 0.0
      %1232 = vmatpush2.msra.mxu0 0.0
      %1233 = vmatprep.subr.mxu0 0.0
      %1234 = vmatpush2.msra.mxu0 0.0
      %1235 = vmatprep.subr.mxu0 0.0
      %1236 = vmatpush2.msra.mxu0 0.0
      %1237 = vmatprep.subr.mxu0 0.0
      %1238 = vmatpush2.msra.mxu0 0.0
      %1239 = vmatprep.subr.mxu0 0.0
      %1240 = vmatpush2.msra.mxu0 0.0
      %1241 = vmatprep.subr.mxu0 0.0
      %1242 = vmatpush2.msra.mxu0 0.0
      %1243 = vmatprep.subr.mxu0 0.0
      %1244 = vmatpush2.msra.mxu0 0.0
      %1245 = vmatprep.subr.mxu0 0.0
      %1246 = vmatpush2.msra.mxu0 0.0
      %1247 = vmatprep.subr.mxu0 0.0
      %1248 = vmatpush2.msra.mxu0 0.0
      %1249 = vmatprep.subr.mxu0 0.0
      %1250 = vmatpush2.msra.mxu0 0.0
      %1251 = vmatprep.subr.mxu0 0.0
      %1252 = vmatpush2.msra.mxu0 0.0
      %1253 = vmatprep.mubr.f32.mxu0 0.0
      %1254 = vmatmul.mubr.f32.gmra.mxu0 %v1117
      %v1255 = vpop.f32.mrf.mxu0
      %v1256 = vadd.f32 0.0, %v1255
      %v1257 = vpop.f32.mrf.mxu0
      %1258 = vdwg.mxu0
      %1259 = vmatprep.subr.mxu0 0.0
      %1260 = vmatpush1.msra.mxu0 0.0
      %1261 = vmatprep.subr.mxu0 0.0
      %1262 = vmatpush1.msra.mxu0 0.0
      %1263 = vmatprep.subr.mxu0 0.0
      %1264 = vmatpush1.msra.mxu0 0.0
      %1265 = vmatprep.subr.mxu0 0.0
      %1266 = vmatpush1.msra.mxu0 0.0
      %1267 = vmatprep.subr.mxu0 0.0
      %1268 = vmatpush1.msra.mxu0 0.0
      %1269 = vmatprep.subr.mxu0 0.0
      %1270 = vmatpush1.msra.mxu0 0.0
      %1271 = vmatprep.subr.mxu0 0.0
      %1272 = vmatpush1.msra.mxu0 0.0
      %1273 = vmatprep.subr.mxu0 0.0
      %1274 = vmatpush1.msra.mxu0 0.0
      %1275 = vmatprep.subr.mxu0 0.0
      %1276 = vmatpush1.msra.mxu0 0.0
      %1277 = vmatprep.subr.mxu0 0.0
      %1278 = vmatpush1.msra.mxu0 0.0
      %1279 = vmatprep.subr.mxu0 0.0
      %1280 = vmatpush1.msra.mxu0 0.0
      %1281 = vmatprep.subr.mxu0 0.0
      %1282 = vmatpush1.msra.mxu0 0.0
      %1283 = vmatprep.subr.mxu0 0.0
      %1284 = vmatpush1.msra.mxu0 %v406
      %1285 = vmatprep.subr.mxu0 0.0
      %1286 = vmatpush1.msra.mxu0 %v405
      %1287 = vmatprep.subr.mxu0 0.0
      %1288 = vmatpush1.msra.mxu0 %v404
      %1289 = vmatprep.subr.mxu0 0.0
      %1290 = vmatpush1.msra.mxu0 %v403
      %1291 = vmatprep.subr.mxu0 0.0
      %1292 = vmatpush2.msra.mxu0 0.0
      %1293 = vmatprep.subr.mxu0 0.0
      %1294 = vmatpush2.msra.mxu0 0.0
      %1295 = vmatprep.subr.mxu0 0.0
      %1296 = vmatpush2.msra.mxu0 0.0
      %1297 = vmatprep.subr.mxu0 0.0
      %1298 = vmatpush2.msra.mxu0 0.0
      %1299 = vmatprep.subr.mxu0 0.0
      %1300 = vmatpush2.msra.mxu0 0.0
      %1301 = vmatprep.subr.mxu0 0.0
      %1302 = vmatpush2.msra.mxu0 0.0
      %1303 = vmatprep.subr.mxu0 0.0
      %1304 = vmatpush2.msra.mxu0 0.0
      %1305 = vmatprep.subr.mxu0 0.0
      %1306 = vmatpush2.msra.mxu0 0.0
      %1307 = vmatprep.subr.mxu0 0.0
      %1308 = vmatpush2.msra.mxu0 0.0
      %1309 = vmatprep.subr.mxu0 0.0
      %1310 = vmatpush2.msra.mxu0 0.0
      %1311 = vmatprep.subr.mxu0 0.0
      %1312 = vmatpush2.msra.mxu0 0.0
      %1313 = vmatprep.subr.mxu0 0.0
      %1314 = vmatpush2.msra.mxu0 0.0
      %1315 = vmatprep.subr.mxu0 0.0
      %1316 = vmatpush2.msra.mxu0 0.0
      %1317 = vmatprep.subr.mxu0 0.0
      %1318 = vmatpush2.msra.mxu0 0.0
      %1319 = vmatprep.subr.mxu0 0.0
      %1320 = vmatpush2.msra.mxu0 0.0
      %1321 = vmatprep.subr.mxu0 0.0
      %1322 = vmatpush2.msra.mxu0 0.0
      %1323 = vmatprep.mubr.f32.mxu0 0.0
      %1324 = vmatmul.mubr.f32.gmra.mxu0 %v1117
      %v1325 = vpop.f32.mrf.mxu0
      %v1326 = vadd.f32 0.0, %v1325
      %v1327 = vpop.f32.mrf.mxu0
      %1328 = vdwg.mxu0
      %s1329 = sld [smem:[#allocation3]]
      %v1330 = vstv %s1329
      %v1331 = vmul.f32 %v1330, %v324
      %v1332 = vadd.f32 %v1331, 0.0
      %s1333 = sld [smem:[#allocation3 + $0x1]]
      %v1334 = vstv %s1333
      %v1335 = vmul.f32 %v1334, %v399
      %v1336 = vadd.f32 %v1332, %v1335
      %s1337 = sld [smem:[#allocation3 + $0x2]]
      %v1338 = vstv %s1337
      %v1339 = vmul.f32 %v1338, %v474
      %v1340 = vadd.f32 %v1336, %v1339
      %s1341 = sld [smem:[#allocation3 + $0x3]]
      %v1342 = vstv %s1341
      %v1343 = vmul.f32 %v1342, %v547
      %v1344 = vadd.f32 %v1340, %v1343
      %s1345 = sld [smem:[#allocation3 + $0x4]]
      %v1346 = vstv %s1345
      %v1347 = vmul.f32 %v1346, %v617
      %v1348 = vadd.f32 %v1344, %v1347
      %s1349 = sld [smem:[#allocation3 + $0x5]]
      %v1350 = vstv %s1349
      %v1351 = vmul.f32 %v1350, %v687
      %v1352 = vadd.f32 %v1348, %v1351
      %s1353 = sld [smem:[#allocation3 + $0x6]]
      %v1354 = vstv %s1353
      %v1355 = vmul.f32 %v1354, %v760
      %v1356 = vadd.f32 %v1352, %v1355
      %s1357 = sld [smem:[#allocation3 + $0x7]]
      %v1358 = vstv %s1357
      %v1359 = vmul.f32 %v1358, %v830
      %v1360 = vadd.f32 %v1356, %v1359
      %s1361 = sld [smem:[#allocation3 + $0x8]]
      %v1362 = vstv %s1361
      %v1363 = vmul.f32 %v1362, %v900
      %v1364 = vadd.f32 %v1360, %v1363
      %s1365 = sld [smem:[#allocation3 + $0x9]]
      %v1366 = vstv %s1365
      %v1367 = vmul.f32 %v1366, %v973
      %v1368 = vadd.f32 %v1364, %v1367
      %s1369 = sld [smem:[#allocation3 + $0xa]]
      %v1370 = vstv %s1369
      %v1371 = vmul.f32 %v1370, %v1043
      %v1372 = vadd.f32 %v1368, %v1371
      %s1373 = sld [smem:[#allocation3 + $0xb]]
      %v1374 = vstv %s1373
      %v1375 = vmul.f32 %v1374, %v1113
      %v1376 = vadd.f32 %v1372, %v1375
      %s1377 = sld [smem:[#allocation3 + $0xc]]
      %v1378 = vstv %s1377
      %v1379 = vmul.f32 %v1378, %v1186
      %v1380 = vadd.f32 %v1376, %v1379
      %s1381 = sld [smem:[#allocation3 + $0xd]]
      %v1382 = vstv %s1381
      %v1383 = vmul.f32 %v1382, %v1256
      %v1384 = vadd.f32 %v1380, %v1383
      %s1385 = sld [smem:[#allocation3 + $0xe]]
      %v1386 = vstv %s1385
      %v1387 = vmul.f32 %v1386, %v1326
      %v1388 = vadd.f32 %v1384, %v1387
      %s1389 = sld [smem:[#allocation6]]
      %v1390 = vstv %s1389
      %v1391 = vadd.f32 %v1388, %v1390
      %v1392 = vmax.f32 %v1391, 0.0
      %v1393 = vld [vmem:[%s11] sm:$0xff]
      %v1394 = vld [vmem:[%s11 + $0x8] sm:$0xff]
      %v1395 = vld [vmem:[%s11 + $0x10] sm:$0xff]
      %v1396 = vld [vmem:[%s11 + $0x18] sm:$0xff]
      %s1397 = sld [smem:[#allocation3 + $0x80]]
      %v1398 = vstv %s1397
      %v1399 = vmul.f32 %v1398, %v324
      %v1400 = vadd.f32 %v1399, 0.0
      %s1401 = sld [smem:[#allocation3 + $0x81]]
      %v1402 = vstv %s1401
      %v1403 = vmul.f32 %v1402, %v399
      %v1404 = vadd.f32 %v1400, %v1403
      %s1405 = sld [smem:[#allocation3 + $0x82]]
      %v1406 = vstv %s1405
      %v1407 = vmul.f32 %v1406, %v474
      %v1408 = vadd.f32 %v1404, %v1407
      %s1409 = sld [smem:[#allocation3 + $0x83]]
      %v1410 = vstv %s1409
      %v1411 = vmul.f32 %v1410, %v547
      %v1412 = vadd.f32 %v1408, %v1411
      %s1413 = sld [smem:[#allocation3 + $0x84]]
      %v1414 = vstv %s1413
      %v1415 = vmul.f32 %v1414, %v617
      %v1416 = vadd.f32 %v1412, %v1415
      %s1417 = sld [smem:[#allocation3 + $0x85]]
      %v1418 = vstv %s1417
      %v1419 = vmul.f32 %v1418, %v687
      %v1420 = vadd.f32 %v1416, %v1419
      %s1421 = sld [smem:[#allocation3 + $0x86]]
      %v1422 = vstv %s1421
      %v1423 = vmul.f32 %v1422, %v760
      %v1424 = vadd.f32 %v1420, %v1423
      %s1425 = sld [smem:[#allocation3 + $0x87]]
      %v1426 = vstv %s1425
      %v1427 = vmul.f32 %v1426, %v830
      %v1428 = vadd.f32 %v1424, %v1427
      %s1429 = sld [smem:[#allocation3 + $0x88]]
      %v1430 = vstv %s1429
      %v1431 = vmul.f32 %v1430, %v900
      %v1432 = vadd.f32 %v1428, %v1431
      %s1433 = sld [smem:[#allocation3 + $0x89]]
      %v1434 = vstv %s1433
      %v1435 = vmul.f32 %v1434, %v973
      %v1436 = vadd.f32 %v1432, %v1435
      %s1437 = sld [smem:[#allocation3 + $0x8a]]
      %v1438 = vstv %s1437
      %v1439 = vmul.f32 %v1438, %v1043
      %v1440 = vadd.f32 %v1436, %v1439
      %s1441 = sld [smem:[#allocation3 + $0x8b]]
      %v1442 = vstv %s1441
      %v1443 = vmul.f32 %v1442, %v1113
      %v1444 = vadd.f32 %v1440, %v1443
      %s1445 = sld [smem:[#allocation3 + $0x8c]]
      %v1446 = vstv %s1445
      %v1447 = vmul.f32 %v1446, %v1186
      %v1448 = vadd.f32 %v1444, %v1447
      %s1449 = sld [smem:[#allocation3 + $0x8d]]
      %v1450 = vstv %s1449
      %v1451 = vmul.f32 %v1450, %v1256
      %v1452 = vadd.f32 %v1448, %v1451
      %s1453 = sld [smem:[#allocation3 + $0x8e]]
      %v1454 = vstv %s1453
      %v1455 = vmul.f32 %v1454, %v1326
      %v1456 = vadd.f32 %v1452, %v1455
      %s1457 = sld [smem:[#allocation6 + $0x1]]
      %v1458 = vstv %s1457
      %v1459 = vadd.f32 %v1456, %v1458
      %v1460 = vmax.f32 %v1459, 0.0
      %s1461 = scalar_lea.vmem %s11, 32
      %v1462 = vld [vmem:[%s1461] sm:$0xff]
      %v1463 = vld [vmem:[%s1461 + $0x8] sm:$0xff]
      %v1464 = vld [vmem:[%s1461 + $0x10] sm:$0xff]
      %v1465 = vld [vmem:[%s1461 + $0x18] sm:$0xff]
      %v1467 = vsel %vm253, %v1460, 0
      %1469 = vmatprep.subr.mxu0 0.0
      %1470 = vmatpush1.msra.mxu0 0.0
      %1471 = vmatprep.subr.mxu0 0.0
      %1472 = vmatpush1.msra.mxu0 0.0
      %1473 = vmatprep.subr.mxu0 0.0
      %1474 = vmatpush1.msra.mxu0 0.0
      %1475 = vmatprep.subr.mxu0 0.0
      %1476 = vmatpush1.msra.mxu0 0.0
      %1477 = vmatprep.subr.mxu0 0.0
      %1478 = vmatpush1.msra.mxu0 0.0
      %1479 = vmatprep.subr.mxu0 0.0
      %1480 = vmatpush1.msra.mxu0 0.0
      %1481 = vmatprep.subr.mxu0 0.0
      %1482 = vmatpush1.msra.mxu0 0.0
      %1483 = vmatprep.subr.mxu0 0.0
      %1484 = vmatpush1.msra.mxu0 0.0
      %1485 = vmatprep.subr.mxu0 0.0
      %1486 = vmatpush1.msra.mxu0 0.0
      %1487 = vmatprep.subr.mxu0 0.0
      %1488 = vmatpush1.msra.mxu0 0.0
      %1489 = vmatprep.subr.mxu0 0.0
      %1490 = vmatpush1.msra.mxu0 0.0
      %1491 = vmatprep.subr.mxu0 0.0
      %1492 = vmatpush1.msra.mxu0 0.0
      %1493 = vmatprep.subr.mxu0 0.0
      %1494 = vmatpush1.msra.mxu0 %v1465
      %1495 = vmatprep.subr.mxu0 0.0
      %1496 = vmatpush1.msra.mxu0 %v1464
      %1497 = vmatprep.subr.mxu0 0.0
      %1498 = vmatpush1.msra.mxu0 %v1463
      %1499 = vmatprep.subr.mxu0 0.0
      %1500 = vmatpush1.msra.mxu0 %v1462
      %1501 = vmatprep.subr.mxu0 0.0
      %1502 = vmatpush2.msra.mxu0 0.0
      %1503 = vmatprep.subr.mxu0 0.0
      %1504 = vmatpush2.msra.mxu0 0.0
      %1505 = vmatprep.subr.mxu0 0.0
      %1506 = vmatpush2.msra.mxu0 0.0
      %1507 = vmatprep.subr.mxu0 0.0
      %1508 = vmatpush2.msra.mxu0 0.0
      %1509 = vmatprep.subr.mxu0 0.0
      %1510 = vmatpush2.msra.mxu0 0.0
      %1511 = vmatprep.subr.mxu0 0.0
      %1512 = vmatpush2.msra.mxu0 0.0
      %1513 = vmatprep.subr.mxu0 0.0
      %1514 = vmatpush2.msra.mxu0 0.0
      %1515 = vmatprep.subr.mxu0 0.0
      %1516 = vmatpush2.msra.mxu0 0.0
      %1517 = vmatprep.subr.mxu0 0.0
      %1518 = vmatpush2.msra.mxu0 0.0
      %1519 = vmatprep.subr.mxu0 0.0
      %1520 = vmatpush2.msra.mxu0 0.0
      %1521 = vmatprep.subr.mxu0 0.0
      %1522 = vmatpush2.msra.mxu0 0.0
      %1523 = vmatprep.subr.mxu0 0.0
      %1524 = vmatpush2.msra.mxu0 0.0
      %1525 = vmatprep.subr.mxu0 0.0
      %1526 = vmatpush2.msra.mxu0 0.0
      %1527 = vmatprep.subr.mxu0 0.0
      %1528 = vmatpush2.msra.mxu0 0.0
      %1529 = vmatprep.subr.mxu0 0.0
      %1530 = vmatpush2.msra.mxu0 0.0
      %1531 = vmatprep.subr.mxu0 0.0
      %1532 = vmatpush2.msra.mxu0 0.0
      %1533 = vmatprep.mubr.f32.mxu0 0.0
      %1534 = vmatmul.mubr.f32.gmra.mxu0 %v1467
      %v1535 = vpop.f32.mrf.mxu0
      %v1536 = vadd.f32 0.0, %v1535
      %v1537 = vpop.f32.mrf.mxu0
      %1538 = vdwg.mxu0
      %v1540 = vsel %vm253, %v1392, 0
      %1542 = vmatprep.subr.mxu0 0.0
      %1543 = vmatpush1.msra.mxu0 0.0
      %1544 = vmatprep.subr.mxu0 0.0
      %1545 = vmatpush1.msra.mxu0 0.0
      %1546 = vmatprep.subr.mxu0 0.0
      %1547 = vmatpush1.msra.mxu0 0.0
      %1548 = vmatprep.subr.mxu0 0.0
      %1549 = vmatpush1.msra.mxu0 0.0
      %1550 = vmatprep.subr.mxu0 0.0
      %1551 = vmatpush1.msra.mxu0 0.0
      %1552 = vmatprep.subr.mxu0 0.0
      %1553 = vmatpush1.msra.mxu0 0.0
      %1554 = vmatprep.subr.mxu0 0.0
      %1555 = vmatpush1.msra.mxu0 0.0
      %1556 = vmatprep.subr.mxu0 0.0
      %1557 = vmatpush1.msra.mxu0 0.0
      %1558 = vmatprep.subr.mxu0 0.0
      %1559 = vmatpush1.msra.mxu0 0.0
      %1560 = vmatprep.subr.mxu0 0.0
      %1561 = vmatpush1.msra.mxu0 0.0
      %1562 = vmatprep.subr.mxu0 0.0
      %1563 = vmatpush1.msra.mxu0 0.0
      %1564 = vmatprep.subr.mxu0 0.0
      %1565 = vmatpush1.msra.mxu0 0.0
      %1566 = vmatprep.subr.mxu0 0.0
      %1567 = vmatpush1.msra.mxu0 %v1396
      %1568 = vmatprep.subr.mxu0 0.0
      %1569 = vmatpush1.msra.mxu0 %v1395
      %1570 = vmatprep.subr.mxu0 0.0
      %1571 = vmatpush1.msra.mxu0 %v1394
      %1572 = vmatprep.subr.mxu0 0.0
      %1573 = vmatpush1.msra.mxu0 %v1393
      %1574 = vmatprep.subr.mxu0 0.0
      %1575 = vmatpush2.msra.mxu0 0.0
      %1576 = vmatprep.subr.mxu0 0.0
      %1577 = vmatpush2.msra.mxu0 0.0
      %1578 = vmatprep.subr.mxu0 0.0
      %1579 = vmatpush2.msra.mxu0 0.0
      %1580 = vmatprep.subr.mxu0 0.0
      %1581 = vmatpush2.msra.mxu0 0.0
      %1582 = vmatprep.subr.mxu0 0.0
      %1583 = vmatpush2.msra.mxu0 0.0
      %1584 = vmatprep.subr.mxu0 0.0
      %1585 = vmatpush2.msra.mxu0 0.0
      %1586 = vmatprep.subr.mxu0 0.0
      %1587 = vmatpush2.msra.mxu0 0.0
      %1588 = vmatprep.subr.mxu0 0.0
      %1589 = vmatpush2.msra.mxu0 0.0
      %1590 = vmatprep.subr.mxu0 0.0
      %1591 = vmatpush2.msra.mxu0 0.0
      %1592 = vmatprep.subr.mxu0 0.0
      %1593 = vmatpush2.msra.mxu0 0.0
      %1594 = vmatprep.subr.mxu0 0.0
      %1595 = vmatpush2.msra.mxu0 0.0
      %1596 = vmatprep.subr.mxu0 0.0
      %1597 = vmatpush2.msra.mxu0 0.0
      %1598 = vmatprep.subr.mxu0 0.0
      %1599 = vmatpush2.msra.mxu0 0.0
      %1600 = vmatprep.subr.mxu0 0.0
      %1601 = vmatpush2.msra.mxu0 0.0
      %1602 = vmatprep.subr.mxu0 0.0
      %1603 = vmatpush2.msra.mxu0 0.0
      %1604 = vmatprep.subr.mxu0 0.0
      %1605 = vmatpush2.msra.mxu0 0.0
      %1606 = vmatprep.mubr.f32.mxu0 0.0
      %1607 = vmatmul.mubr.f32.gmra.mxu0 %v1540
      %v1608 = vpop.f32.mrf.mxu0
      %v1609 = vadd.f32 %v1536, %v1608
      %v1610 = vpop.f32.mrf.mxu0
      %1611 = vdwg.mxu0
      %s1612 = sld [smem:[#allocation3 + $0x100]]
      %v1613 = vstv %s1612
      %v1614 = vmul.f32 %v1613, %v324
      %v1615 = vadd.f32 %v1614, 0.0
      %s1616 = sld [smem:[#allocation3 + $0x101]]
      %v1617 = vstv %s1616
      %v1618 = vmul.f32 %v1617, %v399
      %v1619 = vadd.f32 %v1615, %v1618
      %s1620 = sld [smem:[#allocation3 + $0x102]]
      %v1621 = vstv %s1620
      %v1622 = vmul.f32 %v1621, %v474
      %v1623 = vadd.f32 %v1619, %v1622
      %s1624 = sld [smem:[#allocation3 + $0x103]]
      %v1625 = vstv %s1624
      %v1626 = vmul.f32 %v1625, %v547
      %v1627 = vadd.f32 %v1623, %v1626
      %s1628 = sld [smem:[#allocation3 + $0x104]]
      %v1629 = vstv %s1628
      %v1630 = vmul.f32 %v1629, %v617
      %v1631 = vadd.f32 %v1627, %v1630
      %s1632 = sld [smem:[#allocation3 + $0x105]]
      %v1633 = vstv %s1632
      %v1634 = vmul.f32 %v1633, %v687
      %v1635 = vadd.f32 %v1631, %v1634
      %s1636 = sld [smem:[#allocation3 + $0x106]]
      %v1637 = vstv %s1636
      %v1638 = vmul.f32 %v1637, %v760
      %v1639 = vadd.f32 %v1635, %v1638
      %s1640 = sld [smem:[#allocation3 + $0x107]]
      %v1641 = vstv %s1640
      %v1642 = vmul.f32 %v1641, %v830
      %v1643 = vadd.f32 %v1639, %v1642
      %s1644 = sld [smem:[#allocation3 + $0x108]]
      %v1645 = vstv %s1644
      %v1646 = vmul.f32 %v1645, %v900
      %v1647 = vadd.f32 %v1643, %v1646
      %s1648 = sld [smem:[#allocation3 + $0x109]]
      %v1649 = vstv %s1648
      %v1650 = vmul.f32 %v1649, %v973
      %v1651 = vadd.f32 %v1647, %v1650
      %s1652 = sld [smem:[#allocation3 + $0x10a]]
      %v1653 = vstv %s1652
      %v1654 = vmul.f32 %v1653, %v1043
      %v1655 = vadd.f32 %v1651, %v1654
      %s1656 = sld [smem:[#allocation3 + $0x10b]]
      %v1657 = vstv %s1656
      %v1658 = vmul.f32 %v1657, %v1113
      %v1659 = vadd.f32 %v1655, %v1658
      %s1660 = sld [smem:[#allocation3 + $0x10c]]
      %v1661 = vstv %s1660
      %v1662 = vmul.f32 %v1661, %v1186
      %v1663 = vadd.f32 %v1659, %v1662
      %s1664 = sld [smem:[#allocation3 + $0x10d]]
      %v1665 = vstv %s1664
      %v1666 = vmul.f32 %v1665, %v1256
      %v1667 = vadd.f32 %v1663, %v1666
      %s1668 = sld [smem:[#allocation3 + $0x10e]]
      %v1669 = vstv %s1668
      %v1670 = vmul.f32 %v1669, %v1326
      %v1671 = vadd.f32 %v1667, %v1670
      %s1672 = sld [smem:[#allocation6 + $0x2]]
      %v1673 = vstv %s1672
      %v1674 = vadd.f32 %v1671, %v1673
      %v1675 = vmax.f32 %v1674, 0.0
      %s1676 = scalar_lea.vmem %s11, 64
      %v1677 = vld [vmem:[%s1676] sm:$0xff]
      %v1678 = vld [vmem:[%s1676 + $0x8] sm:$0xff]
      %v1679 = vld [vmem:[%s1676 + $0x10] sm:$0xff]
      %v1680 = vld [vmem:[%s1676 + $0x18] sm:$0xff]
      %v1682 = vsel %vm253, %v1675, 0
      %1684 = vmatprep.subr.mxu0 0.0
      %1685 = vmatpush1.msra.mxu0 0.0
      %1686 = vmatprep.subr.mxu0 0.0
      %1687 = vmatpush1.msra.mxu0 0.0
      %1688 = vmatprep.subr.mxu0 0.0
      %1689 = vmatpush1.msra.mxu0 0.0
      %1690 = vmatprep.subr.mxu0 0.0
      %1691 = vmatpush1.msra.mxu0 0.0
      %1692 = vmatprep.subr.mxu0 0.0
      %1693 = vmatpush1.msra.mxu0 0.0
      %1694 = vmatprep.subr.mxu0 0.0
      %1695 = vmatpush1.msra.mxu0 0.0
      %1696 = vmatprep.subr.mxu0 0.0
      %1697 = vmatpush1.msra.mxu0 0.0
      %1698 = vmatprep.subr.mxu0 0.0
      %1699 = vmatpush1.msra.mxu0 0.0
      %1700 = vmatprep.subr.mxu0 0.0
      %1701 = vmatpush1.msra.mxu0 0.0
      %1702 = vmatprep.subr.mxu0 0.0
      %1703 = vmatpush1.msra.mxu0 0.0
      %1704 = vmatprep.subr.mxu0 0.0
      %1705 = vmatpush1.msra.mxu0 0.0
      %1706 = vmatprep.subr.mxu0 0.0
      %1707 = vmatpush1.msra.mxu0 0.0
      %1708 = vmatprep.subr.mxu0 0.0
      %1709 = vmatpush1.msra.mxu0 %v1680
      %1710 = vmatprep.subr.mxu0 0.0
      %1711 = vmatpush1.msra.mxu0 %v1679
      %1712 = vmatprep.subr.mxu0 0.0
      %1713 = vmatpush1.msra.mxu0 %v1678
      %1714 = vmatprep.subr.mxu0 0.0
      %1715 = vmatpush1.msra.mxu0 %v1677
      %1716 = vmatprep.subr.mxu0 0.0
      %1717 = vmatpush2.msra.mxu0 0.0
      %1718 = vmatprep.subr.mxu0 0.0
      %1719 = vmatpush2.msra.mxu0 0.0
      %1720 = vmatprep.subr.mxu0 0.0
      %1721 = vmatpush2.msra.mxu0 0.0
      %1722 = vmatprep.subr.mxu0 0.0
      %1723 = vmatpush2.msra.mxu0 0.0
      %1724 = vmatprep.subr.mxu0 0.0
      %1725 = vmatpush2.msra.mxu0 0.0
      %1726 = vmatprep.subr.mxu0 0.0
      %1727 = vmatpush2.msra.mxu0 0.0
      %1728 = vmatprep.subr.mxu0 0.0
      %1729 = vmatpush2.msra.mxu0 0.0
      %1730 = vmatprep.subr.mxu0 0.0
      %1731 = vmatpush2.msra.mxu0 0.0
      %1732 = vmatprep.subr.mxu0 0.0
      %1733 = vmatpush2.msra.mxu0 0.0
      %1734 = vmatprep.subr.mxu0 0.0
      %1735 = vmatpush2.msra.mxu0 0.0
      %1736 = vmatprep.subr.mxu0 0.0
      %1737 = vmatpush2.msra.mxu0 0.0
      %1738 = vmatprep.subr.mxu0 0.0
      %1739 = vmatpush2.msra.mxu0 0.0
      %1740 = vmatprep.subr.mxu0 0.0
      %1741 = vmatpush2.msra.mxu0 0.0
      %1742 = vmatprep.subr.mxu0 0.0
      %1743 = vmatpush2.msra.mxu0 0.0
      %1744 = vmatprep.subr.mxu0 0.0
      %1745 = vmatpush2.msra.mxu0 0.0
      %1746 = vmatprep.subr.mxu0 0.0
      %1747 = vmatpush2.msra.mxu0 0.0
      %1748 = vmatprep.mubr.f32.mxu0 0.0
      %1749 = vmatmul.mubr.f32.gmra.mxu0 %v1682
      %v1750 = vpop.f32.mrf.mxu0
      %v1751 = vadd.f32 0.0, %v1750
      %v1752 = vpop.f32.mrf.mxu0
      %1753 = vdwg.mxu0
      %v1754 = vadd.f32 %v1609, %v1751
      %s1755 = sld [smem:[#allocation3 + $0x180]]
      %v1756 = vstv %s1755
      %v1757 = vmul.f32 %v1756, %v324
      %v1758 = vadd.f32 %v1757, 0.0
      %s1759 = sld [smem:[#allocation3 + $0x181]]
      %v1760 = vstv %s1759
      %v1761 = vmul.f32 %v1760, %v399
      %v1762 = vadd.f32 %v1758, %v1761
      %s1763 = sld [smem:[#allocation3 + $0x182]]
      %v1764 = vstv %s1763
      %v1765 = vmul.f32 %v1764, %v474
      %v1766 = vadd.f32 %v1762, %v1765
      %s1767 = sld [smem:[#allocation3 + $0x183]]
      %v1768 = vstv %s1767
      %v1769 = vmul.f32 %v1768, %v547
      %v1770 = vadd.f32 %v1766, %v1769
      %s1771 = sld [smem:[#allocation3 + $0x184]]
      %v1772 = vstv %s1771
      %v1773 = vmul.f32 %v1772, %v617
      %v1774 = vadd.f32 %v1770, %v1773
      %s1775 = sld [smem:[#allocation3 + $0x185]]
      %v1776 = vstv %s1775
      %v1777 = vmul.f32 %v1776, %v687
      %v1778 = vadd.f32 %v1774, %v1777
      %s1779 = sld [smem:[#allocation3 + $0x186]]
      %v1780 = vstv %s1779
      %v1781 = vmul.f32 %v1780, %v760
      %v1782 = vadd.f32 %v1778, %v1781
      %s1783 = sld [smem:[#allocation3 + $0x187]]
      %v1784 = vstv %s1783
      %v1785 = vmul.f32 %v1784, %v830
      %v1786 = vadd.f32 %v1782, %v1785
      %s1787 = sld [smem:[#allocation3 + $0x188]]
      %v1788 = vstv %s1787
      %v1789 = vmul.f32 %v1788, %v900
      %v1790 = vadd.f32 %v1786, %v1789
      %s1791 = sld [smem:[#allocation3 + $0x189]]
      %v1792 = vstv %s1791
      %v1793 = vmul.f32 %v1792, %v973
      %v1794 = vadd.f32 %v1790, %v1793
      %s1795 = sld [smem:[#allocation3 + $0x18a]]
      %v1796 = vstv %s1795
      %v1797 = vmul.f32 %v1796, %v1043
      %v1798 = vadd.f32 %v1794, %v1797
      %s1799 = sld [smem:[#allocation3 + $0x18b]]
      %v1800 = vstv %s1799
      %v1801 = vmul.f32 %v1800, %v1113
      %v1802 = vadd.f32 %v1798, %v1801
      %s1803 = sld [smem:[#allocation3 + $0x18c]]
      %v1804 = vstv %s1803
      %v1805 = vmul.f32 %v1804, %v1186
      %v1806 = vadd.f32 %v1802, %v1805
      %s1807 = sld [smem:[#allocation3 + $0x18d]]
      %v1808 = vstv %s1807
      %v1809 = vmul.f32 %v1808, %v1256
      %v1810 = vadd.f32 %v1806, %v1809
      %s1811 = sld [smem:[#allocation3 + $0x18e]]
      %v1812 = vstv %s1811
      %v1813 = vmul.f32 %v1812, %v1326
      %v1814 = vadd.f32 %v1810, %v1813
      %s1815 = sld [smem:[#allocation6 + $0x3]]
      %v1816 = vstv %s1815
      %v1817 = vadd.f32 %v1814, %v1816
      %v1818 = vmax.f32 %v1817, 0.0
      %s1819 = scalar_lea.vmem %s11, 96
      %v1820 = vld [vmem:[%s1819] sm:$0xff]
      %v1821 = vld [vmem:[%s1819 + $0x8] sm:$0xff]
      %v1822 = vld [vmem:[%s1819 + $0x10] sm:$0xff]
      %v1823 = vld [vmem:[%s1819 + $0x18] sm:$0xff]
      %v1825 = vsel %vm253, %v1818, 0
      %1827 = vmatprep.subr.mxu0 0.0
      %1828 = vmatpush1.msra.mxu0 0.0
      %1829 = vmatprep.subr.mxu0 0.0
      %1830 = vmatpush1.msra.mxu0 0.0
      %1831 = vmatprep.subr.mxu0 0.0
      %1832 = vmatpush1.msra.mxu0 0.0
      %1833 = vmatprep.subr.mxu0 0.0
      %1834 = vmatpush1.msra.mxu0 0.0
      %1835 = vmatprep.subr.mxu0 0.0
      %1836 = vmatpush1.msra.mxu0 0.0
      %1837 = vmatprep.subr.mxu0 0.0
      %1838 = vmatpush1.msra.mxu0 0.0
      %1839 = vmatprep.subr.mxu0 0.0
      %1840 = vmatpush1.msra.mxu0 0.0
      %1841 = vmatprep.subr.mxu0 0.0
      %1842 = vmatpush1.msra.mxu0 0.0
      %1843 = vmatprep.subr.mxu0 0.0
      %1844 = vmatpush1.msra.mxu0 0.0
      %1845 = vmatprep.subr.mxu0 0.0
      %1846 = vmatpush1.msra.mxu0 0.0
      %1847 = vmatprep.subr.mxu0 0.0
      %1848 = vmatpush1.msra.mxu0 0.0
      %1849 = vmatprep.subr.mxu0 0.0
      %1850 = vmatpush1.msra.mxu0 0.0
      %1851 = vmatprep.subr.mxu0 0.0
      %1852 = vmatpush1.msra.mxu0 %v1823
      %1853 = vmatprep.subr.mxu0 0.0
      %1854 = vmatpush1.msra.mxu0 %v1822
      %1855 = vmatprep.subr.mxu0 0.0
      %1856 = vmatpush1.msra.mxu0 %v1821
      %1857 = vmatprep.subr.mxu0 0.0
      %1858 = vmatpush1.msra.mxu0 %v1820
      %1859 = vmatprep.subr.mxu0 0.0
      %1860 = vmatpush2.msra.mxu0 0.0
      %1861 = vmatprep.subr.mxu0 0.0
      %1862 = vmatpush2.msra.mxu0 0.0
      %1863 = vmatprep.subr.mxu0 0.0
      %1864 = vmatpush2.msra.mxu0 0.0
      %1865 = vmatprep.subr.mxu0 0.0
      %1866 = vmatpush2.msra.mxu0 0.0
      %1867 = vmatprep.subr.mxu0 0.0
      %1868 = vmatpush2.msra.mxu0 0.0
      %1869 = vmatprep.subr.mxu0 0.0
      %1870 = vmatpush2.msra.mxu0 0.0
      %1871 = vmatprep.subr.mxu0 0.0
      %1872 = vmatpush2.msra.mxu0 0.0
      %1873 = vmatprep.subr.mxu0 0.0
      %1874 = vmatpush2.msra.mxu0 0.0
      %1875 = vmatprep.subr.mxu0 0.0
      %1876 = vmatpush2.msra.mxu0 0.0
      %1877 = vmatprep.subr.mxu0 0.0
      %1878 = vmatpush2.msra.mxu0 0.0
      %1879 = vmatprep.subr.mxu0 0.0
      %1880 = vmatpush2.msra.mxu0 0.0
      %1881 = vmatprep.subr.mxu0 0.0
      %1882 = vmatpush2.msra.mxu0 0.0
      %1883 = vmatprep.subr.mxu0 0.0
      %1884 = vmatpush2.msra.mxu0 0.0
      %1885 = vmatprep.subr.mxu0 0.0
      %1886 = vmatpush2.msra.mxu0 0.0
      %1887 = vmatprep.subr.mxu0 0.0
      %1888 = vmatpush2.msra.mxu0 0.0
      %1889 = vmatprep.subr.mxu0 0.0
      %1890 = vmatpush2.msra.mxu0 0.0
      %1891 = vmatprep.mubr.f32.mxu0 0.0
      %1892 = vmatmul.mubr.f32.gmra.mxu0 %v1825
      %v1893 = vpop.f32.mrf.mxu0
      %v1894 = vadd.f32 0.0, %v1893
      %v1895 = vpop.f32.mrf.mxu0
      %1896 = vdwg.mxu0
      %v1897 = vadd.f32 %v1754, %v1894
      %s1898 = sld [smem:[#allocation3 + $0x200]]
      %v1899 = vstv %s1898
      %v1900 = vmul.f32 %v1899, %v324
      %v1901 = vadd.f32 %v1900, 0.0
      %s1902 = sld [smem:[#allocation3 + $0x201]]
      %v1903 = vstv %s1902
      %v1904 = vmul.f32 %v1903, %v399
      %v1905 = vadd.f32 %v1901, %v1904
      %s1906 = sld [smem:[#allocation3 + $0x202]]
      %v1907 = vstv %s1906
      %v1908 = vmul.f32 %v1907, %v474
      %v1909 = vadd.f32 %v1905, %v1908
      %s1910 = sld [smem:[#allocation3 + $0x203]]
      %v1911 = vstv %s1910
      %v1912 = vmul.f32 %v1911, %v547
      %v1913 = vadd.f32 %v1909, %v1912
      %s1914 = sld [smem:[#allocation3 + $0x204]]
      %v1915 = vstv %s1914
      %v1916 = vmul.f32 %v1915, %v617
      %v1917 = vadd.f32 %v1913, %v1916
      %s1918 = sld [smem:[#allocation3 + $0x205]]
      %v1919 = vstv %s1918
      %v1920 = vmul.f32 %v1919, %v687
      %v1921 = vadd.f32 %v1917, %v1920
      %s1922 = sld [smem:[#allocation3 + $0x206]]
      %v1923 = vstv %s1922
      %v1924 = vmul.f32 %v1923, %v760
      %v1925 = vadd.f32 %v1921, %v1924
      %s1926 = sld [smem:[#allocation3 + $0x207]]
      %v1927 = vstv %s1926
      %v1928 = vmul.f32 %v1927, %v830
      %v1929 = vadd.f32 %v1925, %v1928
      %s1930 = sld [smem:[#allocation3 + $0x208]]
      %v1931 = vstv %s1930
      %v1932 = vmul.f32 %v1931, %v900
      %v1933 = vadd.f32 %v1929, %v1932
      %s1934 = sld [smem:[#allocation3 + $0x209]]
      %v1935 = vstv %s1934
      %v1936 = vmul.f32 %v1935, %v973
      %v1937 = vadd.f32 %v1933, %v1936
      %s1938 = sld [smem:[#allocation3 + $0x20a]]
      %v1939 = vstv %s1938
      %v1940 = vmul.f32 %v1939, %v1043
      %v1941 = vadd.f32 %v1937, %v1940
      %s1942 = sld [smem:[#allocation3 + $0x20b]]
      %v1943 = vstv %s1942
      %v1944 = vmul.f32 %v1943, %v1113
      %v1945 = vadd.f32 %v1941, %v1944
      %s1946 = sld [smem:[#allocation3 + $0x20c]]
      %v1947 = vstv %s1946
      %v1948 = vmul.f32 %v1947, %v1186
      %v1949 = vadd.f32 %v1945, %v1948
      %s1950 = sld [smem:[#allocation3 + $0x20d]]
      %v1951 = vstv %s1950
      %v1952 = vmul.f32 %v1951, %v1256
      %v1953 = vadd.f32 %v1949, %v1952
      %s1954 = sld [smem:[#allocation3 + $0x20e]]
      %v1955 = vstv %s1954
      %v1956 = vmul.f32 %v1955, %v1326
      %v1957 = vadd.f32 %v1953, %v1956
      %s1958 = sld [smem:[#allocation6 + $0x4]]
      %v1959 = vstv %s1958
      %v1960 = vadd.f32 %v1957, %v1959
      %v1961 = vmax.f32 %v1960, 0.0
      %s1962 = scalar_lea.vmem %s11, 128
      %v1963 = vld [vmem:[%s1962] sm:$0xff]
      %v1964 = vld [vmem:[%s1962 + $0x8] sm:$0xff]
      %v1965 = vld [vmem:[%s1962 + $0x10] sm:$0xff]
      %v1966 = vld [vmem:[%s1962 + $0x18] sm:$0xff]
      %v1968 = vsel %vm253, %v1961, 0
      %1970 = vmatprep.subr.mxu0 0.0
      %1971 = vmatpush1.msra.mxu0 0.0
      %1972 = vmatprep.subr.mxu0 0.0
      %1973 = vmatpush1.msra.mxu0 0.0
      %1974 = vmatprep.subr.mxu0 0.0
      %1975 = vmatpush1.msra.mxu0 0.0
      %1976 = vmatprep.subr.mxu0 0.0
      %1977 = vmatpush1.msra.mxu0 0.0
      %1978 = vmatprep.subr.mxu0 0.0
      %1979 = vmatpush1.msra.mxu0 0.0
      %1980 = vmatprep.subr.mxu0 0.0
      %1981 = vmatpush1.msra.mxu0 0.0
      %1982 = vmatprep.subr.mxu0 0.0
      %1983 = vmatpush1.msra.mxu0 0.0
      %1984 = vmatprep.subr.mxu0 0.0
      %1985 = vmatpush1.msra.mxu0 0.0
      %1986 = vmatprep.subr.mxu0 0.0
      %1987 = vmatpush1.msra.mxu0 0.0
      %1988 = vmatprep.subr.mxu0 0.0
      %1989 = vmatpush1.msra.mxu0 0.0
      %1990 = vmatprep.subr.mxu0 0.0
      %1991 = vmatpush1.msra.mxu0 0.0
      %1992 = vmatprep.subr.mxu0 0.0
      %1993 = vmatpush1.msra.mxu0 0.0
      %1994 = vmatprep.subr.mxu0 0.0
      %1995 = vmatpush1.msra.mxu0 %v1966
      %1996 = vmatprep.subr.mxu0 0.0
      %1997 = vmatpush1.msra.mxu0 %v1965
      %1998 = vmatprep.subr.mxu0 0.0
      %1999 = vmatpush1.msra.mxu0 %v1964
      %2000 = vmatprep.subr.mxu0 0.0
      %2001 = vmatpush1.msra.mxu0 %v1963
      %2002 = vmatprep.subr.mxu0 0.0
      %2003 = vmatpush2.msra.mxu0 0.0
      %2004 = vmatprep.subr.mxu0 0.0
      %2005 = vmatpush2.msra.mxu0 0.0
      %2006 = vmatprep.subr.mxu0 0.0
      %2007 = vmatpush2.msra.mxu0 0.0
      %2008 = vmatprep.subr.mxu0 0.0
      %2009 = vmatpush2.msra.mxu0 0.0
      %2010 = vmatprep.subr.mxu0 0.0
      %2011 = vmatpush2.msra.mxu0 0.0
      %2012 = vmatprep.subr.mxu0 0.0
      %2013 = vmatpush2.msra.mxu0 0.0
      %2014 = vmatprep.subr.mxu0 0.0
      %2015 = vmatpush2.msra.mxu0 0.0
      %2016 = vmatprep.subr.mxu0 0.0
      %2017 = vmatpush2.msra.mxu0 0.0
      %2018 = vmatprep.subr.mxu0 0.0
      %2019 = vmatpush2.msra.mxu0 0.0
      %2020 = vmatprep.subr.mxu0 0.0
      %2021 = vmatpush2.msra.mxu0 0.0
      %2022 = vmatprep.subr.mxu0 0.0
      %2023 = vmatpush2.msra.mxu0 0.0
      %2024 = vmatprep.subr.mxu0 0.0
      %2025 = vmatpush2.msra.mxu0 0.0
      %2026 = vmatprep.subr.mxu0 0.0
      %2027 = vmatpush2.msra.mxu0 0.0
      %2028 = vmatprep.subr.mxu0 0.0
      %2029 = vmatpush2.msra.mxu0 0.0
      %2030 = vmatprep.subr.mxu0 0.0
      %2031 = vmatpush2.msra.mxu0 0.0
      %2032 = vmatprep.subr.mxu0 0.0
      %2033 = vmatpush2.msra.mxu0 0.0
      %2034 = vmatprep.mubr.f32.mxu0 0.0
      %2035 = vmatmul.mubr.f32.gmra.mxu0 %v1968
      %v2036 = vpop.f32.mrf.mxu0
      %v2037 = vadd.f32 0.0, %v2036
      %v2038 = vpop.f32.mrf.mxu0
      %2039 = vdwg.mxu0
      %v2040 = vadd.f32 %v1897, %v2037
      %s2041 = sld [smem:[#allocation3 + $0x280]]
      %v2042 = vstv %s2041
      %v2043 = vmul.f32 %v2042, %v324
      %v2044 = vadd.f32 %v2043, 0.0
      %s2045 = sld [smem:[#allocation3 + $0x281]]
      %v2046 = vstv %s2045
      %v2047 = vmul.f32 %v2046, %v399
      %v2048 = vadd.f32 %v2044, %v2047
      %s2049 = sld [smem:[#allocation3 + $0x282]]
      %v2050 = vstv %s2049
      %v2051 = vmul.f32 %v2050, %v474
      %v2052 = vadd.f32 %v2048, %v2051
      %s2053 = sld [smem:[#allocation3 + $0x283]]
      %v2054 = vstv %s2053
      %v2055 = vmul.f32 %v2054, %v547
      %v2056 = vadd.f32 %v2052, %v2055
      %s2057 = sld [smem:[#allocation3 + $0x284]]
      %v2058 = vstv %s2057
      %v2059 = vmul.f32 %v2058, %v617
      %v2060 = vadd.f32 %v2056, %v2059
      %s2061 = sld [smem:[#allocation3 + $0x285]]
      %v2062 = vstv %s2061
      %v2063 = vmul.f32 %v2062, %v687
      %v2064 = vadd.f32 %v2060, %v2063
      %s2065 = sld [smem:[#allocation3 + $0x286]]
      %v2066 = vstv %s2065
      %v2067 = vmul.f32 %v2066, %v760
      %v2068 = vadd.f32 %v2064, %v2067
      %s2069 = sld [smem:[#allocation3 + $0x287]]
      %v2070 = vstv %s2069
      %v2071 = vmul.f32 %v2070, %v830
      %v2072 = vadd.f32 %v2068, %v2071
      %s2073 = sld [smem:[#allocation3 + $0x288]]
      %v2074 = vstv %s2073
      %v2075 = vmul.f32 %v2074, %v900
      %v2076 = vadd.f32 %v2072, %v2075
      %s2077 = sld [smem:[#allocation3 + $0x289]]
      %v2078 = vstv %s2077
      %v2079 = vmul.f32 %v2078, %v973
      %v2080 = vadd.f32 %v2076, %v2079
      %s2081 = sld [smem:[#allocation3 + $0x28a]]
      %v2082 = vstv %s2081
      %v2083 = vmul.f32 %v2082, %v1043
      %v2084 = vadd.f32 %v2080, %v2083
      %s2085 = sld [smem:[#allocation3 + $0x28b]]
      %v2086 = vstv %s2085
      %v2087 = vmul.f32 %v2086, %v1113
      %v2088 = vadd.f32 %v2084, %v2087
      %s2089 = sld [smem:[#allocation3 + $0x28c]]
      %v2090 = vstv %s2089
      %v2091 = vmul.f32 %v2090, %v1186
      %v2092 = vadd.f32 %v2088, %v2091
      %s2093 = sld [smem:[#allocation3 + $0x28d]]
      %v2094 = vstv %s2093
      %v2095 = vmul.f32 %v2094, %v1256
      %v2096 = vadd.f32 %v2092, %v2095
      %s2097 = sld [smem:[#allocation3 + $0x28e]]
      %v2098 = vstv %s2097
      %v2099 = vmul.f32 %v2098, %v1326
      %v2100 = vadd.f32 %v2096, %v2099
      %s2101 = sld [smem:[#allocation6 + $0x5]]
      %v2102 = vstv %s2101
      %v2103 = vadd.f32 %v2100, %v2102
      %v2104 = vmax.f32 %v2103, 0.0
      %s2105 = scalar_lea.vmem %s11, 160
      %v2106 = vld [vmem:[%s2105] sm:$0xff]
      %v2107 = vld [vmem:[%s2105 + $0x8] sm:$0xff]
      %v2108 = vld [vmem:[%s2105 + $0x10] sm:$0xff]
      %v2109 = vld [vmem:[%s2105 + $0x18] sm:$0xff]
      %v2111 = vsel %vm253, %v2104, 0
      %2113 = vmatprep.subr.mxu0 0.0
      %2114 = vmatpush1.msra.mxu0 0.0
      %2115 = vmatprep.subr.mxu0 0.0
      %2116 = vmatpush1.msra.mxu0 0.0
      %2117 = vmatprep.subr.mxu0 0.0
      %2118 = vmatpush1.msra.mxu0 0.0
      %2119 = vmatprep.subr.mxu0 0.0
      %2120 = vmatpush1.msra.mxu0 0.0
      %2121 = vmatprep.subr.mxu0 0.0
      %2122 = vmatpush1.msra.mxu0 0.0
      %2123 = vmatprep.subr.mxu0 0.0
      %2124 = vmatpush1.msra.mxu0 0.0
      %2125 = vmatprep.subr.mxu0 0.0
      %2126 = vmatpush1.msra.mxu0 0.0
      %2127 = vmatprep.subr.mxu0 0.0
      %2128 = vmatpush1.msra.mxu0 0.0
      %2129 = vmatprep.subr.mxu0 0.0
      %2130 = vmatpush1.msra.mxu0 0.0
      %2131 = vmatprep.subr.mxu0 0.0
      %2132 = vmatpush1.msra.mxu0 0.0
      %2133 = vmatprep.subr.mxu0 0.0
      %2134 = vmatpush1.msra.mxu0 0.0
      %2135 = vmatprep.subr.mxu0 0.0
      %2136 = vmatpush1.msra.mxu0 0.0
      %2137 = vmatprep.subr.mxu0 0.0
      %2138 = vmatpush1.msra.mxu0 %v2109
      %2139 = vmatprep.subr.mxu0 0.0
      %2140 = vmatpush1.msra.mxu0 %v2108
      %2141 = vmatprep.subr.mxu0 0.0
      %2142 = vmatpush1.msra.mxu0 %v2107
      %2143 = vmatprep.subr.mxu0 0.0
      %2144 = vmatpush1.msra.mxu0 %v2106
      %2145 = vmatprep.subr.mxu0 0.0
      %2146 = vmatpush2.msra.mxu0 0.0
      %2147 = vmatprep.subr.mxu0 0.0
      %2148 = vmatpush2.msra.mxu0 0.0
      %2149 = vmatprep.subr.mxu0 0.0
      %2150 = vmatpush2.msra.mxu0 0.0
      %2151 = vmatprep.subr.mxu0 0.0
      %2152 = vmatpush2.msra.mxu0 0.0
      %2153 = vmatprep.subr.mxu0 0.0
      %2154 = vmatpush2.msra.mxu0 0.0
      %2155 = vmatprep.subr.mxu0 0.0
      %2156 = vmatpush2.msra.mxu0 0.0
      %2157 = vmatprep.subr.mxu0 0.0
      %2158 = vmatpush2.msra.mxu0 0.0
      %2159 = vmatprep.subr.mxu0 0.0
      %2160 = vmatpush2.msra.mxu0 0.0
      %2161 = vmatprep.subr.mxu0 0.0
      %2162 = vmatpush2.msra.mxu0 0.0
      %2163 = vmatprep.subr.mxu0 0.0
      %2164 = vmatpush2.msra.mxu0 0.0
      %2165 = vmatprep.subr.mxu0 0.0
      %2166 = vmatpush2.msra.mxu0 0.0
      %2167 = vmatprep.subr.mxu0 0.0
      %2168 = vmatpush2.msra.mxu0 0.0
      %2169 = vmatprep.subr.mxu0 0.0
      %2170 = vmatpush2.msra.mxu0 0.0
      %2171 = vmatprep.subr.mxu0 0.0
      %2172 = vmatpush2.msra.mxu0 0.0
      %2173 = vmatprep.subr.mxu0 0.0
      %2174 = vmatpush2.msra.mxu0 0.0
      %2175 = vmatprep.subr.mxu0 0.0
      %2176 = vmatpush2.msra.mxu0 0.0
      %2177 = vmatprep.mubr.f32.mxu0 0.0
      %2178 = vmatmul.mubr.f32.gmra.mxu0 %v2111
      %v2179 = vpop.f32.mrf.mxu0
      %v2180 = vadd.f32 0.0, %v2179
      %v2181 = vpop.f32.mrf.mxu0
      %2182 = vdwg.mxu0
      %v2183 = vadd.f32 %v2040, %v2180
      %s2184 = sld [smem:[#allocation3 + $0x300]]
      %v2185 = vstv %s2184
      %v2186 = vmul.f32 %v2185, %v324
      %v2187 = vadd.f32 %v2186, 0.0
      %s2188 = sld [smem:[#allocation3 + $0x301]]
      %v2189 = vstv %s2188
      %v2190 = vmul.f32 %v2189, %v399
      %v2191 = vadd.f32 %v2187, %v2190
      %s2192 = sld [smem:[#allocation3 + $0x302]]
      %v2193 = vstv %s2192
      %v2194 = vmul.f32 %v2193, %v474
      %v2195 = vadd.f32 %v2191, %v2194
      %s2196 = sld [smem:[#allocation3 + $0x303]]
      %v2197 = vstv %s2196
      %v2198 = vmul.f32 %v2197, %v547
      %v2199 = vadd.f32 %v2195, %v2198
      %s2200 = sld [smem:[#allocation3 + $0x304]]
      %v2201 = vstv %s2200
      %v2202 = vmul.f32 %v2201, %v617
      %v2203 = vadd.f32 %v2199, %v2202
      %s2204 = sld [smem:[#allocation3 + $0x305]]
      %v2205 = vstv %s2204
      %v2206 = vmul.f32 %v2205, %v687
      %v2207 = vadd.f32 %v2203, %v2206
      %s2208 = sld [smem:[#allocation3 + $0x306]]
      %v2209 = vstv %s2208
      %v2210 = vmul.f32 %v2209, %v760
      %v2211 = vadd.f32 %v2207, %v2210
      %s2212 = sld [smem:[#allocation3 + $0x307]]
      %v2213 = vstv %s2212
      %v2214 = vmul.f32 %v2213, %v830
      %v2215 = vadd.f32 %v2211, %v2214
      %s2216 = sld [smem:[#allocation3 + $0x308]]
      %v2217 = vstv %s2216
      %v2218 = vmul.f32 %v2217, %v900
      %v2219 = vadd.f32 %v2215, %v2218
      %s2220 = sld [smem:[#allocation3 + $0x309]]
      %v2221 = vstv %s2220
      %v2222 = vmul.f32 %v2221, %v973
      %v2223 = vadd.f32 %v2219, %v2222
      %s2224 = sld [smem:[#allocation3 + $0x30a]]
      %v2225 = vstv %s2224
      %v2226 = vmul.f32 %v2225, %v1043
      %v2227 = vadd.f32 %v2223, %v2226
      %s2228 = sld [smem:[#allocation3 + $0x30b]]
      %v2229 = vstv %s2228
      %v2230 = vmul.f32 %v2229, %v1113
      %v2231 = vadd.f32 %v2227, %v2230
      %s2232 = sld [smem:[#allocation3 + $0x30c]]
      %v2233 = vstv %s2232
      %v2234 = vmul.f32 %v2233, %v1186
      %v2235 = vadd.f32 %v2231, %v2234
      %s2236 = sld [smem:[#allocation3 + $0x30d]]
      %v2237 = vstv %s2236
      %v2238 = vmul.f32 %v2237, %v1256
      %v2239 = vadd.f32 %v2235, %v2238
      %s2240 = sld [smem:[#allocation3 + $0x30e]]
      %v2241 = vstv %s2240
      %v2242 = vmul.f32 %v2241, %v1326
      %v2243 = vadd.f32 %v2239, %v2242
      %s2244 = sld [smem:[#allocation6 + $0x6]]
      %v2245 = vstv %s2244
      %v2246 = vadd.f32 %v2243, %v2245
      %v2247 = vmax.f32 %v2246, 0.0
      %s2248 = scalar_lea.vmem %s11, 192
      %v2249 = vld [vmem:[%s2248] sm:$0xff]
      %v2250 = vld [vmem:[%s2248 + $0x8] sm:$0xff]
      %v2251 = vld [vmem:[%s2248 + $0x10] sm:$0xff]
      %v2252 = vld [vmem:[%s2248 + $0x18] sm:$0xff]
      %v2254 = vsel %vm253, %v2247, 0
      %2256 = vmatprep.subr.mxu0 0.0
      %2257 = vmatpush1.msra.mxu0 0.0
      %2258 = vmatprep.subr.mxu0 0.0
      %2259 = vmatpush1.msra.mxu0 0.0
      %2260 = vmatprep.subr.mxu0 0.0
      %2261 = vmatpush1.msra.mxu0 0.0
      %2262 = vmatprep.subr.mxu0 0.0
      %2263 = vmatpush1.msra.mxu0 0.0
      %2264 = vmatprep.subr.mxu0 0.0
      %2265 = vmatpush1.msra.mxu0 0.0
      %2266 = vmatprep.subr.mxu0 0.0
      %2267 = vmatpush1.msra.mxu0 0.0
      %2268 = vmatprep.subr.mxu0 0.0
      %2269 = vmatpush1.msra.mxu0 0.0
      %2270 = vmatprep.subr.mxu0 0.0
      %2271 = vmatpush1.msra.mxu0 0.0
      %2272 = vmatprep.subr.mxu0 0.0
      %2273 = vmatpush1.msra.mxu0 0.0
      %2274 = vmatprep.subr.mxu0 0.0
      %2275 = vmatpush1.msra.mxu0 0.0
      %2276 = vmatprep.subr.mxu0 0.0
      %2277 = vmatpush1.msra.mxu0 0.0
      %2278 = vmatprep.subr.mxu0 0.0
      %2279 = vmatpush1.msra.mxu0 0.0
      %2280 = vmatprep.subr.mxu0 0.0
      %2281 = vmatpush1.msra.mxu0 %v2252
      %2282 = vmatprep.subr.mxu0 0.0
      %2283 = vmatpush1.msra.mxu0 %v2251
      %2284 = vmatprep.subr.mxu0 0.0
      %2285 = vmatpush1.msra.mxu0 %v2250
      %2286 = vmatprep.subr.mxu0 0.0
      %2287 = vmatpush1.msra.mxu0 %v2249
      %2288 = vmatprep.subr.mxu0 0.0
      %2289 = vmatpush2.msra.mxu0 0.0
      %2290 = vmatprep.subr.mxu0 0.0
      %2291 = vmatpush2.msra.mxu0 0.0
      %2292 = vmatprep.subr.mxu0 0.0
      %2293 = vmatpush2.msra.mxu0 0.0
      %2294 = vmatprep.subr.mxu0 0.0
      %2295 = vmatpush2.msra.mxu0 0.0
      %2296 = vmatprep.subr.mxu0 0.0
      %2297 = vmatpush2.msra.mxu0 0.0
      %2298 = vmatprep.subr.mxu0 0.0
      %2299 = vmatpush2.msra.mxu0 0.0
      %2300 = vmatprep.subr.mxu0 0.0
      %2301 = vmatpush2.msra.mxu0 0.0
      %2302 = vmatprep.subr.mxu0 0.0
      %2303 = vmatpush2.msra.mxu0 0.0
      %2304 = vmatprep.subr.mxu0 0.0
      %2305 = vmatpush2.msra.mxu0 0.0
      %2306 = vmatprep.subr.mxu0 0.0
      %2307 = vmatpush2.msra.mxu0 0.0
      %2308 = vmatprep.subr.mxu0 0.0
      %2309 = vmatpush2.msra.mxu0 0.0
      %2310 = vmatprep.subr.mxu0 0.0
      %2311 = vmatpush2.msra.mxu0 0.0
      %2312 = vmatprep.subr.mxu0 0.0
      %2313 = vmatpush2.msra.mxu0 0.0
      %2314 = vmatprep.subr.mxu0 0.0
      %2315 = vmatpush2.msra.mxu0 0.0
      %2316 = vmatprep.subr.mxu0 0.0
      %2317 = vmatpush2.msra.mxu0 0.0
      %2318 = vmatprep.subr.mxu0 0.0
      %2319 = vmatpush2.msra.mxu0 0.0
      %2320 = vmatprep.mubr.f32.mxu0 0.0
      %2321 = vmatmul.mubr.f32.gmra.mxu0 %v2254
      %v2322 = vpop.f32.mrf.mxu0
      %v2323 = vadd.f32 0.0, %v2322
      %v2324 = vpop.f32.mrf.mxu0
      %2325 = vdwg.mxu0
      %v2326 = vadd.f32 %v2183, %v2323
      %s2327 = sld [smem:[#allocation3 + $0x380]]
      %v2328 = vstv %s2327
      %v2329 = vmul.f32 %v2328, %v324
      %v2330 = vadd.f32 %v2329, 0.0
      %s2331 = sld [smem:[#allocation3 + $0x381]]
      %v2332 = vstv %s2331
      %v2333 = vmul.f32 %v2332, %v399
      %v2334 = vadd.f32 %v2330, %v2333
      %s2335 = sld [smem:[#allocation3 + $0x382]]
      %v2336 = vstv %s2335
      %v2337 = vmul.f32 %v2336, %v474
      %v2338 = vadd.f32 %v2334, %v2337
      %s2339 = sld [smem:[#allocation3 + $0x383]]
      %v2340 = vstv %s2339
      %v2341 = vmul.f32 %v2340, %v547
      %v2342 = vadd.f32 %v2338, %v2341
      %s2343 = sld [smem:[#allocation3 + $0x384]]
      %v2344 = vstv %s2343
      %v2345 = vmul.f32 %v2344, %v617
      %v2346 = vadd.f32 %v2342, %v2345
      %s2347 = sld [smem:[#allocation3 + $0x385]]
      %v2348 = vstv %s2347
      %v2349 = vmul.f32 %v2348, %v687
      %v2350 = vadd.f32 %v2346, %v2349
      %s2351 = sld [smem:[#allocation3 + $0x386]]
      %v2352 = vstv %s2351
      %v2353 = vmul.f32 %v2352, %v760
      %v2354 = vadd.f32 %v2350, %v2353
      %s2355 = sld [smem:[#allocation3 + $0x387]]
      %v2356 = vstv %s2355
      %v2357 = vmul.f32 %v2356, %v830
      %v2358 = vadd.f32 %v2354, %v2357
      %s2359 = sld [smem:[#allocation3 + $0x388]]
      %v2360 = vstv %s2359
      %v2361 = vmul.f32 %v2360, %v900
      %v2362 = vadd.f32 %v2358, %v2361
      %s2363 = sld [smem:[#allocation3 + $0x389]]
      %v2364 = vstv %s2363
      %v2365 = vmul.f32 %v2364, %v973
      %v2366 = vadd.f32 %v2362, %v2365
      %s2367 = sld [smem:[#allocation3 + $0x38a]]
      %v2368 = vstv %s2367
      %v2369 = vmul.f32 %v2368, %v1043
      %v2370 = vadd.f32 %v2366, %v2369
      %s2371 = sld [smem:[#allocation3 + $0x38b]]
      %v2372 = vstv %s2371
      %v2373 = vmul.f32 %v2372, %v1113
      %v2374 = vadd.f32 %v2370, %v2373
      %s2375 = sld [smem:[#allocation3 + $0x38c]]
      %v2376 = vstv %s2375
      %v2377 = vmul.f32 %v2376, %v1186
      %v2378 = vadd.f32 %v2374, %v2377
      %s2379 = sld [smem:[#allocation3 + $0x38d]]
      %v2380 = vstv %s2379
      %v2381 = vmul.f32 %v2380, %v1256
      %v2382 = vadd.f32 %v2378, %v2381
      %s2383 = sld [smem:[#allocation3 + $0x38e]]
      %v2384 = vstv %s2383
      %v2385 = vmul.f32 %v2384, %v1326
      %v2386 = vadd.f32 %v2382, %v2385
      %s2387 = sld [smem:[#allocation6 + $0x7]]
      %v2388 = vstv %s2387
      %v2389 = vadd.f32 %v2386, %v2388
      %v2390 = vmax.f32 %v2389, 0.0
      %s2391 = scalar_lea.vmem %s11, 224
      %v2392 = vld [vmem:[%s2391] sm:$0xff]
      %v2393 = vld [vmem:[%s2391 + $0x8] sm:$0xff]
      %v2394 = vld [vmem:[%s2391 + $0x10] sm:$0xff]
      %v2395 = vld [vmem:[%s2391 + $0x18] sm:$0xff]
      %v2397 = vsel %vm253, %v2390, 0
      %2399 = vmatprep.subr.mxu0 0.0
      %2400 = vmatpush1.msra.mxu0 0.0
      %2401 = vmatprep.subr.mxu0 0.0
      %2402 = vmatpush1.msra.mxu0 0.0
      %2403 = vmatprep.subr.mxu0 0.0
      %2404 = vmatpush1.msra.mxu0 0.0
      %2405 = vmatprep.subr.mxu0 0.0
      %2406 = vmatpush1.msra.mxu0 0.0
      %2407 = vmatprep.subr.mxu0 0.0
      %2408 = vmatpush1.msra.mxu0 0.0
      %2409 = vmatprep.subr.mxu0 0.0
      %2410 = vmatpush1.msra.mxu0 0.0
      %2411 = vmatprep.subr.mxu0 0.0
      %2412 = vmatpush1.msra.mxu0 0.0
      %2413 = vmatprep.subr.mxu0 0.0
      %2414 = vmatpush1.msra.mxu0 0.0
      %2415 = vmatprep.subr.mxu0 0.0
      %2416 = vmatpush1.msra.mxu0 0.0
      %2417 = vmatprep.subr.mxu0 0.0
      %2418 = vmatpush1.msra.mxu0 0.0
      %2419 = vmatprep.subr.mxu0 0.0
      %2420 = vmatpush1.msra.mxu0 0.0
      %2421 = vmatprep.subr.mxu0 0.0
      %2422 = vmatpush1.msra.mxu0 0.0
      %2423 = vmatprep.subr.mxu0 0.0
      %2424 = vmatpush1.msra.mxu0 %v2395
      %2425 = vmatprep.subr.mxu0 0.0
      %2426 = vmatpush1.msra.mxu0 %v2394
      %2427 = vmatprep.subr.mxu0 0.0
      %2428 = vmatpush1.msra.mxu0 %v2393
      %2429 = vmatprep.subr.mxu0 0.0
      %2430 = vmatpush1.msra.mxu0 %v2392
      %2431 = vmatprep.subr.mxu0 0.0
      %2432 = vmatpush2.msra.mxu0 0.0
      %2433 = vmatprep.subr.mxu0 0.0
      %2434 = vmatpush2.msra.mxu0 0.0
      %2435 = vmatprep.subr.mxu0 0.0
      %2436 = vmatpush2.msra.mxu0 0.0
      %2437 = vmatprep.subr.mxu0 0.0
      %2438 = vmatpush2.msra.mxu0 0.0
      %2439 = vmatprep.subr.mxu0 0.0
      %2440 = vmatpush2.msra.mxu0 0.0
      %2441 = vmatprep.subr.mxu0 0.0
      %2442 = vmatpush2.msra.mxu0 0.0
      %2443 = vmatprep.subr.mxu0 0.0
      %2444 = vmatpush2.msra.mxu0 0.0
      %2445 = vmatprep.subr.mxu0 0.0
      %2446 = vmatpush2.msra.mxu0 0.0
      %2447 = vmatprep.subr.mxu0 0.0
      %2448 = vmatpush2.msra.mxu0 0.0
      %2449 = vmatprep.subr.mxu0 0.0
      %2450 = vmatpush2.msra.mxu0 0.0
      %2451 = vmatprep.subr.mxu0 0.0
      %2452 = vmatpush2.msra.mxu0 0.0
      %2453 = vmatprep.subr.mxu0 0.0
      %2454 = vmatpush2.msra.mxu0 0.0
      %2455 = vmatprep.subr.mxu0 0.0
      %2456 = vmatpush2.msra.mxu0 0.0
      %2457 = vmatprep.subr.mxu0 0.0
      %2458 = vmatpush2.msra.mxu0 0.0
      %2459 = vmatprep.subr.mxu0 0.0
      %2460 = vmatpush2.msra.mxu0 0.0
      %2461 = vmatprep.subr.mxu0 0.0
      %2462 = vmatpush2.msra.mxu0 0.0
      %2463 = vmatprep.mubr.f32.mxu0 0.0
      %2464 = vmatmul.mubr.f32.gmra.mxu0 %v2397
      %v2465 = vpop.f32.mrf.mxu0
      %v2466 = vadd.f32 0.0, %v2465
      %v2467 = vpop.f32.mrf.mxu0
      %2468 = vdwg.mxu0
      %v2469 = vadd.f32 %v2326, %v2466
      %s2470 = sld [smem:[#allocation3 + $0x400]]
      %v2471 = vstv %s2470
      %v2472 = vmul.f32 %v2471, %v324
      %v2473 = vadd.f32 %v2472, 0.0
      %s2474 = sld [smem:[#allocation3 + $0x401]]
      %v2475 = vstv %s2474
      %v2476 = vmul.f32 %v2475, %v399
      %v2477 = vadd.f32 %v2473, %v2476
      %s2478 = sld [smem:[#allocation3 + $0x402]]
      %v2479 = vstv %s2478
      %v2480 = vmul.f32 %v2479, %v474
      %v2481 = vadd.f32 %v2477, %v2480
      %s2482 = sld [smem:[#allocation3 + $0x403]]
      %v2483 = vstv %s2482
      %v2484 = vmul.f32 %v2483, %v547
      %v2485 = vadd.f32 %v2481, %v2484
      %s2486 = sld [smem:[#allocation3 + $0x404]]
      %v2487 = vstv %s2486
      %v2488 = vmul.f32 %v2487, %v617
      %v2489 = vadd.f32 %v2485, %v2488
      %s2490 = sld [smem:[#allocation3 + $0x405]]
      %v2491 = vstv %s2490
      %v2492 = vmul.f32 %v2491, %v687
      %v2493 = vadd.f32 %v2489, %v2492
      %s2494 = sld [smem:[#allocation3 + $0x406]]
      %v2495 = vstv %s2494
      %v2496 = vmul.f32 %v2495, %v760
      %v2497 = vadd.f32 %v2493, %v2496
      %s2498 = sld [smem:[#allocation3 + $0x407]]
      %v2499 = vstv %s2498
      %v2500 = vmul.f32 %v2499, %v830
      %v2501 = vadd.f32 %v2497, %v2500
      %s2502 = sld [smem:[#allocation3 + $0x408]]
      %v2503 = vstv %s2502
      %v2504 = vmul.f32 %v2503, %v900
      %v2505 = vadd.f32 %v2501, %v2504
      %s2506 = sld [smem:[#allocation3 + $0x409]]
      %v2507 = vstv %s2506
      %v2508 = vmul.f32 %v2507, %v973
      %v2509 = vadd.f32 %v2505, %v2508
      %s2510 = sld [smem:[#allocation3 + $0x40a]]
      %v2511 = vstv %s2510
      %v2512 = vmul.f32 %v2511, %v1043
      %v2513 = vadd.f32 %v2509, %v2512
      %s2514 = sld [smem:[#allocation3 + $0x40b]]
      %v2515 = vstv %s2514
      %v2516 = vmul.f32 %v2515, %v1113
      %v2517 = vadd.f32 %v2513, %v2516
      %s2518 = sld [smem:[#allocation3 + $0x40c]]
      %v2519 = vstv %s2518
      %v2520 = vmul.f32 %v2519, %v1186
      %v2521 = vadd.f32 %v2517, %v2520
      %s2522 = sld [smem:[#allocation3 + $0x40d]]
      %v2523 = vstv %s2522
      %v2524 = vmul.f32 %v2523, %v1256
      %v2525 = vadd.f32 %v2521, %v2524
      %s2526 = sld [smem:[#allocation3 + $0x40e]]
      %v2527 = vstv %s2526
      %v2528 = vmul.f32 %v2527, %v1326
      %v2529 = vadd.f32 %v2525, %v2528
      %s2530 = sld [smem:[#allocation6 + $0x8]]
      %v2531 = vstv %s2530
      %v2532 = vadd.f32 %v2529, %v2531
      %v2533 = vmax.f32 %v2532, 0.0
      %s2534 = scalar_lea.vmem %s11, 256
      %v2535 = vld [vmem:[%s2534] sm:$0xff]
      %v2536 = vld [vmem:[%s2534 + $0x8] sm:$0xff]
      %v2537 = vld [vmem:[%s2534 + $0x10] sm:$0xff]
      %v2538 = vld [vmem:[%s2534 + $0x18] sm:$0xff]
      %v2540 = vsel %vm253, %v2533, 0
      %2542 = vmatprep.subr.mxu0 0.0
      %2543 = vmatpush1.msra.mxu0 0.0
      %2544 = vmatprep.subr.mxu0 0.0
      %2545 = vmatpush1.msra.mxu0 0.0
      %2546 = vmatprep.subr.mxu0 0.0
      %2547 = vmatpush1.msra.mxu0 0.0
      %2548 = vmatprep.subr.mxu0 0.0
      %2549 = vmatpush1.msra.mxu0 0.0
      %2550 = vmatprep.subr.mxu0 0.0
      %2551 = vmatpush1.msra.mxu0 0.0
      %2552 = vmatprep.subr.mxu0 0.0
      %2553 = vmatpush1.msra.mxu0 0.0
      %2554 = vmatprep.subr.mxu0 0.0
      %2555 = vmatpush1.msra.mxu0 0.0
      %2556 = vmatprep.subr.mxu0 0.0
      %2557 = vmatpush1.msra.mxu0 0.0
      %2558 = vmatprep.subr.mxu0 0.0
      %2559 = vmatpush1.msra.mxu0 0.0
      %2560 = vmatprep.subr.mxu0 0.0
      %2561 = vmatpush1.msra.mxu0 0.0
      %2562 = vmatprep.subr.mxu0 0.0
      %2563 = vmatpush1.msra.mxu0 0.0
      %2564 = vmatprep.subr.mxu0 0.0
      %2565 = vmatpush1.msra.mxu0 0.0
      %2566 = vmatprep.subr.mxu0 0.0
      %2567 = vmatpush1.msra.mxu0 %v2538
      %2568 = vmatprep.subr.mxu0 0.0
      %2569 = vmatpush1.msra.mxu0 %v2537
      %2570 = vmatprep.subr.mxu0 0.0
      %2571 = vmatpush1.msra.mxu0 %v2536
      %2572 = vmatprep.subr.mxu0 0.0
      %2573 = vmatpush1.msra.mxu0 %v2535
      %2574 = vmatprep.subr.mxu0 0.0
      %2575 = vmatpush2.msra.mxu0 0.0
      %2576 = vmatprep.subr.mxu0 0.0
      %2577 = vmatpush2.msra.mxu0 0.0
      %2578 = vmatprep.subr.mxu0 0.0
      %2579 = vmatpush2.msra.mxu0 0.0
      %2580 = vmatprep.subr.mxu0 0.0
      %2581 = vmatpush2.msra.mxu0 0.0
      %2582 = vmatprep.subr.mxu0 0.0
      %2583 = vmatpush2.msra.mxu0 0.0
      %2584 = vmatprep.subr.mxu0 0.0
      %2585 = vmatpush2.msra.mxu0 0.0
      %2586 = vmatprep.subr.mxu0 0.0
      %2587 = vmatpush2.msra.mxu0 0.0
      %2588 = vmatprep.subr.mxu0 0.0
      %2589 = vmatpush2.msra.mxu0 0.0
      %2590 = vmatprep.subr.mxu0 0.0
      %2591 = vmatpush2.msra.mxu0 0.0
      %2592 = vmatprep.subr.mxu0 0.0
      %2593 = vmatpush2.msra.mxu0 0.0
      %2594 = vmatprep.subr.mxu0 0.0
      %2595 = vmatpush2.msra.mxu0 0.0
      %2596 = vmatprep.subr.mxu0 0.0
      %2597 = vmatpush2.msra.mxu0 0.0
      %2598 = vmatprep.subr.mxu0 0.0
      %2599 = vmatpush2.msra.mxu0 0.0
      %2600 = vmatprep.subr.mxu0 0.0
      %2601 = vmatpush2.msra.mxu0 0.0
      %2602 = vmatprep.subr.mxu0 0.0
      %2603 = vmatpush2.msra.mxu0 0.0
      %2604 = vmatprep.subr.mxu0 0.0
      %2605 = vmatpush2.msra.mxu0 0.0
      %2606 = vmatprep.mubr.f32.mxu0 0.0
      %2607 = vmatmul.mubr.f32.gmra.mxu0 %v2540
      %v2608 = vpop.f32.mrf.mxu0
      %v2609 = vadd.f32 0.0, %v2608
      %v2610 = vpop.f32.mrf.mxu0
      %2611 = vdwg.mxu0
      %v2612 = vadd.f32 %v2469, %v2609
      %s2613 = sld [smem:[#allocation3 + $0x480]]
      %v2614 = vstv %s2613
      %v2615 = vmul.f32 %v2614, %v324
      %v2616 = vadd.f32 %v2615, 0.0
      %s2617 = sld [smem:[#allocation3 + $0x481]]
      %v2618 = vstv %s2617
      %v2619 = vmul.f32 %v2618, %v399
      %v2620 = vadd.f32 %v2616, %v2619
      %s2621 = sld [smem:[#allocation3 + $0x482]]
      %v2622 = vstv %s2621
      %v2623 = vmul.f32 %v2622, %v474
      %v2624 = vadd.f32 %v2620, %v2623
      %s2625 = sld [smem:[#allocation3 + $0x483]]
      %v2626 = vstv %s2625
      %v2627 = vmul.f32 %v2626, %v547
      %v2628 = vadd.f32 %v2624, %v2627
      %s2629 = sld [smem:[#allocation3 + $0x484]]
      %v2630 = vstv %s2629
      %v2631 = vmul.f32 %v2630, %v617
      %v2632 = vadd.f32 %v2628, %v2631
      %s2633 = sld [smem:[#allocation3 + $0x485]]
      %v2634 = vstv %s2633
      %v2635 = vmul.f32 %v2634, %v687
      %v2636 = vadd.f32 %v2632, %v2635
      %s2637 = sld [smem:[#allocation3 + $0x486]]
      %v2638 = vstv %s2637
      %v2639 = vmul.f32 %v2638, %v760
      %v2640 = vadd.f32 %v2636, %v2639
      %s2641 = sld [smem:[#allocation3 + $0x487]]
      %v2642 = vstv %s2641
      %v2643 = vmul.f32 %v2642, %v830
      %v2644 = vadd.f32 %v2640, %v2643
      %s2645 = sld [smem:[#allocation3 + $0x488]]
      %v2646 = vstv %s2645
      %v2647 = vmul.f32 %v2646, %v900
      %v2648 = vadd.f32 %v2644, %v2647
      %s2649 = sld [smem:[#allocation3 + $0x489]]
      %v2650 = vstv %s2649
      %v2651 = vmul.f32 %v2650, %v973
      %v2652 = vadd.f32 %v2648, %v2651
      %s2653 = sld [smem:[#allocation3 + $0x48a]]
      %v2654 = vstv %s2653
      %v2655 = vmul.f32 %v2654, %v1043
      %v2656 = vadd.f32 %v2652, %v2655
      %s2657 = sld [smem:[#allocation3 + $0x48b]]
      %v2658 = vstv %s2657
      %v2659 = vmul.f32 %v2658, %v1113
      %v2660 = vadd.f32 %v2656, %v2659
      %s2661 = sld [smem:[#allocation3 + $0x48c]]
      %v2662 = vstv %s2661
      %v2663 = vmul.f32 %v2662, %v1186
      %v2664 = vadd.f32 %v2660, %v2663
      %s2665 = sld [smem:[#allocation3 + $0x48d]]
      %v2666 = vstv %s2665
      %v2667 = vmul.f32 %v2666, %v1256
      %v2668 = vadd.f32 %v2664, %v2667
      %s2669 = sld [smem:[#allocation3 + $0x48e]]
      %v2670 = vstv %s2669
      %v2671 = vmul.f32 %v2670, %v1326
      %v2672 = vadd.f32 %v2668, %v2671
      %s2673 = sld [smem:[#allocation6 + $0x9]]
      %v2674 = vstv %s2673
      %v2675 = vadd.f32 %v2672, %v2674
      %v2676 = vmax.f32 %v2675, 0.0
      %s2677 = scalar_lea.vmem %s11, 288
      %v2678 = vld [vmem:[%s2677] sm:$0xff]
      %v2679 = vld [vmem:[%s2677 + $0x8] sm:$0xff]
      %v2680 = vld [vmem:[%s2677 + $0x10] sm:$0xff]
      %v2681 = vld [vmem:[%s2677 + $0x18] sm:$0xff]
      %v2683 = vsel %vm253, %v2676, 0
      %2685 = vmatprep.subr.mxu0 0.0
      %2686 = vmatpush1.msra.mxu0 0.0
      %2687 = vmatprep.subr.mxu0 0.0
      %2688 = vmatpush1.msra.mxu0 0.0
      %2689 = vmatprep.subr.mxu0 0.0
      %2690 = vmatpush1.msra.mxu0 0.0
      %2691 = vmatprep.subr.mxu0 0.0
      %2692 = vmatpush1.msra.mxu0 0.0
      %2693 = vmatprep.subr.mxu0 0.0
      %2694 = vmatpush1.msra.mxu0 0.0
      %2695 = vmatprep.subr.mxu0 0.0
      %2696 = vmatpush1.msra.mxu0 0.0
      %2697 = vmatprep.subr.mxu0 0.0
      %2698 = vmatpush1.msra.mxu0 0.0
      %2699 = vmatprep.subr.mxu0 0.0
      %2700 = vmatpush1.msra.mxu0 0.0
      %2701 = vmatprep.subr.mxu0 0.0
      %2702 = vmatpush1.msra.mxu0 0.0
      %2703 = vmatprep.subr.mxu0 0.0
      %2704 = vmatpush1.msra.mxu0 0.0
      %2705 = vmatprep.subr.mxu0 0.0
      %2706 = vmatpush1.msra.mxu0 0.0
      %2707 = vmatprep.subr.mxu0 0.0
      %2708 = vmatpush1.msra.mxu0 0.0
      %2709 = vmatprep.subr.mxu0 0.0
      %2710 = vmatpush1.msra.mxu0 %v2681
      %2711 = vmatprep.subr.mxu0 0.0
      %2712 = vmatpush1.msra.mxu0 %v2680
      %2713 = vmatprep.subr.mxu0 0.0
      %2714 = vmatpush1.msra.mxu0 %v2679
      %2715 = vmatprep.subr.mxu0 0.0
      %2716 = vmatpush1.msra.mxu0 %v2678
      %2717 = vmatprep.subr.mxu0 0.0
      %2718 = vmatpush2.msra.mxu0 0.0
      %2719 = vmatprep.subr.mxu0 0.0
      %2720 = vmatpush2.msra.mxu0 0.0
      %2721 = vmatprep.subr.mxu0 0.0
      %2722 = vmatpush2.msra.mxu0 0.0
      %2723 = vmatprep.subr.mxu0 0.0
      %2724 = vmatpush2.msra.mxu0 0.0
      %2725 = vmatprep.subr.mxu0 0.0
      %2726 = vmatpush2.msra.mxu0 0.0
      %2727 = vmatprep.subr.mxu0 0.0
      %2728 = vmatpush2.msra.mxu0 0.0
      %2729 = vmatprep.subr.mxu0 0.0
      %2730 = vmatpush2.msra.mxu0 0.0
      %2731 = vmatprep.subr.mxu0 0.0
      %2732 = vmatpush2.msra.mxu0 0.0
      %2733 = vmatprep.subr.mxu0 0.0
      %2734 = vmatpush2.msra.mxu0 0.0
      %2735 = vmatprep.subr.mxu0 0.0
      %2736 = vmatpush2.msra.mxu0 0.0
      %2737 = vmatprep.subr.mxu0 0.0
      %2738 = vmatpush2.msra.mxu0 0.0
      %2739 = vmatprep.subr.mxu0 0.0
      %2740 = vmatpush2.msra.mxu0 0.0
      %2741 = vmatprep.subr.mxu0 0.0
      %2742 = vmatpush2.msra.mxu0 0.0
      %2743 = vmatprep.subr.mxu0 0.0
      %2744 = vmatpush2.msra.mxu0 0.0
      %2745 = vmatprep.subr.mxu0 0.0
      %2746 = vmatpush2.msra.mxu0 0.0
      %2747 = vmatprep.subr.mxu0 0.0
      %2748 = vmatpush2.msra.mxu0 0.0
      %2749 = vmatprep.mubr.f32.mxu0 0.0
      %2750 = vmatmul.mubr.f32.gmra.mxu0 %v2683
      %v2751 = vpop.f32.mrf.mxu0
      %v2752 = vadd.f32 0.0, %v2751
      %v2753 = vpop.f32.mrf.mxu0
      %2754 = vdwg.mxu0
      %v2755 = vadd.f32 %v2612, %v2752
      %s2756 = sld [smem:[#allocation3 + $0x500]]
      %v2757 = vstv %s2756
      %v2758 = vmul.f32 %v2757, %v324
      %v2759 = vadd.f32 %v2758, 0.0
      %s2760 = sld [smem:[#allocation3 + $0x501]]
      %v2761 = vstv %s2760
      %v2762 = vmul.f32 %v2761, %v399
      %v2763 = vadd.f32 %v2759, %v2762
      %s2764 = sld [smem:[#allocation3 + $0x502]]
      %v2765 = vstv %s2764
      %v2766 = vmul.f32 %v2765, %v474
      %v2767 = vadd.f32 %v2763, %v2766
      %s2768 = sld [smem:[#allocation3 + $0x503]]
      %v2769 = vstv %s2768
      %v2770 = vmul.f32 %v2769, %v547
      %v2771 = vadd.f32 %v2767, %v2770
      %s2772 = sld [smem:[#allocation3 + $0x504]]
      %v2773 = vstv %s2772
      %v2774 = vmul.f32 %v2773, %v617
      %v2775 = vadd.f32 %v2771, %v2774
      %s2776 = sld [smem:[#allocation3 + $0x505]]
      %v2777 = vstv %s2776
      %v2778 = vmul.f32 %v2777, %v687
      %v2779 = vadd.f32 %v2775, %v2778
      %s2780 = sld [smem:[#allocation3 + $0x506]]
      %v2781 = vstv %s2780
      %v2782 = vmul.f32 %v2781, %v760
      %v2783 = vadd.f32 %v2779, %v2782
      %s2784 = sld [smem:[#allocation3 + $0x507]]
      %v2785 = vstv %s2784
      %v2786 = vmul.f32 %v2785, %v830
      %v2787 = vadd.f32 %v2783, %v2786
      %s2788 = sld [smem:[#allocation3 + $0x508]]
      %v2789 = vstv %s2788
      %v2790 = vmul.f32 %v2789, %v900
      %v2791 = vadd.f32 %v2787, %v2790
      %s2792 = sld [smem:[#allocation3 + $0x509]]
      %v2793 = vstv %s2792
      %v2794 = vmul.f32 %v2793, %v973
      %v2795 = vadd.f32 %v2791, %v2794
      %s2796 = sld [smem:[#allocation3 + $0x50a]]
      %v2797 = vstv %s2796
      %v2798 = vmul.f32 %v2797, %v1043
      %v2799 = vadd.f32 %v2795, %v2798
      %s2800 = sld [smem:[#allocation3 + $0x50b]]
      %v2801 = vstv %s2800
      %v2802 = vmul.f32 %v2801, %v1113
      %v2803 = vadd.f32 %v2799, %v2802
      %s2804 = sld [smem:[#allocation3 + $0x50c]]
      %v2805 = vstv %s2804
      %v2806 = vmul.f32 %v2805, %v1186
      %v2807 = vadd.f32 %v2803, %v2806
      %s2808 = sld [smem:[#allocation3 + $0x50d]]
      %v2809 = vstv %s2808
      %v2810 = vmul.f32 %v2809, %v1256
      %v2811 = vadd.f32 %v2807, %v2810
      %s2812 = sld [smem:[#allocation3 + $0x50e]]
      %v2813 = vstv %s2812
      %v2814 = vmul.f32 %v2813, %v1326
      %v2815 = vadd.f32 %v2811, %v2814
      %s2816 = sld [smem:[#allocation6 + $0xa]]
      %v2817 = vstv %s2816
      %v2818 = vadd.f32 %v2815, %v2817
      %v2819 = vmax.f32 %v2818, 0.0
      %s2820 = scalar_lea.vmem %s11, 320
      %v2821 = vld [vmem:[%s2820] sm:$0xff]
      %v2822 = vld [vmem:[%s2820 + $0x8] sm:$0xff]
      %v2823 = vld [vmem:[%s2820 + $0x10] sm:$0xff]
      %v2824 = vld [vmem:[%s2820 + $0x18] sm:$0xff]
      %v2826 = vsel %vm253, %v2819, 0
      %2828 = vmatprep.subr.mxu0 0.0
      %2829 = vmatpush1.msra.mxu0 0.0
      %2830 = vmatprep.subr.mxu0 0.0
      %2831 = vmatpush1.msra.mxu0 0.0
      %2832 = vmatprep.subr.mxu0 0.0
      %2833 = vmatpush1.msra.mxu0 0.0
      %2834 = vmatprep.subr.mxu0 0.0
      %2835 = vmatpush1.msra.mxu0 0.0
      %2836 = vmatprep.subr.mxu0 0.0
      %2837 = vmatpush1.msra.mxu0 0.0
      %2838 = vmatprep.subr.mxu0 0.0
      %2839 = vmatpush1.msra.mxu0 0.0
      %2840 = vmatprep.subr.mxu0 0.0
      %2841 = vmatpush1.msra.mxu0 0.0
      %2842 = vmatprep.subr.mxu0 0.0
      %2843 = vmatpush1.msra.mxu0 0.0
      %2844 = vmatprep.subr.mxu0 0.0
      %2845 = vmatpush1.msra.mxu0 0.0
      %2846 = vmatprep.subr.mxu0 0.0
      %2847 = vmatpush1.msra.mxu0 0.0
      %2848 = vmatprep.subr.mxu0 0.0
      %2849 = vmatpush1.msra.mxu0 0.0
      %2850 = vmatprep.subr.mxu0 0.0
      %2851 = vmatpush1.msra.mxu0 0.0
      %2852 = vmatprep.subr.mxu0 0.0
      %2853 = vmatpush1.msra.mxu0 %v2824
      %2854 = vmatprep.subr.mxu0 0.0
      %2855 = vmatpush1.msra.mxu0 %v2823
      %2856 = vmatprep.subr.mxu0 0.0
      %2857 = vmatpush1.msra.mxu0 %v2822
      %2858 = vmatprep.subr.mxu0 0.0
      %2859 = vmatpush1.msra.mxu0 %v2821
      %2860 = vmatprep.subr.mxu0 0.0
      %2861 = vmatpush2.msra.mxu0 0.0
      %2862 = vmatprep.subr.mxu0 0.0
      %2863 = vmatpush2.msra.mxu0 0.0
      %2864 = vmatprep.subr.mxu0 0.0
      %2865 = vmatpush2.msra.mxu0 0.0
      %2866 = vmatprep.subr.mxu0 0.0
      %2867 = vmatpush2.msra.mxu0 0.0
      %2868 = vmatprep.subr.mxu0 0.0
      %2869 = vmatpush2.msra.mxu0 0.0
      %2870 = vmatprep.subr.mxu0 0.0
      %2871 = vmatpush2.msra.mxu0 0.0
      %2872 = vmatprep.subr.mxu0 0.0
      %2873 = vmatpush2.msra.mxu0 0.0
      %2874 = vmatprep.subr.mxu0 0.0
      %2875 = vmatpush2.msra.mxu0 0.0
      %2876 = vmatprep.subr.mxu0 0.0
      %2877 = vmatpush2.msra.mxu0 0.0
      %2878 = vmatprep.subr.mxu0 0.0
      %2879 = vmatpush2.msra.mxu0 0.0
      %2880 = vmatprep.subr.mxu0 0.0
      %2881 = vmatpush2.msra.mxu0 0.0
      %2882 = vmatprep.subr.mxu0 0.0
      %2883 = vmatpush2.msra.mxu0 0.0
      %2884 = vmatprep.subr.mxu0 0.0
      %2885 = vmatpush2.msra.mxu0 0.0
      %2886 = vmatprep.subr.mxu0 0.0
      %2887 = vmatpush2.msra.mxu0 0.0
      %2888 = vmatprep.subr.mxu0 0.0
      %2889 = vmatpush2.msra.mxu0 0.0
      %2890 = vmatprep.subr.mxu0 0.0
      %2891 = vmatpush2.msra.mxu0 0.0
      %2892 = vmatprep.mubr.f32.mxu0 0.0
      %2893 = vmatmul.mubr.f32.gmra.mxu0 %v2826
      %v2894 = vpop.f32.mrf.mxu0
      %v2895 = vadd.f32 0.0, %v2894
      %v2896 = vpop.f32.mrf.mxu0
      %2897 = vdwg.mxu0
      %v2898 = vadd.f32 %v2755, %v2895
      %s2899 = sld [smem:[#allocation3 + $0x580]]
      %v2900 = vstv %s2899
      %v2901 = vmul.f32 %v2900, %v324
      %v2902 = vadd.f32 %v2901, 0.0
      %s2903 = sld [smem:[#allocation3 + $0x581]]
      %v2904 = vstv %s2903
      %v2905 = vmul.f32 %v2904, %v399
      %v2906 = vadd.f32 %v2902, %v2905
      %s2907 = sld [smem:[#allocation3 + $0x582]]
      %v2908 = vstv %s2907
      %v2909 = vmul.f32 %v2908, %v474
      %v2910 = vadd.f32 %v2906, %v2909
      %s2911 = sld [smem:[#allocation3 + $0x583]]
      %v2912 = vstv %s2911
      %v2913 = vmul.f32 %v2912, %v547
      %v2914 = vadd.f32 %v2910, %v2913
      %s2915 = sld [smem:[#allocation3 + $0x584]]
      %v2916 = vstv %s2915
      %v2917 = vmul.f32 %v2916, %v617
      %v2918 = vadd.f32 %v2914, %v2917
      %s2919 = sld [smem:[#allocation3 + $0x585]]
      %v2920 = vstv %s2919
      %v2921 = vmul.f32 %v2920, %v687
      %v2922 = vadd.f32 %v2918, %v2921
      %s2923 = sld [smem:[#allocation3 + $0x586]]
      %v2924 = vstv %s2923
      %v2925 = vmul.f32 %v2924, %v760
      %v2926 = vadd.f32 %v2922, %v2925
      %s2927 = sld [smem:[#allocation3 + $0x587]]
      %v2928 = vstv %s2927
      %v2929 = vmul.f32 %v2928, %v830
      %v2930 = vadd.f32 %v2926, %v2929
      %s2931 = sld [smem:[#allocation3 + $0x588]]
      %v2932 = vstv %s2931
      %v2933 = vmul.f32 %v2932, %v900
      %v2934 = vadd.f32 %v2930, %v2933
      %s2935 = sld [smem:[#allocation3 + $0x589]]
      %v2936 = vstv %s2935
      %v2937 = vmul.f32 %v2936, %v973
      %v2938 = vadd.f32 %v2934, %v2937
      %s2939 = sld [smem:[#allocation3 + $0x58a]]
      %v2940 = vstv %s2939
      %v2941 = vmul.f32 %v2940, %v1043
      %v2942 = vadd.f32 %v2938, %v2941
      %s2943 = sld [smem:[#allocation3 + $0x58b]]
      %v2944 = vstv %s2943
      %v2945 = vmul.f32 %v2944, %v1113
      %v2946 = vadd.f32 %v2942, %v2945
      %s2947 = sld [smem:[#allocation3 + $0x58c]]
      %v2948 = vstv %s2947
      %v2949 = vmul.f32 %v2948, %v1186
      %v2950 = vadd.f32 %v2946, %v2949
      %s2951 = sld [smem:[#allocation3 + $0x58d]]
      %v2952 = vstv %s2951
      %v2953 = vmul.f32 %v2952, %v1256
      %v2954 = vadd.f32 %v2950, %v2953
      %s2955 = sld [smem:[#allocation3 + $0x58e]]
      %v2956 = vstv %s2955
      %v2957 = vmul.f32 %v2956, %v1326
      %v2958 = vadd.f32 %v2954, %v2957
      %s2959 = sld [smem:[#allocation6 + $0xb]]
      %v2960 = vstv %s2959
      %v2961 = vadd.f32 %v2958, %v2960
      %v2962 = vmax.f32 %v2961, 0.0
      %s2963 = scalar_lea.vmem %s11, 352
      %v2964 = vld [vmem:[%s2963] sm:$0xff]
      %v2965 = vld [vmem:[%s2963 + $0x8] sm:$0xff]
      %v2966 = vld [vmem:[%s2963 + $0x10] sm:$0xff]
      %v2967 = vld [vmem:[%s2963 + $0x18] sm:$0xff]
      %v2969 = vsel %vm253, %v2962, 0
      %2971 = vmatprep.subr.mxu0 0.0
      %2972 = vmatpush1.msra.mxu0 0.0
      %2973 = vmatprep.subr.mxu0 0.0
      %2974 = vmatpush1.msra.mxu0 0.0
      %2975 = vmatprep.subr.mxu0 0.0
      %2976 = vmatpush1.msra.mxu0 0.0
      %2977 = vmatprep.subr.mxu0 0.0
      %2978 = vmatpush1.msra.mxu0 0.0
      %2979 = vmatprep.subr.mxu0 0.0
      %2980 = vmatpush1.msra.mxu0 0.0
      %2981 = vmatprep.subr.mxu0 0.0
      %2982 = vmatpush1.msra.mxu0 0.0
      %2983 = vmatprep.subr.mxu0 0.0
      %2984 = vmatpush1.msra.mxu0 0.0
      %2985 = vmatprep.subr.mxu0 0.0
      %2986 = vmatpush1.msra.mxu0 0.0
      %2987 = vmatprep.subr.mxu0 0.0
      %2988 = vmatpush1.msra.mxu0 0.0
      %2989 = vmatprep.subr.mxu0 0.0
      %2990 = vmatpush1.msra.mxu0 0.0
      %2991 = vmatprep.subr.mxu0 0.0
      %2992 = vmatpush1.msra.mxu0 0.0
      %2993 = vmatprep.subr.mxu0 0.0
      %2994 = vmatpush1.msra.mxu0 0.0
      %2995 = vmatprep.subr.mxu0 0.0
      %2996 = vmatpush1.msra.mxu0 %v2967
      %2997 = vmatprep.subr.mxu0 0.0
      %2998 = vmatpush1.msra.mxu0 %v2966
      %2999 = vmatprep.subr.mxu0 0.0
      %3000 = vmatpush1.msra.mxu0 %v2965
      %3001 = vmatprep.subr.mxu0 0.0
      %3002 = vmatpush1.msra.mxu0 %v2964
      %3003 = vmatprep.subr.mxu0 0.0
      %3004 = vmatpush2.msra.mxu0 0.0
      %3005 = vmatprep.subr.mxu0 0.0
      %3006 = vmatpush2.msra.mxu0 0.0
      %3007 = vmatprep.subr.mxu0 0.0
      %3008 = vmatpush2.msra.mxu0 0.0
      %3009 = vmatprep.subr.mxu0 0.0
      %3010 = vmatpush2.msra.mxu0 0.0
      %3011 = vmatprep.subr.mxu0 0.0
      %3012 = vmatpush2.msra.mxu0 0.0
      %3013 = vmatprep.subr.mxu0 0.0
      %3014 = vmatpush2.msra.mxu0 0.0
      %3015 = vmatprep.subr.mxu0 0.0
      %3016 = vmatpush2.msra.mxu0 0.0
      %3017 = vmatprep.subr.mxu0 0.0
      %3018 = vmatpush2.msra.mxu0 0.0
      %3019 = vmatprep.subr.mxu0 0.0
      %3020 = vmatpush2.msra.mxu0 0.0
      %3021 = vmatprep.subr.mxu0 0.0
      %3022 = vmatpush2.msra.mxu0 0.0
      %3023 = vmatprep.subr.mxu0 0.0
      %3024 = vmatpush2.msra.mxu0 0.0
      %3025 = vmatprep.subr.mxu0 0.0
      %3026 = vmatpush2.msra.mxu0 0.0
      %3027 = vmatprep.subr.mxu0 0.0
      %3028 = vmatpush2.msra.mxu0 0.0
      %3029 = vmatprep.subr.mxu0 0.0
      %3030 = vmatpush2.msra.mxu0 0.0
      %3031 = vmatprep.subr.mxu0 0.0
      %3032 = vmatpush2.msra.mxu0 0.0
      %3033 = vmatprep.subr.mxu0 0.0
      %3034 = vmatpush2.msra.mxu0 0.0
      %3035 = vmatprep.mubr.f32.mxu0 0.0
      %3036 = vmatmul.mubr.f32.gmra.mxu0 %v2969
      %v3037 = vpop.f32.mrf.mxu0
      %v3038 = vadd.f32 0.0, %v3037
      %v3039 = vpop.f32.mrf.mxu0
      %3040 = vdwg.mxu0
      %v3041 = vadd.f32 %v2898, %v3038
      %s3042 = sld [smem:[#allocation3 + $0x600]]
      %v3043 = vstv %s3042
      %v3044 = vmul.f32 %v3043, %v324
      %v3045 = vadd.f32 %v3044, 0.0
      %s3046 = sld [smem:[#allocation3 + $0x601]]
      %v3047 = vstv %s3046
      %v3048 = vmul.f32 %v3047, %v399
      %v3049 = vadd.f32 %v3045, %v3048
      %s3050 = sld [smem:[#allocation3 + $0x602]]
      %v3051 = vstv %s3050
      %v3052 = vmul.f32 %v3051, %v474
      %v3053 = vadd.f32 %v3049, %v3052
      %s3054 = sld [smem:[#allocation3 + $0x603]]
      %v3055 = vstv %s3054
      %v3056 = vmul.f32 %v3055, %v547
      %v3057 = vadd.f32 %v3053, %v3056
      %s3058 = sld [smem:[#allocation3 + $0x604]]
      %v3059 = vstv %s3058
      %v3060 = vmul.f32 %v3059, %v617
      %v3061 = vadd.f32 %v3057, %v3060
      %s3062 = sld [smem:[#allocation3 + $0x605]]
      %v3063 = vstv %s3062
      %v3064 = vmul.f32 %v3063, %v687
      %v3065 = vadd.f32 %v3061, %v3064
      %s3066 = sld [smem:[#allocation3 + $0x606]]
      %v3067 = vstv %s3066
      %v3068 = vmul.f32 %v3067, %v760
      %v3069 = vadd.f32 %v3065, %v3068
      %s3070 = sld [smem:[#allocation3 + $0x607]]
      %v3071 = vstv %s3070
      %v3072 = vmul.f32 %v3071, %v830
      %v3073 = vadd.f32 %v3069, %v3072
      %s3074 = sld [smem:[#allocation3 + $0x608]]
      %v3075 = vstv %s3074
      %v3076 = vmul.f32 %v3075, %v900
      %v3077 = vadd.f32 %v3073, %v3076
      %s3078 = sld [smem:[#allocation3 + $0x609]]
      %v3079 = vstv %s3078
      %v3080 = vmul.f32 %v3079, %v973
      %v3081 = vadd.f32 %v3077, %v3080
      %s3082 = sld [smem:[#allocation3 + $0x60a]]
      %v3083 = vstv %s3082
      %v3084 = vmul.f32 %v3083, %v1043
      %v3085 = vadd.f32 %v3081, %v3084
      %s3086 = sld [smem:[#allocation3 + $0x60b]]
      %v3087 = vstv %s3086
      %v3088 = vmul.f32 %v3087, %v1113
      %v3089 = vadd.f32 %v3085, %v3088
      %s3090 = sld [smem:[#allocation3 + $0x60c]]
      %v3091 = vstv %s3090
      %v3092 = vmul.f32 %v3091, %v1186
      %v3093 = vadd.f32 %v3089, %v3092
      %s3094 = sld [smem:[#allocation3 + $0x60d]]
      %v3095 = vstv %s3094
      %v3096 = vmul.f32 %v3095, %v1256
      %v3097 = vadd.f32 %v3093, %v3096
      %s3098 = sld [smem:[#allocation3 + $0x60e]]
      %v3099 = vstv %s3098
      %v3100 = vmul.f32 %v3099, %v1326
      %v3101 = vadd.f32 %v3097, %v3100
      %s3102 = sld [smem:[#allocation6 + $0xc]]
      %v3103 = vstv %s3102
      %v3104 = vadd.f32 %v3101, %v3103
      %v3105 = vmax.f32 %v3104, 0.0
      %s3106 = scalar_lea.vmem %s11, 384
      %v3107 = vld [vmem:[%s3106] sm:$0xff]
      %v3108 = vld [vmem:[%s3106 + $0x8] sm:$0xff]
      %v3109 = vld [vmem:[%s3106 + $0x10] sm:$0xff]
      %v3110 = vld [vmem:[%s3106 + $0x18] sm:$0xff]
      %v3112 = vsel %vm253, %v3105, 0
      %3114 = vmatprep.subr.mxu0 0.0
      %3115 = vmatpush1.msra.mxu0 0.0
      %3116 = vmatprep.subr.mxu0 0.0
      %3117 = vmatpush1.msra.mxu0 0.0
      %3118 = vmatprep.subr.mxu0 0.0
      %3119 = vmatpush1.msra.mxu0 0.0
      %3120 = vmatprep.subr.mxu0 0.0
      %3121 = vmatpush1.msra.mxu0 0.0
      %3122 = vmatprep.subr.mxu0 0.0
      %3123 = vmatpush1.msra.mxu0 0.0
      %3124 = vmatprep.subr.mxu0 0.0
      %3125 = vmatpush1.msra.mxu0 0.0
      %3126 = vmatprep.subr.mxu0 0.0
      %3127 = vmatpush1.msra.mxu0 0.0
      %3128 = vmatprep.subr.mxu0 0.0
      %3129 = vmatpush1.msra.mxu0 0.0
      %3130 = vmatprep.subr.mxu0 0.0
      %3131 = vmatpush1.msra.mxu0 0.0
      %3132 = vmatprep.subr.mxu0 0.0
      %3133 = vmatpush1.msra.mxu0 0.0
      %3134 = vmatprep.subr.mxu0 0.0
      %3135 = vmatpush1.msra.mxu0 0.0
      %3136 = vmatprep.subr.mxu0 0.0
      %3137 = vmatpush1.msra.mxu0 0.0
      %3138 = vmatprep.subr.mxu0 0.0
      %3139 = vmatpush1.msra.mxu0 %v3110
      %3140 = vmatprep.subr.mxu0 0.0
      %3141 = vmatpush1.msra.mxu0 %v3109
      %3142 = vmatprep.subr.mxu0 0.0
      %3143 = vmatpush1.msra.mxu0 %v3108
      %3144 = vmatprep.subr.mxu0 0.0
      %3145 = vmatpush1.msra.mxu0 %v3107
      %3146 = vmatprep.subr.mxu0 0.0
      %3147 = vmatpush2.msra.mxu0 0.0
      %3148 = vmatprep.subr.mxu0 0.0
      %3149 = vmatpush2.msra.mxu0 0.0
      %3150 = vmatprep.subr.mxu0 0.0
      %3151 = vmatpush2.msra.mxu0 0.0
      %3152 = vmatprep.subr.mxu0 0.0
      %3153 = vmatpush2.msra.mxu0 0.0
      %3154 = vmatprep.subr.mxu0 0.0
      %3155 = vmatpush2.msra.mxu0 0.0
      %3156 = vmatprep.subr.mxu0 0.0
      %3157 = vmatpush2.msra.mxu0 0.0
      %3158 = vmatprep.subr.mxu0 0.0
      %3159 = vmatpush2.msra.mxu0 0.0
      %3160 = vmatprep.subr.mxu0 0.0
      %3161 = vmatpush2.msra.mxu0 0.0
      %3162 = vmatprep.subr.mxu0 0.0
      %3163 = vmatpush2.msra.mxu0 0.0
      %3164 = vmatprep.subr.mxu0 0.0
      %3165 = vmatpush2.msra.mxu0 0.0
      %3166 = vmatprep.subr.mxu0 0.0
      %3167 = vmatpush2.msra.mxu0 0.0
      %3168 = vmatprep.subr.mxu0 0.0
      %3169 = vmatpush2.msra.mxu0 0.0
      %3170 = vmatprep.subr.mxu0 0.0
      %3171 = vmatpush2.msra.mxu0 0.0
      %3172 = vmatprep.subr.mxu0 0.0
      %3173 = vmatpush2.msra.mxu0 0.0
      %3174 = vmatprep.subr.mxu0 0.0
      %3175 = vmatpush2.msra.mxu0 0.0
      %3176 = vmatprep.subr.mxu0 0.0
      %3177 = vmatpush2.msra.mxu0 0.0
      %3178 = vmatprep.mubr.f32.mxu0 0.0
      %3179 = vmatmul.mubr.f32.gmra.mxu0 %v3112
      %v3180 = vpop.f32.mrf.mxu0
      %v3181 = vadd.f32 0.0, %v3180
      %v3182 = vpop.f32.mrf.mxu0
      %3183 = vdwg.mxu0
      %v3184 = vadd.f32 %v3041, %v3181
      %s3185 = sld [smem:[#allocation3 + $0x680]]
      %v3186 = vstv %s3185
      %v3187 = vmul.f32 %v3186, %v324
      %v3188 = vadd.f32 %v3187, 0.0
      %s3189 = sld [smem:[#allocation3 + $0x681]]
      %v3190 = vstv %s3189
      %v3191 = vmul.f32 %v3190, %v399
      %v3192 = vadd.f32 %v3188, %v3191
      %s3193 = sld [smem:[#allocation3 + $0x682]]
      %v3194 = vstv %s3193
      %v3195 = vmul.f32 %v3194, %v474
      %v3196 = vadd.f32 %v3192, %v3195
      %s3197 = sld [smem:[#allocation3 + $0x683]]
      %v3198 = vstv %s3197
      %v3199 = vmul.f32 %v3198, %v547
      %v3200 = vadd.f32 %v3196, %v3199
      %s3201 = sld [smem:[#allocation3 + $0x684]]
      %v3202 = vstv %s3201
      %v3203 = vmul.f32 %v3202, %v617
      %v3204 = vadd.f32 %v3200, %v3203
      %s3205 = sld [smem:[#allocation3 + $0x685]]
      %v3206 = vstv %s3205
      %v3207 = vmul.f32 %v3206, %v687
      %v3208 = vadd.f32 %v3204, %v3207
      %s3209 = sld [smem:[#allocation3 + $0x686]]
      %v3210 = vstv %s3209
      %v3211 = vmul.f32 %v3210, %v760
      %v3212 = vadd.f32 %v3208, %v3211
      %s3213 = sld [smem:[#allocation3 + $0x687]]
      %v3214 = vstv %s3213
      %v3215 = vmul.f32 %v3214, %v830
      %v3216 = vadd.f32 %v3212, %v3215
      %s3217 = sld [smem:[#allocation3 + $0x688]]
      %v3218 = vstv %s3217
      %v3219 = vmul.f32 %v3218, %v900
      %v3220 = vadd.f32 %v3216, %v3219
      %s3221 = sld [smem:[#allocation3 + $0x689]]
      %v3222 = vstv %s3221
      %v3223 = vmul.f32 %v3222, %v973
      %v3224 = vadd.f32 %v3220, %v3223
      %s3225 = sld [smem:[#allocation3 + $0x68a]]
      %v3226 = vstv %s3225
      %v3227 = vmul.f32 %v3226, %v1043
      %v3228 = vadd.f32 %v3224, %v3227
      %s3229 = sld [smem:[#allocation3 + $0x68b]]
      %v3230 = vstv %s3229
      %v3231 = vmul.f32 %v3230, %v1113
      %v3232 = vadd.f32 %v3228, %v3231
      %s3233 = sld [smem:[#allocation3 + $0x68c]]
      %v3234 = vstv %s3233
      %v3235 = vmul.f32 %v3234, %v1186
      %v3236 = vadd.f32 %v3232, %v3235
      %s3237 = sld [smem:[#allocation3 + $0x68d]]
      %v3238 = vstv %s3237
      %v3239 = vmul.f32 %v3238, %v1256
      %v3240 = vadd.f32 %v3236, %v3239
      %s3241 = sld [smem:[#allocation3 + $0x68e]]
      %v3242 = vstv %s3241
      %v3243 = vmul.f32 %v3242, %v1326
      %v3244 = vadd.f32 %v3240, %v3243
      %s3245 = sld [smem:[#allocation6 + $0xd]]
      %v3246 = vstv %s3245
      %v3247 = vadd.f32 %v3244, %v3246
      %v3248 = vmax.f32 %v3247, 0.0
      %s3249 = scalar_lea.vmem %s11, 416
      %v3250 = vld [vmem:[%s3249] sm:$0xff]
      %v3251 = vld [vmem:[%s3249 + $0x8] sm:$0xff]
      %v3252 = vld [vmem:[%s3249 + $0x10] sm:$0xff]
      %v3253 = vld [vmem:[%s3249 + $0x18] sm:$0xff]
      %v3255 = vsel %vm253, %v3248, 0
      %3257 = vmatprep.subr.mxu0 0.0
      %3258 = vmatpush1.msra.mxu0 0.0
      %3259 = vmatprep.subr.mxu0 0.0
      %3260 = vmatpush1.msra.mxu0 0.0
      %3261 = vmatprep.subr.mxu0 0.0
      %3262 = vmatpush1.msra.mxu0 0.0
      %3263 = vmatprep.subr.mxu0 0.0
      %3264 = vmatpush1.msra.mxu0 0.0
      %3265 = vmatprep.subr.mxu0 0.0
      %3266 = vmatpush1.msra.mxu0 0.0
      %3267 = vmatprep.subr.mxu0 0.0
      %3268 = vmatpush1.msra.mxu0 0.0
      %3269 = vmatprep.subr.mxu0 0.0
      %3270 = vmatpush1.msra.mxu0 0.0
      %3271 = vmatprep.subr.mxu0 0.0
      %3272 = vmatpush1.msra.mxu0 0.0
      %3273 = vmatprep.subr.mxu0 0.0
      %3274 = vmatpush1.msra.mxu0 0.0
      %3275 = vmatprep.subr.mxu0 0.0
      %3276 = vmatpush1.msra.mxu0 0.0
      %3277 = vmatprep.subr.mxu0 0.0
      %3278 = vmatpush1.msra.mxu0 0.0
      %3279 = vmatprep.subr.mxu0 0.0
      %3280 = vmatpush1.msra.mxu0 0.0
      %3281 = vmatprep.subr.mxu0 0.0
      %3282 = vmatpush1.msra.mxu0 %v3253
      %3283 = vmatprep.subr.mxu0 0.0
      %3284 = vmatpush1.msra.mxu0 %v3252
      %3285 = vmatprep.subr.mxu0 0.0
      %3286 = vmatpush1.msra.mxu0 %v3251
      %3287 = vmatprep.subr.mxu0 0.0
      %3288 = vmatpush1.msra.mxu0 %v3250
      %3289 = vmatprep.subr.mxu0 0.0
      %3290 = vmatpush2.msra.mxu0 0.0
      %3291 = vmatprep.subr.mxu0 0.0
      %3292 = vmatpush2.msra.mxu0 0.0
      %3293 = vmatprep.subr.mxu0 0.0
      %3294 = vmatpush2.msra.mxu0 0.0
      %3295 = vmatprep.subr.mxu0 0.0
      %3296 = vmatpush2.msra.mxu0 0.0
      %3297 = vmatprep.subr.mxu0 0.0
      %3298 = vmatpush2.msra.mxu0 0.0
      %3299 = vmatprep.subr.mxu0 0.0
      %3300 = vmatpush2.msra.mxu0 0.0
      %3301 = vmatprep.subr.mxu0 0.0
      %3302 = vmatpush2.msra.mxu0 0.0
      %3303 = vmatprep.subr.mxu0 0.0
      %3304 = vmatpush2.msra.mxu0 0.0
      %3305 = vmatprep.subr.mxu0 0.0
      %3306 = vmatpush2.msra.mxu0 0.0
      %3307 = vmatprep.subr.mxu0 0.0
      %3308 = vmatpush2.msra.mxu0 0.0
      %3309 = vmatprep.subr.mxu0 0.0
      %3310 = vmatpush2.msra.mxu0 0.0
      %3311 = vmatprep.subr.mxu0 0.0
      %3312 = vmatpush2.msra.mxu0 0.0
      %3313 = vmatprep.subr.mxu0 0.0
      %3314 = vmatpush2.msra.mxu0 0.0
      %3315 = vmatprep.subr.mxu0 0.0
      %3316 = vmatpush2.msra.mxu0 0.0
      %3317 = vmatprep.subr.mxu0 0.0
      %3318 = vmatpush2.msra.mxu0 0.0
      %3319 = vmatprep.subr.mxu0 0.0
      %3320 = vmatpush2.msra.mxu0 0.0
      %3321 = vmatprep.mubr.f32.mxu0 0.0
      %3322 = vmatmul.mubr.f32.gmra.mxu0 %v3255
      %v3323 = vpop.f32.mrf.mxu0
      %v3324 = vadd.f32 0.0, %v3323
      %v3325 = vpop.f32.mrf.mxu0
      %3326 = vdwg.mxu0
      %v3327 = vadd.f32 %v3184, %v3324
      %s3328 = sld [smem:[#allocation3 + $0x700]]
      %v3329 = vstv %s3328
      %v3330 = vmul.f32 %v3329, %v324
      %v3331 = vadd.f32 %v3330, 0.0
      %s3332 = sld [smem:[#allocation3 + $0x701]]
      %v3333 = vstv %s3332
      %v3334 = vmul.f32 %v3333, %v399
      %v3335 = vadd.f32 %v3331, %v3334
      %s3336 = sld [smem:[#allocation3 + $0x702]]
      %v3337 = vstv %s3336
      %v3338 = vmul.f32 %v3337, %v474
      %v3339 = vadd.f32 %v3335, %v3338
      %s3340 = sld [smem:[#allocation3 + $0x703]]
      %v3341 = vstv %s3340
      %v3342 = vmul.f32 %v3341, %v547
      %v3343 = vadd.f32 %v3339, %v3342
      %s3344 = sld [smem:[#allocation3 + $0x704]]
      %v3345 = vstv %s3344
      %v3346 = vmul.f32 %v3345, %v617
      %v3347 = vadd.f32 %v3343, %v3346
      %s3348 = sld [smem:[#allocation3 + $0x705]]
      %v3349 = vstv %s3348
      %v3350 = vmul.f32 %v3349, %v687
      %v3351 = vadd.f32 %v3347, %v3350
      %s3352 = sld [smem:[#allocation3 + $0x706]]
      %v3353 = vstv %s3352
      %v3354 = vmul.f32 %v3353, %v760
      %v3355 = vadd.f32 %v3351, %v3354
      %s3356 = sld [smem:[#allocation3 + $0x707]]
      %v3357 = vstv %s3356
      %v3358 = vmul.f32 %v3357, %v830
      %v3359 = vadd.f32 %v3355, %v3358
      %s3360 = sld [smem:[#allocation3 + $0x708]]
      %v3361 = vstv %s3360
      %v3362 = vmul.f32 %v3361, %v900
      %v3363 = vadd.f32 %v3359, %v3362
      %s3364 = sld [smem:[#allocation3 + $0x709]]
      %v3365 = vstv %s3364
      %v3366 = vmul.f32 %v3365, %v973
      %v3367 = vadd.f32 %v3363, %v3366
      %s3368 = sld [smem:[#allocation3 + $0x70a]]
      %v3369 = vstv %s3368
      %v3370 = vmul.f32 %v3369, %v1043
      %v3371 = vadd.f32 %v3367, %v3370
      %s3372 = sld [smem:[#allocation3 + $0x70b]]
      %v3373 = vstv %s3372
      %v3374 = vmul.f32 %v3373, %v1113
      %v3375 = vadd.f32 %v3371, %v3374
      %s3376 = sld [smem:[#allocation3 + $0x70c]]
      %v3377 = vstv %s3376
      %v3378 = vmul.f32 %v3377, %v1186
      %v3379 = vadd.f32 %v3375, %v3378
      %s3380 = sld [smem:[#allocation3 + $0x70d]]
      %v3381 = vstv %s3380
      %v3382 = vmul.f32 %v3381, %v1256
      %v3383 = vadd.f32 %v3379, %v3382
      %s3384 = sld [smem:[#allocation3 + $0x70e]]
      %v3385 = vstv %s3384
      %v3386 = vmul.f32 %v3385, %v1326
      %v3387 = vadd.f32 %v3383, %v3386
      %s3388 = sld [smem:[#allocation6 + $0xe]]
      %v3389 = vstv %s3388
      %v3390 = vadd.f32 %v3387, %v3389
      %v3391 = vmax.f32 %v3390, 0.0
      %s3392 = scalar_lea.vmem %s11, 448
      %v3393 = vld [vmem:[%s3392] sm:$0xff]
      %v3394 = vld [vmem:[%s3392 + $0x8] sm:$0xff]
      %v3395 = vld [vmem:[%s3392 + $0x10] sm:$0xff]
      %v3396 = vld [vmem:[%s3392 + $0x18] sm:$0xff]
      %v3398 = vsel %vm253, %v3391, 0
      %3400 = vmatprep.subr.mxu0 0.0
      %3401 = vmatpush1.msra.mxu0 0.0
      %3402 = vmatprep.subr.mxu0 0.0
      %3403 = vmatpush1.msra.mxu0 0.0
      %3404 = vmatprep.subr.mxu0 0.0
      %3405 = vmatpush1.msra.mxu0 0.0
      %3406 = vmatprep.subr.mxu0 0.0
      %3407 = vmatpush1.msra.mxu0 0.0
      %3408 = vmatprep.subr.mxu0 0.0
      %3409 = vmatpush1.msra.mxu0 0.0
      %3410 = vmatprep.subr.mxu0 0.0
      %3411 = vmatpush1.msra.mxu0 0.0
      %3412 = vmatprep.subr.mxu0 0.0
      %3413 = vmatpush1.msra.mxu0 0.0
      %3414 = vmatprep.subr.mxu0 0.0
      %3415 = vmatpush1.msra.mxu0 0.0
      %3416 = vmatprep.subr.mxu0 0.0
      %3417 = vmatpush1.msra.mxu0 0.0
      %3418 = vmatprep.subr.mxu0 0.0
      %3419 = vmatpush1.msra.mxu0 0.0
      %3420 = vmatprep.subr.mxu0 0.0
      %3421 = vmatpush1.msra.mxu0 0.0
      %3422 = vmatprep.subr.mxu0 0.0
      %3423 = vmatpush1.msra.mxu0 0.0
      %3424 = vmatprep.subr.mxu0 0.0
      %3425 = vmatpush1.msra.mxu0 %v3396
      %3426 = vmatprep.subr.mxu0 0.0
      %3427 = vmatpush1.msra.mxu0 %v3395
      %3428 = vmatprep.subr.mxu0 0.0
      %3429 = vmatpush1.msra.mxu0 %v3394
      %3430 = vmatprep.subr.mxu0 0.0
      %3431 = vmatpush1.msra.mxu0 %v3393
      %3432 = vmatprep.subr.mxu0 0.0
      %3433 = vmatpush2.msra.mxu0 0.0
      %3434 = vmatprep.subr.mxu0 0.0
      %3435 = vmatpush2.msra.mxu0 0.0
      %3436 = vmatprep.subr.mxu0 0.0
      %3437 = vmatpush2.msra.mxu0 0.0
      %3438 = vmatprep.subr.mxu0 0.0
      %3439 = vmatpush2.msra.mxu0 0.0
      %3440 = vmatprep.subr.mxu0 0.0
      %3441 = vmatpush2.msra.mxu0 0.0
      %3442 = vmatprep.subr.mxu0 0.0
      %3443 = vmatpush2.msra.mxu0 0.0
      %3444 = vmatprep.subr.mxu0 0.0
      %3445 = vmatpush2.msra.mxu0 0.0
      %3446 = vmatprep.subr.mxu0 0.0
      %3447 = vmatpush2.msra.mxu0 0.0
      %3448 = vmatprep.subr.mxu0 0.0
      %3449 = vmatpush2.msra.mxu0 0.0
      %3450 = vmatprep.subr.mxu0 0.0
      %3451 = vmatpush2.msra.mxu0 0.0
      %3452 = vmatprep.subr.mxu0 0.0
      %3453 = vmatpush2.msra.mxu0 0.0
      %3454 = vmatprep.subr.mxu0 0.0
      %3455 = vmatpush2.msra.mxu0 0.0
      %3456 = vmatprep.subr.mxu0 0.0
      %3457 = vmatpush2.msra.mxu0 0.0
      %3458 = vmatprep.subr.mxu0 0.0
      %3459 = vmatpush2.msra.mxu0 0.0
      %3460 = vmatprep.subr.mxu0 0.0
      %3461 = vmatpush2.msra.mxu0 0.0
      %3462 = vmatprep.subr.mxu0 0.0
      %3463 = vmatpush2.msra.mxu0 0.0
      %3464 = vmatprep.mubr.f32.mxu0 0.0
      %3465 = vmatmul.mubr.f32.gmra.mxu0 %v3398
      %v3466 = vpop.f32.mrf.mxu0
      %v3467 = vadd.f32 0.0, %v3466
      %v3468 = vpop.f32.mrf.mxu0
      %3469 = vdwg.mxu0
      %v3470 = vadd.f32 %v3327, %v3467
      %s3471 = sld [smem:[#allocation3 + $0x780]]
      %v3472 = vstv %s3471
      %v3473 = vmul.f32 %v3472, %v324
      %v3474 = vadd.f32 %v3473, 0.0
      %s3475 = sld [smem:[#allocation3 + $0x781]]
      %v3476 = vstv %s3475
      %v3477 = vmul.f32 %v3476, %v399
      %v3478 = vadd.f32 %v3474, %v3477
      %s3479 = sld [smem:[#allocation3 + $0x782]]
      %v3480 = vstv %s3479
      %v3481 = vmul.f32 %v3480, %v474
      %v3482 = vadd.f32 %v3478, %v3481
      %s3483 = sld [smem:[#allocation3 + $0x783]]
      %v3484 = vstv %s3483
      %v3485 = vmul.f32 %v3484, %v547
      %v3486 = vadd.f32 %v3482, %v3485
      %s3487 = sld [smem:[#allocation3 + $0x784]]
      %v3488 = vstv %s3487
      %v3489 = vmul.f32 %v3488, %v617
      %v3490 = vadd.f32 %v3486, %v3489
      %s3491 = sld [smem:[#allocation3 + $0x785]]
      %v3492 = vstv %s3491
      %v3493 = vmul.f32 %v3492, %v687
      %v3494 = vadd.f32 %v3490, %v3493
      %s3495 = sld [smem:[#allocation3 + $0x786]]
      %v3496 = vstv %s3495
      %v3497 = vmul.f32 %v3496, %v760
      %v3498 = vadd.f32 %v3494, %v3497
      %s3499 = sld [smem:[#allocation3 + $0x787]]
      %v3500 = vstv %s3499
      %v3501 = vmul.f32 %v3500, %v830
      %v3502 = vadd.f32 %v3498, %v3501
      %s3503 = sld [smem:[#allocation3 + $0x788]]
      %v3504 = vstv %s3503
      %v3505 = vmul.f32 %v3504, %v900
      %v3506 = vadd.f32 %v3502, %v3505
      %s3507 = sld [smem:[#allocation3 + $0x789]]
      %v3508 = vstv %s3507
      %v3509 = vmul.f32 %v3508, %v973
      %v3510 = vadd.f32 %v3506, %v3509
      %s3511 = sld [smem:[#allocation3 + $0x78a]]
      %v3512 = vstv %s3511
      %v3513 = vmul.f32 %v3512, %v1043
      %v3514 = vadd.f32 %v3510, %v3513
      %s3515 = sld [smem:[#allocation3 + $0x78b]]
      %v3516 = vstv %s3515
      %v3517 = vmul.f32 %v3516, %v1113
      %v3518 = vadd.f32 %v3514, %v3517
      %s3519 = sld [smem:[#allocation3 + $0x78c]]
      %v3520 = vstv %s3519
      %v3521 = vmul.f32 %v3520, %v1186
      %v3522 = vadd.f32 %v3518, %v3521
      %s3523 = sld [smem:[#allocation3 + $0x78d]]
      %v3524 = vstv %s3523
      %v3525 = vmul.f32 %v3524, %v1256
      %v3526 = vadd.f32 %v3522, %v3525
      %s3527 = sld [smem:[#allocation3 + $0x78e]]
      %v3528 = vstv %s3527
      %v3529 = vmul.f32 %v3528, %v1326
      %v3530 = vadd.f32 %v3526, %v3529
      %s3531 = sld [smem:[#allocation6 + $0xf]]
      %v3532 = vstv %s3531
      %v3533 = vadd.f32 %v3530, %v3532
      %v3534 = vmax.f32 %v3533, 0.0
      %s3535 = scalar_lea.vmem %s11, 480
      %v3536 = vld [vmem:[%s3535] sm:$0xff]
      %v3537 = vld [vmem:[%s3535 + $0x8] sm:$0xff]
      %v3538 = vld [vmem:[%s3535 + $0x10] sm:$0xff]
      %v3539 = vld [vmem:[%s3535 + $0x18] sm:$0xff]
      %v3541 = vsel %vm253, %v3534, 0
      %3543 = vmatprep.subr.mxu0 0.0
      %3544 = vmatpush1.msra.mxu0 0.0
      %3545 = vmatprep.subr.mxu0 0.0
      %3546 = vmatpush1.msra.mxu0 0.0
      %3547 = vmatprep.subr.mxu0 0.0
      %3548 = vmatpush1.msra.mxu0 0.0
      %3549 = vmatprep.subr.mxu0 0.0
      %3550 = vmatpush1.msra.mxu0 0.0
      %3551 = vmatprep.subr.mxu0 0.0
      %3552 = vmatpush1.msra.mxu0 0.0
      %3553 = vmatprep.subr.mxu0 0.0
      %3554 = vmatpush1.msra.mxu0 0.0
      %3555 = vmatprep.subr.mxu0 0.0
      %3556 = vmatpush1.msra.mxu0 0.0
      %3557 = vmatprep.subr.mxu0 0.0
      %3558 = vmatpush1.msra.mxu0 0.0
      %3559 = vmatprep.subr.mxu0 0.0
      %3560 = vmatpush1.msra.mxu0 0.0
      %3561 = vmatprep.subr.mxu0 0.0
      %3562 = vmatpush1.msra.mxu0 0.0
      %3563 = vmatprep.subr.mxu0 0.0
      %3564 = vmatpush1.msra.mxu0 0.0
      %3565 = vmatprep.subr.mxu0 0.0
      %3566 = vmatpush1.msra.mxu0 0.0
      %3567 = vmatprep.subr.mxu0 0.0
      %3568 = vmatpush1.msra.mxu0 %v3539
      %3569 = vmatprep.subr.mxu0 0.0
      %3570 = vmatpush1.msra.mxu0 %v3538
      %3571 = vmatprep.subr.mxu0 0.0
      %3572 = vmatpush1.msra.mxu0 %v3537
      %3573 = vmatprep.subr.mxu0 0.0
      %3574 = vmatpush1.msra.mxu0 %v3536
      %3575 = vmatprep.subr.mxu0 0.0
      %3576 = vmatpush2.msra.mxu0 0.0
      %3577 = vmatprep.subr.mxu0 0.0
      %3578 = vmatpush2.msra.mxu0 0.0
      %3579 = vmatprep.subr.mxu0 0.0
      %3580 = vmatpush2.msra.mxu0 0.0
      %3581 = vmatprep.subr.mxu0 0.0
      %3582 = vmatpush2.msra.mxu0 0.0
      %3583 = vmatprep.subr.mxu0 0.0
      %3584 = vmatpush2.msra.mxu0 0.0
      %3585 = vmatprep.subr.mxu0 0.0
      %3586 = vmatpush2.msra.mxu0 0.0
      %3587 = vmatprep.subr.mxu0 0.0
      %3588 = vmatpush2.msra.mxu0 0.0
      %3589 = vmatprep.subr.mxu0 0.0
      %3590 = vmatpush2.msra.mxu0 0.0
      %3591 = vmatprep.subr.mxu0 0.0
      %3592 = vmatpush2.msra.mxu0 0.0
      %3593 = vmatprep.subr.mxu0 0.0
      %3594 = vmatpush2.msra.mxu0 0.0
      %3595 = vmatprep.subr.mxu0 0.0
      %3596 = vmatpush2.msra.mxu0 0.0
      %3597 = vmatprep.subr.mxu0 0.0
      %3598 = vmatpush2.msra.mxu0 0.0
      %3599 = vmatprep.subr.mxu0 0.0
      %3600 = vmatpush2.msra.mxu0 0.0
      %3601 = vmatprep.subr.mxu0 0.0
      %3602 = vmatpush2.msra.mxu0 0.0
      %3603 = vmatprep.subr.mxu0 0.0
      %3604 = vmatpush2.msra.mxu0 0.0
      %3605 = vmatprep.subr.mxu0 0.0
      %3606 = vmatpush2.msra.mxu0 0.0
      %3607 = vmatprep.mubr.f32.mxu0 0.0
      %3608 = vmatmul.mubr.f32.gmra.mxu0 %v3541
      %v3609 = vpop.f32.mrf.mxu0
      %v3610 = vadd.f32 0.0, %v3609
      %v3611 = vpop.f32.mrf.mxu0
      %3612 = vdwg.mxu0
      %v3613 = vadd.f32 %v3470, %v3610
      %v3614 = vld [vmem:[%s12] sm:$0x1]
      %v3616 = vlaneseq
      %v3617 = vshrl.u32 %v3616, 7
      %v3618 = vsub.s32 0, %v3617
      %v3619 = vrot.slane %v3614, %v3618
      %v3621 = vadd.f32 %v3613, %v3619
      %v3622 = vmax.f32 %v3621, 0.0
      %v3623 = vpack.c.bf16 %v3622, %v3622
      %vm3624 = vcmask 257024
      %3625 = vst.msk [vmem:[#allocation2] sm:$0xf] %vm3624, %v3623
    $region69: #{se_conv_trans_r_forward.1} parent=1 // pred_fallthru
      _
    %v3626 = vld [vmem:[#allocation2] sm:$0xf]
    %v3627 = vld [vmem:[%s13] sm:$0xf]
    %v3628 = vld [vmem:[%s13 + $0x4] sm:$0xf]
    %v3629 = vld [vmem:[%s13 + $0x8] sm:$0xf]
    %v3630 = vld [vmem:[%s13 + $0xc] sm:$0xf]
    %v3631 = vld [vmem:[%s13 + $0x10] sm:$0xf]
    %v3632 = vld [vmem:[%s13 + $0x14] sm:$0xf]
    %v3633 = vld [vmem:[%s13 + $0x18] sm:$0xf]
    %v3634 = vld [vmem:[%s13 + $0x1c] sm:$0xf]
    %v3635 = vld [vmem:[%s13 + $0x20] sm:$0xf]
    %v3636 = vld [vmem:[%s13 + $0x24] sm:$0xf]
    %v3637 = vld [vmem:[%s13 + $0x28] sm:$0xf]
    %v3638 = vld [vmem:[%s13 + $0x2c] sm:$0xf]
    %v3639 = vld [vmem:[%s13 + $0x30] sm:$0xf]
    %v3640 = vld [vmem:[%s13 + $0x34] sm:$0xf]
    %v3641 = vld [vmem:[%s13 + $0x38] sm:$0xf]
    %v3642 = vld [vmem:[%s13 + $0x3c] sm:$0xf]
    %v3659 = vunpack.c.l.b16 %v3627
    %v3660 = vunpack.c.l.b16 %v3628
    %v3661 = vunpack.c.l.b16 %v3629
    %v3662 = vunpack.c.l.b16 %v3630
    %v3663 = vunpack.c.l.b16 %v3631
    %v3664 = vunpack.c.l.b16 %v3632
    %v3665 = vunpack.c.l.b16 %v3633
    %v3666 = vunpack.c.l.b16 %v3634
    %v3667 = vunpack.c.l.b16 %v3635
    %v3668 = vunpack.c.l.b16 %v3636
    %v3669 = vunpack.c.l.b16 %v3637
    %v3670 = vunpack.c.l.b16 %v3638
    %v3671 = vunpack.c.l.b16 %v3639
    %v3672 = vunpack.c.l.b16 %v3640
    %v3673 = vunpack.c.l.b16 %v3641
    %v3674 = vunpack.c.l.b16 %v3642
    %v3675 = vpack.c.b16 %v3660, %v3659
    %v3676 = vpack.c.b16 %v3662, %v3661
    %v3677 = vpack.c.b16 %v3664, %v3663
    %v3678 = vpack.c.b16 %v3666, %v3665
    %v3679 = vpack.c.b16 %v3668, %v3667
    %v3680 = vpack.c.b16 %v3670, %v3669
    %v3681 = vpack.c.b16 %v3672, %v3671
    %v3682 = vpack.c.b16 %v3674, %v3673
    %vm3683 = vcmask 261120
    %v3685 = vsel %vm3683, %v3626, 0
    %v3688 = vsel %vm3683, %v3675, 0
    %v3691 = vsel %vm3683, %v3676, 0
    %v3694 = vsel %vm3683, %v3677, 0
    %v3697 = vsel %vm3683, %v3678, 0
    %v3700 = vsel %vm3683, %v3679, 0
    %v3703 = vsel %vm3683, %v3680, 0
    %v3706 = vsel %vm3683, %v3681, 0
    %v3709 = vsel %vm3683, %v3682, 0
    %3711 = vmatprep.subr.bf16.mxu0 0
    %3712 = vmatpush1.bf16.xpose.msra.mxu0 %v3709
    %3713 = vmatprep.subr.bf16.mxu0 0
    %3714 = vmatpush1.bf16.xpose.msra.mxu0 %v3706
    %3715 = vmatprep.subr.bf16.mxu0 0
    %3716 = vmatpush1.bf16.xpose.msra.mxu0 %v3703
    %3717 = vmatprep.subr.bf16.mxu0 0
    %3718 = vmatpush1.bf16.xpose.msra.mxu0 %v3700
    %3719 = vmatprep.subr.bf16.mxu0 0
    %3720 = vmatpush1.bf16.xpose.msra.mxu0 %v3697
    %3721 = vmatprep.subr.bf16.mxu0 0
    %3722 = vmatpush1.bf16.xpose.msra.mxu0 %v3694
    %3723 = vmatprep.subr.bf16.mxu0 0
    %3724 = vmatpush1.bf16.xpose.msra.mxu0 %v3691
    %3725 = vmatprep.subr.bf16.mxu0 0
    %3726 = vmatpush1.bf16.xpose.msra.mxu0 %v3688
    %3727 = vmatprep.subr.bf16.mxu0 0
    %3728 = vmatpush2.bf16.xpose.msra.mxu0 0
    %3729 = vmatprep.subr.bf16.mxu0 0
    %3730 = vmatpush2.bf16.xpose.msra.mxu0 0
    %3731 = vmatprep.subr.bf16.mxu0 0
    %3732 = vmatpush2.bf16.xpose.msra.mxu0 0
    %3733 = vmatprep.subr.bf16.mxu0 0
    %3734 = vmatpush2.bf16.xpose.msra.mxu0 0
    %3735 = vmatprep.subr.bf16.mxu0 0
    %3736 = vmatpush2.bf16.xpose.msra.mxu0 0
    %3737 = vmatprep.subr.bf16.mxu0 0
    %3738 = vmatpush2.bf16.xpose.msra.mxu0 0
    %3739 = vmatprep.subr.bf16.mxu0 0
    %3740 = vmatpush2.bf16.xpose.msra.mxu0 0
    %3741 = vmatprep.subr.bf16.mxu0 0
    %3742 = vmatpush2.bf16.xpose.msra.mxu0 0
    %3743 = vmatprep.mubr.bf16.mxu0 0
    %3744 = vmatmul.mubr.bf16.gmra.mxu0 %v3685
    %v3745 = vpop.f32.mrf.mxu0
    %v3746 = vadd.f32 0.0, %v3745
    %v3747 = vpop.f32.mrf.mxu0
    %v3748 = vpop.f32.mrf.mxu0
    %v3749 = vpop.f32.mrf.mxu0
    %3750 = vdwg.mxu0
    %3751 = vst [vmem:[#allocation8] sm:$0xff] %v3746
    // Predicated region
    $region70: #{se_conv_trans_r_forward.1} parent=1 // pred_check
      _
    $region71: #{se_conv_trans_r_forward.1} parent=1 // pred_check_branch
      %3753 = sbr.rel (0) target = $region73
    $region72: #{se_conv_trans_r_forward.1} parent=1 // pred_region
      %s3755 = ssub.s32 128, 128
      %3756 = vsyncadd [#allocation4], %s3755
      %s3758 = sshll.u32 [#allocation8], 4
      %s3759 = int_to_ptr.vmem [resolvable:$true] %s3758
      %3761 = dma.vmem_to_hbm [thread:$0]  %s3759, 128, %s14, [#allocation4]
    $region73: #{se_conv_trans_r_forward.1} parent=1 // pred_fallthru
      _
    // Predicated region
    $region74: #{se_conv_trans_r_forward.1} parent=1 // pred_check
      _
    $region75: #{se_conv_trans_r_forward.1} parent=1 // pred_check_branch
      %3763 = sbr.rel (0) target = $region77
    $region76: #{se_conv_trans_r_forward.1} parent=1 // pred_region
      %3764 = dma.done [#allocation4], 128
    $region77: #{se_conv_trans_r_forward.1} parent=1 // pred_fallthru
      _
    %3765 = vsyncpa [#allocation4], 1
    %3766 = vsyncpa [#allocation5], 1
    %3767 = vsyncpa [#allocation7], 1

</llo_original>
